<compile_context>
chip_gen: v7x
topology: tpu7x:2x2x1
jax: 0.10.0
libtpu: 0.0.40
codegen_flags: <defaults>
</compile_context>

<pallas_src>
import math

import jax
import jax.numpy as jnp
from jax.experimental import pallas as pl
from jax.experimental.pallas import tpu as pltpu


def _lstm_step_kernel(grad_ref, h_ref, c_ref, wih_ref, whh_ref, wproj_ref,
                      out_ref, h_new_ref, c_new_ref):
    """One bias-free LSTM step + 1-unit linear projection for a lane-tile of N.

    Shapes inside the kernel (TN = N tile size):
      grad_ref : (1, TN)   fp32
      h_ref    : (H, TN)   h storage dtype (bf16 by default)
      c_ref    : (H, TN)   c storage dtype (fp32 by default)
      wih_ref  : (4H, 1)   fp32
      whh_ref  : (4H, H)   bf16  (MXU operand)
      wproj_ref: (H, 1)    fp32
      out_ref  : (1, TN)   fp32  (lane-dense delta)
    """
    H = h_ref.shape[0]
    x = grad_ref[...]                                   # (1, TN) fp32

    # Recurrent term on the MXU with bf16 operands; fp32 accumulation.
    # (astype is a no-op when h is already stored as bf16.)
    h_mm = h_ref[...].astype(jnp.bfloat16)              # (H, TN) bf16
    gates = jnp.dot(whh_ref[...], h_mm,
                    preferred_element_type=jnp.float32)  # (4H, TN) fp32
    # Input term: input_size == 1 -> broadcast outer product on the VPU.
    gates = gates + wih_ref[...] * x                     # (4H,1)*(1,TN)

    # PyTorch gate order [i, f, g, o].  sigmoid(z) == 0.5*tanh(z/2) + 0.5
    # (exact identity) -> one EUP push per gate instead of exp + reciprocal.
    def _sigmoid(z):
        return 0.5 * jnp.tanh(0.5 * z) + 0.5

    i = _sigmoid(gates[0:H, :])
    f = _sigmoid(gates[H:2 * H, :])
    g = jnp.tanh(gates[2 * H:3 * H, :])
    o = _sigmoid(gates[3 * H:4 * H, :])

    c = c_ref[...].astype(jnp.float32)                   # (H, TN) fp32
    c_new = f * c + i * g                                # (H, TN) fp32
    h_new = o * jnp.tanh(c_new)                          # (H, TN) fp32

    c_new_ref[...] = c_new.astype(c_new_ref.dtype)
    h_new_ref[...] = h_new.astype(h_new_ref.dtype)

    # update_projector: delta (1, TN) = sum_h wproj[h] * h_new[h, :]
    # VPU multiply + sublane (XLU) reduce; output is lane-dense.
    out_ref[...] = jnp.sum(h_new * wproj_ref[...], axis=0, keepdims=True)


def _tensorcores_per_device() -> int:
    """Best-effort TensorCore count per device (2 only on v7x-class chips)."""
    try:
        kind = jax.devices()[0].device_kind.lower()
    except Exception:
        return 1
    return 2 if ("v7" in kind or "7x" in kind) else 1


def _choose_tiling(N: int, num_tc: int, tn_max: int):
    """N-aware tile/grid policy (Python ints; N is static)."""
    lanes = 128
    assert tn_max % lanes == 0, "tn_max must be a multiple of 128"
    round_up = lambda a, b: -(-a // b) * b
    if num_tc <= 1:
        # Single-TC (v5e/v6e): one grid step unless N exceeds tn_max; extra
        # grid steps are pure per-step pipeline overhead here.
        tn = min(round_up(N, lanes), tn_max)
    else:
        # v7x: give each TensorCore a roughly equal lane-aligned share.
        tn = min(round_up(-(-N // num_tc), lanes), tn_max)
    tn = max(tn, lanes)
    n_tiles = -(-N // tn)
    if num_tc > 1 and n_tiles > 1 and (n_tiles % num_tc) != 0:
        # Even split across the two cores on the 'parallel' axis.
        n_tiles = round_up(n_tiles, num_tc)
    return tn, n_tiles


def meta_zo_forward(grad, h0, c0, wih, whh, wproj_t, *,
                    tn_max=2048, h_dtype=jnp.bfloat16, c_dtype=jnp.float32):
    """Pallas wrapper for MetaZOEstimator.forward (one LSTM step + projection).

    Args:
      grad   : (N,) fp32 gradient vector (N = flattened_input_dim).
      h0, c0 : (H, N) LSTM state in transposed layout (torch keeps (1, N, H);
               this is a storage-layout choice, semantics are identical because
               the caller round-trips the state through this function).
      wih    : (4H, 1) == update_rnn.weight_ih_l0
      whh    : (4H, H) == update_rnn.weight_hh_l0
      wproj_t: (H, 1)  == update_projector.weight.T
      tn_max : maximum N-tile size (multiple of 128).
      h_dtype: HBM storage dtype for h (bf16 halves traffic; compute is fp32).
      c_dtype: HBM storage dtype for c (fp32 default: c is a recurrent
               accumulator and bf16 storage would drift over many ZO steps).

    Returns:
      (delta (N,), h_new (H, N), c_new (H, N))
    """
    N = grad.shape[0]
    H = h0.shape[0]

    num_tc = _tensorcores_per_device()
    tn, n_tiles = _choose_tiling(N, num_tc, tn_max)
    N_pad = n_tiles * tn

    grad2 = grad.reshape(1, N).astype(jnp.float32)
    h0 = h0.astype(h_dtype)
    c0 = c0.astype(c_dtype)
    if N_pad != N:
        pad = N_pad - N
        grad2 = jnp.pad(grad2, ((0, 0), (0, pad)))
        h0 = jnp.pad(h0, ((0, 0), (0, pad)))
        c0 = jnp.pad(c0, ((0, 0), (0, pad)))
    wih = wih.astype(jnp.float32)
    whh = whh.astype(jnp.bfloat16)        # bf16 MXU operand
    wproj_t = wproj_t.astype(jnp.float32)

    out, h_new, c_new = pl.pallas_call(
        _lstm_step_kernel,
        out_shape=(jax.ShapeDtypeStruct((1, N_pad), jnp.float32),
                   jax.ShapeDtypeStruct((H, N_pad), h_dtype),
                   jax.ShapeDtypeStruct((H, N_pad), c_dtype)),
        grid_spec=pltpu.PrefetchScalarGridSpec(
            num_scalar_prefetch=0,
            grid=(n_tiles,),
            in_specs=[
                pl.BlockSpec((1, tn), lambda i: (0, i)),       # grad tile
                pl.BlockSpec((H, tn), lambda i: (0, i)),       # h0 tile
                pl.BlockSpec((H, tn), lambda i: (0, i)),       # c0 tile
                # Weights: constant block index -> held resident across steps.
                pl.BlockSpec((4 * H, 1), lambda i: (0, 0)),    # W_ih
                pl.BlockSpec((4 * H, H), lambda i: (0, 0)),    # W_hh (bf16)
                pl.BlockSpec((H, 1), lambda i: (0, 0)),        # W_proj
            ],
            out_specs=[
                pl.BlockSpec((1, tn), lambda i: (0, i)),       # delta (lane-dense)
                pl.BlockSpec((H, tn), lambda i: (0, i)),       # h_new
                pl.BlockSpec((H, tn), lambda i: (0, i)),       # c_new
            ],
        ),
        compiler_params=pltpu.CompilerParams(
            dimension_semantics=("parallel",),
            # Per-step working set is <2 MiB even at tn=2048 double-buffered;
            # 32 MiB also fits v7x's 64 MiB physical VMEM with headroom.
            vmem_limit_bytes=32 * 1024 * 1024),
        # In-place state update: h0 -> h_new, c0 -> c_new.
        input_output_aliases={1: 1, 2: 2},
    )(grad2, h0, c0, wih, whh, wproj_t)

    if N_pad != N:
        out = out[:, :N]
        h_new = h_new[:, :N]
        c_new = c_new[:, :N]
    return out.reshape(N), h_new, c_new


def _reference_forward(grad, h0_t, c0_t, wih, whh, wproj_t):
    """Pure-JAX reference mirroring torch.nn.LSTM (1 step, no bias) + Linear.

    State in the same transposed (H, N) layout as the kernel wrapper.
    """
    H = h0_t.shape[0]
    gates = wih * grad.reshape(1, -1) + jnp.dot(
        whh, h0_t, precision=jax.lax.Precision.HIGHEST)          # (4H, N)
    i = jax.nn.sigmoid(gates[0:H, :])
    f = jax.nn.sigmoid(gates[H:2 * H, :])
    g = jnp.tanh(gates[2 * H:3 * H, :])
    o = jax.nn.sigmoid(gates[3 * H:4 * H, :])
    c_new = f * c0_t + i * g
    h_new = o * jnp.tanh(c_new)
    delta = jnp.sum(wproj_t * h_new, axis=0)
    return delta, h_new, c_new


if __name__ == "__main__":
    # Small shapes consistent with the module: flattened_input_dim is an image
    # size (3*32*32 = 3072 CIFAR-like, 1*28*28 = 784 MNIST-like, exercising the
    # padding / single-step path).  hidden_size = 32 (module default is 10;
    # 32 keeps 4H lane-aligned at 128).
    H = 32

    key = jax.random.PRNGKey(0)
    kg, kh, kc, k_wih, k_whh, k_wproj = jax.random.split(key, 6)

    # Deterministic parameter init mimicking torch defaults:
    #   LSTM weights ~ U(-1/sqrt(H), 1/sqrt(H));
    #   projector weight ~ U(-1/sqrt(H), 1/sqrt(H)) then scaled by 0.1
    #   (as in `self.update_projector.weight.data.mul_(0.1)`).
    bound = 1.0 / math.sqrt(H)
    wih = jax.random.uniform(k_wih, (4 * H, 1), jnp.float32, -bound, bound)
    whh = jax.random.uniform(k_whh, (4 * H, H), jnp.float32, -bound, bound)
    wproj_t = 0.1 * jax.random.uniform(k_wproj, (H, 1), jnp.float32, -bound, bound)

    fwd = jax.jit(meta_zo_forward,
                  static_argnames=("tn_max", "h_dtype", "c_dtype"))

    # (N, h storage dtype, c storage dtype, delta atol, state atol)
    configs = [
        (3 * 32 * 32, jnp.float32, jnp.float32, 1e-3, 2e-3),   # fp32-state path
        (3 * 32 * 32, jnp.bfloat16, jnp.float32, 1e-3, 5e-3),  # default perf path
        (1 * 28 * 28, jnp.bfloat16, jnp.bfloat16, 1e-3, 5e-3), # padding + bf16 c
    ]

    for N, hdt, cdt, tol_d, tol_s in configs:
        kgn = jax.random.fold_in(kg, N)
        khn = jax.random.fold_in(kh, N)
        kcn = jax.random.fold_in(kc, N)

        # Inputs: a gradient vector and a (generally nonzero) LSTM state.
        # (reset_state() would zero h0/c0; random state exercises W_hh.)
        grad = jax.random.normal(kgn, (N,), jnp.float32)
        h0 = 0.1 * jax.random.normal(khn, (H, N), jnp.float32)
        c0 = 0.1 * jax.random.normal(kcn, (H, N), jnp.float32)

        delta, h_new, c_new = fwd(grad, h0, c0, wih, whh, wproj_t,
                                  h_dtype=hdt, c_dtype=cdt)
        jax.block_until_ready((delta, h_new, c_new))

        # Reference consumes the same (possibly bf16-quantized) state the
        # kernel reads, so the comparison isolates kernel error (bf16 MXU
        # operands stay within these tolerances).
        h0_q = h0.astype(hdt).astype(jnp.float32)
        c0_q = c0.astype(cdt).astype(jnp.float32)
        r_delta, r_h, r_c = _reference_forward(grad, h0_q, c0_q, wih, whh, wproj_t)

        assert delta.shape == (N,) and h_new.shape == (H, N) and c_new.shape == (H, N)
        assert jnp.allclose(delta, r_delta, rtol=1e-2, atol=tol_d)
        assert jnp.allclose(h_new.astype(jnp.float32), r_h, rtol=2e-2, atol=tol_s)
        assert jnp.allclose(c_new.astype(jnp.float32), r_c, rtol=2e-2, atol=tol_s)

    # TODO(synk): zo_estimation() (external model queries, torch.rand/randn
    # perturbation sampling, attack/penalty loss functions, checkpoint I/O,
    # reset_state bookkeeping) is host-side orchestration and not a kernel target.
    print("KERNEL_OK")
</pallas_src>

<mosaic_0001>
module attributes {stable_mosaic.version = 11 : i64} {
  func.func @_lstm_step_kernel(%arg0: i32, %arg1: memref<1x2048xf32, #tpu.memory_space<vmem>>, %arg2: memref<32x2048xf32, #tpu.memory_space<vmem>>, %arg3: memref<32x2048xf32, #tpu.memory_space<vmem>>, %arg4: memref<128x1xf32, #tpu.memory_space<vmem>>, %arg5: memref<128x32xbf16, #tpu.memory_space<vmem>>, %arg6: memref<32x1xf32, #tpu.memory_space<vmem>>, %arg7: memref<1x2048xf32, #tpu.memory_space<vmem>>, %arg8: memref<32x2048xf32, #tpu.memory_space<vmem>>, %arg9: memref<32x2048xf32, #tpu.memory_space<vmem>>) attributes {dimension_semantics = [#tpu.dimension_semantics<parallel>], iteration_bounds = array<i64: 2>, scalar_prefetch = 0 : i64, scratch_operands = 0 : i64, tpu.core_type = #tpu.core_type<tc>, window_params = [{transform_indices = @transform_0, window_bounds = array<i64: 1, 2048>}, {transform_indices = @transform_1, window_bounds = array<i64: 32, 2048>}, {transform_indices = @transform_2, window_bounds = array<i64: 32, 2048>}, {pipeline_mode = #tpu.pipeline_mode<synchronous>, transform_indices = @transform_3, window_bounds = array<i64: 128, 1>}, {pipeline_mode = #tpu.pipeline_mode<synchronous>, transform_indices = @transform_4, window_bounds = array<i64: 128, 32>}, {pipeline_mode = #tpu.pipeline_mode<synchronous>, transform_indices = @transform_5, window_bounds = array<i64: 32, 1>}, {transform_indices = @transform_6, window_bounds = array<i64: 1, 2048>}, {transform_indices = @transform_7, window_bounds = array<i64: 32, 2048>}, {transform_indices = @transform_8, window_bounds = array<i64: 32, 2048>}]} {
    %c0 = arith.constant 0 : index
    %c0_0 = arith.constant 0 : index
    %0 = vector.load %arg1[%c0, %c0_0] : memref<1x2048xf32, #tpu.memory_space<vmem>>, vector<1x2048xf32>
    %c0_1 = arith.constant 0 : index
    %c0_2 = arith.constant 0 : index
    %1 = vector.load %arg2[%c0_1, %c0_2] : memref<32x2048xf32, #tpu.memory_space<vmem>>, vector<32x2048xf32>
    %2 = arith.truncf %1 : vector<32x2048xf32> to vector<32x2048xbf16>
    %c0_3 = arith.constant 0 : index
    %c0_4 = arith.constant 0 : index
    %3 = vector.load %arg5[%c0_3, %c0_4] : memref<128x32xbf16, #tpu.memory_space<vmem>>, vector<128x32xbf16>
    %cst = arith.constant dense<0.000000e+00> : vector<128x2048xf32>
    %4 = tpu.matmul %3, %2, %cst {dimension_numbers = #tpu.dot_dimension_numbers<[1], [0], [0], [1], [0, 0, 1, 1], [], []>} : vector<128x32xbf16>, vector<32x2048xbf16>, vector<128x2048xf32> -> vector<128x2048xf32>
    %c0_5 = arith.constant 0 : index
    %c0_6 = arith.constant 0 : index
    %5 = vector.load %arg4[%c0_5, %c0_6] : memref<128x1xf32, #tpu.memory_space<vmem>>, vector<128x1xf32>
    %6 = vector.broadcast %5 : vector<128x1xf32> to vector<128x2048xf32>
    %7 = vector.broadcast %0 : vector<1x2048xf32> to vector<128x2048xf32>
    %8 = arith.mulf %6, %7 : vector<128x2048xf32>
    %9 = arith.addf %4, %8 : vector<128x2048xf32>
    %10 = vector.extract_strided_slice %9 {offsets = [0, 0], sizes = [32, 2048], strides = [1, 1]} : vector<128x2048xf32> to vector<32x2048xf32>
    %cst_7 = arith.constant 5.000000e-01 : f32
    %11 = vector.broadcast %cst_7 : f32 to vector<32x2048xf32>
    %12 = arith.mulf %11, %10 : vector<32x2048xf32>
    %13 = math.tanh %12 : vector<32x2048xf32>
    %cst_8 = arith.constant 5.000000e-01 : f32
    %14 = vector.broadcast %cst_8 : f32 to vector<32x2048xf32>
    %15 = arith.mulf %14, %13 : vector<32x2048xf32>
    %cst_9 = arith.constant 5.000000e-01 : f32
    %16 = vector.broadcast %cst_9 : f32 to vector<32x2048xf32>
    %17 = arith.addf %15, %16 : vector<32x2048xf32>
    %18 = vector.extract_strided_slice %9 {offsets = [32, 0], sizes = [32, 2048], strides = [1, 1]} : vector<128x2048xf32> to vector<32x2048xf32>
    %cst_10 = arith.constant 5.000000e-01 : f32
    %19 = vector.broadcast %cst_10 : f32 to vector<32x2048xf32>
    %20 = arith.mulf %19, %18 : vector<32x2048xf32>
    %21 = math.tanh %20 : vector<32x2048xf32>
    %cst_11 = arith.constant 5.000000e-01 : f32
    %22 = vector.broadcast %cst_11 : f32 to vector<32x2048xf32>
    %23 = arith.mulf %22, %21 : vector<32x2048xf32>
    %cst_12 = arith.constant 5.000000e-01 : f32
    %24 = vector.broadcast %cst_12 : f32 to vector<32x2048xf32>
    %25 = arith.addf %23, %24 : vector<32x2048xf32>
    %26 = vector.extract_strided_slice %9 {offsets = [64, 0], sizes = [32, 2048], strides = [1, 1]} : vector<128x2048xf32> to vector<32x2048xf32>
    %27 = math.tanh %26 : vector<32x2048xf32>
    %28 = vector.extract_strided_slice %9 {offsets = [96, 0], sizes = [32, 2048], strides = [1, 1]} : vector<128x2048xf32> to vector<32x2048xf32>
    %cst_13 = arith.constant 5.000000e-01 : f32
    %29 = vector.broadcast %cst_13 : f32 to vector<32x2048xf32>
    %30 = arith.mulf %29, %28 : vector<32x2048xf32>
    %31 = math.tanh %30 : vector<32x2048xf32>
    %cst_14 = arith.constant 5.000000e-01 : f32
    %32 = vector.broadcast %cst_14 : f32 to vector<32x2048xf32>
    %33 = arith.mulf %32, %31 : vector<32x2048xf32>
    %cst_15 = arith.constant 5.000000e-01 : f32
    %34 = vector.broadcast %cst_15 : f32 to vector<32x2048xf32>
    %35 = arith.addf %33, %34 : vector<32x2048xf32>
    %c0_16 = arith.constant 0 : index
    %c0_17 = arith.constant 0 : index
    %36 = vector.load %arg3[%c0_16, %c0_17] : memref<32x2048xf32, #tpu.memory_space<vmem>>, vector<32x2048xf32>
    %37 = arith.mulf %25, %36 : vector<32x2048xf32>
    %38 = arith.mulf %17, %27 : vector<32x2048xf32>
    %39 = arith.addf %37, %38 : vector<32x2048xf32>
    %40 = math.tanh %39 : vector<32x2048xf32>
    %41 = arith.mulf %35, %40 : vector<32x2048xf32>
    %c0_18 = arith.constant 0 : index
    %c0_19 = arith.constant 0 : index
    %42 = vector.load %arg9[%c0_18, %c0_19] : memref<32x2048xf32, #tpu.memory_space<vmem>>, vector<32x2048xf32>
    tpu.vector_store %arg9[%c0_18, %c0_19], %39 {strides = array<i32>} : memref<32x2048xf32, #tpu.memory_space<vmem>>, vector<32x2048xf32>,
    %c0_20 = arith.constant 0 : index
    %c0_21 = arith.constant 0 : index
    %43 = vector.load %arg8[%c0_20, %c0_21] : memref<32x2048xf32, #tpu.memory_space<vmem>>, vector<32x2048xf32>
    tpu.vector_store %arg8[%c0_20, %c0_21], %41 {strides = array<i32>} : memref<32x2048xf32, #tpu.memory_space<vmem>>, vector<32x2048xf32>,
    %c0_22 = arith.constant 0 : index
    %c0_23 = arith.constant 0 : index
    %44 = vector.load %arg6[%c0_22, %c0_23] : memref<32x1xf32, #tpu.memory_space<vmem>>, vector<32x1xf32>
    %45 = vector.broadcast %44 : vector<32x1xf32> to vector<32x2048xf32>
    %46 = arith.mulf %41, %45 : vector<32x2048xf32>
    %cst_24 = arith.constant dense<0.000000e+00> : vector<2048xf32>
    %47 = vector.multi_reduction <add>, %46, %cst_24 [0] : vector<32x2048xf32> to vector<2048xf32>
    %48 = vector.shape_cast %47 : vector<2048xf32> to vector<1x2048xf32>
    %c0_25 = arith.constant 0 : index
    %c0_26 = arith.constant 0 : index
    %49 = vector.load %arg7[%c0_25, %c0_26] : memref<1x2048xf32, #tpu.memory_space<vmem>>, vector<1x2048xf32>
    tpu.vector_store %arg7[%c0_25, %c0_26], %48 {strides = array<i32>} : memref<1x2048xf32, #tpu.memory_space<vmem>>, vector<1x2048xf32>,
    return
  }
  func.func @transform_0(%arg0: i32) -> (i32, i32) {
    %c0_i32 = arith.constant 0 : i32
    %c0_i32_0 = arith.constant 0 : i32
    return %c0_i32, %arg0 : i32, i32
  }
  func.func @transform_1(%arg0: i32) -> (i32, i32) {
    %c0_i32 = arith.constant 0 : i32
    %c0_i32_0 = arith.constant 0 : i32
    return %c0_i32, %arg0 : i32, i32
  }
  func.func @transform_2(%arg0: i32) -> (i32, i32) {
    %c0_i32 = arith.constant 0 : i32
    %c0_i32_0 = arith.constant 0 : i32
    return %c0_i32, %arg0 : i32, i32
  }
  func.func @transform_3(%arg0: i32) -> (i32, i32) {
    %c0_i32 = arith.constant 0 : i32
    %c0_i32_0 = arith.constant 0 : i32
    %c0_i32_1 = arith.constant 0 : i32
    return %c0_i32, %c0_i32_0 : i32, i32
  }
  func.func @transform_4(%arg0: i32) -> (i32, i32) {
    %c0_i32 = arith.constant 0 : i32
    %c0_i32_0 = arith.constant 0 : i32
    %c0_i32_1 = arith.constant 0 : i32
    return %c0_i32, %c0_i32_0 : i32, i32
  }
  func.func @transform_5(%arg0: i32) -> (i32, i32) {
    %c0_i32 = arith.constant 0 : i32
    %c0_i32_0 = arith.constant 0 : i32
    %c0_i32_1 = arith.constant 0 : i32
    return %c0_i32, %c0_i32_0 : i32, i32
  }
  func.func @transform_6(%arg0: i32) -> (i32, i32) {
    %c0_i32 = arith.constant 0 : i32
    %c0_i32_0 = arith.constant 0 : i32
    return %c0_i32, %arg0 : i32, i32
  }
  func.func @transform_7(%arg0: i32) -> (i32, i32) {
    %c0_i32 = arith.constant 0 : i32
    %c0_i32_0 = arith.constant 0 : i32
    return %c0_i32, %arg0 : i32, i32
  }
  func.func @transform_8(%arg0: i32) -> (i32, i32) {
    %c0_i32 = arith.constant 0 : i32
    %c0_i32_0 = arith.constant 0 : i32
    return %c0_i32, %arg0 : i32, i32
  }
}

</mosaic_0001>

<llo_original>
// kernel: meta_zo_forward.1
$region0: #{meta_zo_forward.1}
  #allocation0 [shape = 'u32[]', space=smem, size = 0x4, offset = 0x4, fixed_abs, tag = 'smem constant byte address 0x4 - core index']
  #allocation1 [shape = 'u32[144,128]{1,0:T(1,128)}', space=vmem, size = 0x12000, scoped, tag = 'internal scratch']
  %s0 = inlined_call_operand.vmem [shape: f32[1,4096], index: 0, kind: input, shape index: {}]
  %s1 = inlined_call_operand.vmem [shape: f32[32,4096], index: 1, kind: input, shape index: {}, may-alias: {1,7}]
  %s2 = inlined_call_operand.vmem [shape: f32[32,4096], index: 2, kind: input, shape index: {}, may-alias: {2,8}]
  %s3 = inlined_call_operand.vmem [shape: f32[128,1], index: 3, kind: input, shape index: {}]
  %s4 = inlined_call_operand.vmem [shape: bf16[128,32], index: 4, kind: input, shape index: {}]
  %s5 = inlined_call_operand.vmem [shape: f32[32,1], index: 5, kind: input, shape index: {}]
  %s6 = inlined_call_operand.vmem [shape: f32[1,4096], index: 6, kind: output, shape index: {0}]
  %s7 = inlined_call_operand.vmem [shape: f32[32,4096], index: 7, kind: output, shape index: {1}, may-alias: {1,7}]
  %s8 = inlined_call_operand.vmem [shape: f32[32,4096], index: 8, kind: output, shape index: {2}, may-alias: {2,8}]
  %9 = xla_tuple %s6, %s7, %s8
  %s10 = sld [smem:[#allocation0]]
  $region157: #{meta_zo_forward.1} parent=0
    _
  %s12 = ssub.s32 1, %s10
  %s13 = scalar_select 0, %s12, %s10
  $region1: #{meta_zo_forward.1} parent=0
    #allocation2 [shape = 'u8[524288]{0}', space=vmem, size = 0x80000, scoped, tag = 'input window, operand 1']
    #allocation3 [shape = 'u8[524288]{0}', space=vmem, size = 0x80000, scoped, tag = 'input window, operand 2']
    #allocation4 [shape = 'u8[524288]{0}', space=vmem, size = 0x80000, scoped, tag = 'output window, operand 1']
    #allocation5 [shape = 'u8[524288]{0}', space=vmem, size = 0x80000, scoped, tag = 'output window, operand 2']
    loop: start=0, step=1, limit=4
    $region2: #{meta_zo_forward.1} parent=1 // loop_pre_header
      _
    $region3: #{meta_zo_forward.1} parent=1 // loop_header
      %s15 = sphi 0, %s19
      %p16 = scmp.ge.s32.totalorder %s15, 4
      %s25 = sphi 0, %s27
      %s28 = sphi 0, %s25
      %s29 = sphi 0, %s28
      %s45 = sphi 0, %s29
      %s51 = sphi 0, %s53
      %s54 = sphi 0, %s51
      %s55 = sphi 0, %s54
      %s71 = sphi 0, %s55
      %s77 = sphi 0, %s79
      %s80 = sphi 0, %s77
      %s81 = sphi 0, %s80
      %s97 = sphi 0, %s81
      %s101 = sphi 0, %s101
      %s103 = sphi 0, %s101
      %s104 = sphi 0, %s103
      %s118 = sphi 0, %s104
      %s122 = sphi 0, %s122
      %s124 = sphi 0, %s122
      %s125 = sphi 0, %s124
      %s139 = sphi 0, %s125
      %s143 = sphi 0, %s143
      %s145 = sphi 0, %s143
      %s146 = sphi 0, %s145
      %s160 = sphi 0, %s146
      %s166 = sphi 0, %s168
      %s169 = sphi 0, %s166
      %s170 = sphi 0, %s169
      %s186 = sphi 0, %s170
      %s192 = sphi 0, %s194
      %s195 = sphi 0, %s192
      %s196 = sphi 0, %s195
      %s212 = sphi 0, %s196
      %s218 = sphi 0, %s220
      %s221 = sphi 0, %s218
      %s222 = sphi 0, %s221
      %s238 = sphi 0, %s222
    $region4: #{meta_zo_forward.1} parent=1 // loop_header_branch
      %18 = sbr.rel (%p16) target = $region8
    $region5: #{meta_zo_forward.1} parent=1 // loop_body
      %s20 = ssub.s32 %s15, 1
      %s21 = ssub.s32 %s15, 2
      %s22 = sadd.s32 %s15, 1
      %s23 = ssub.s32 %s15, %s22
      %p24 = scmp.eq.s32.totalorder %s23, 0
      %s26 = sadd.s32 %s25, 1
      %s27 = scalar_select %p24, %s25, %s26
      %p30 = pneg %p24
      %p31 = scmp.eq.s32.totalorder %s15, 1
      %p32 = por %p30, %p31
      %p33 = scmp.ne.s32.totalorder %s25, %s28
      %p34 = scmp.eq.s32.totalorder %s15, 0
      %p35 = por %p33, %p34
      %p36 = scmp.ne.s32.totalorder %s25, %s28
      %p37 = scmp.eq.s32.totalorder %s20, 1
      %p38 = por %p36, %p37
      %p39 = scmp.ne.s32.totalorder %s28, %s29
      %p40 = scmp.eq.s32.totalorder %s20, 0
      %p41 = por %p39, %p40
      %p42 = scmp.ne.s32.totalorder %s28, %s29
      %p43 = scmp.eq.s32.totalorder %s21, 1
      %p44 = por %p42, %p43
      %p46 = scmp.ne.s32.totalorder %s29, %s45
      %p47 = scmp.eq.s32.totalorder %s21, 0
      %p48 = por %p46, %p47
      %s49 = ssub.s32 %s15, %s22
      %p50 = scmp.eq.s32.totalorder %s49, 0
      %s52 = sadd.s32 %s51, 1
      %s53 = scalar_select %p50, %s51, %s52
      %p56 = pneg %p50
      %p57 = scmp.eq.s32.totalorder %s15, 1
      %p58 = por %p56, %p57
      %p59 = scmp.ne.s32.totalorder %s51, %s54
      %p60 = scmp.eq.s32.totalorder %s15, 0
      %p61 = por %p59, %p60
      %p62 = scmp.ne.s32.totalorder %s51, %s54
      %p63 = scmp.eq.s32.totalorder %s20, 1
      %p64 = por %p62, %p63
      %p65 = scmp.ne.s32.totalorder %s54, %s55
      %p66 = scmp.eq.s32.totalorder %s20, 0
      %p67 = por %p65, %p66
      %p68 = scmp.ne.s32.totalorder %s54, %s55
      %p69 = scmp.eq.s32.totalorder %s21, 1
      %p70 = por %p68, %p69
      %p72 = scmp.ne.s32.totalorder %s55, %s71
      %p73 = scmp.eq.s32.totalorder %s21, 0
      %p74 = por %p72, %p73
      %s75 = ssub.s32 %s15, %s22
      %p76 = scmp.eq.s32.totalorder %s75, 0
      %s78 = sadd.s32 %s77, 1
      %s79 = scalar_select %p76, %s77, %s78
      %p82 = pneg %p76
      %p83 = scmp.eq.s32.totalorder %s15, 1
      %p84 = por %p82, %p83
      %p85 = scmp.ne.s32.totalorder %s77, %s80
      %p86 = scmp.eq.s32.totalorder %s15, 0
      %p87 = por %p85, %p86
      %p88 = scmp.ne.s32.totalorder %s77, %s80
      %p89 = scmp.eq.s32.totalorder %s20, 1
      %p90 = por %p88, %p89
      %p91 = scmp.ne.s32.totalorder %s80, %s81
      %p92 = scmp.eq.s32.totalorder %s20, 0
      %p93 = por %p91, %p92
      %p94 = scmp.ne.s32.totalorder %s80, %s81
      %p95 = scmp.eq.s32.totalorder %s21, 1
      %p96 = por %p94, %p95
      %p98 = scmp.ne.s32.totalorder %s81, %s97
      %p99 = scmp.eq.s32.totalorder %s21, 0
      %p100 = por %p98, %p99
      %s102 = sadd.s32 %s101, 1
      %p105 = scmp.eq.s32.totalorder %s15, 1
      %p106 = scmp.ne.s32.totalorder %s101, %s103
      %p107 = scmp.eq.s32.totalorder %s15, 0
      %p108 = por %p106, %p107
      %p109 = scmp.ne.s32.totalorder %s101, %s103
      %p110 = scmp.eq.s32.totalorder %s20, 1
      %p111 = por %p109, %p110
      %p112 = scmp.ne.s32.totalorder %s103, %s104
      %p113 = scmp.eq.s32.totalorder %s20, 0
      %p114 = por %p112, %p113
      %p115 = scmp.ne.s32.totalorder %s103, %s104
      %p116 = scmp.eq.s32.totalorder %s21, 1
      %p117 = por %p115, %p116
      %p119 = scmp.ne.s32.totalorder %s104, %s118
      %p120 = scmp.eq.s32.totalorder %s21, 0
      %p121 = por %p119, %p120
      %s123 = sadd.s32 %s122, 1
      %p126 = scmp.eq.s32.totalorder %s15, 1
      %p127 = scmp.ne.s32.totalorder %s122, %s124
      %p128 = scmp.eq.s32.totalorder %s15, 0
      %p129 = por %p127, %p128
      %p130 = scmp.ne.s32.totalorder %s122, %s124
      %p131 = scmp.eq.s32.totalorder %s20, 1
      %p132 = por %p130, %p131
      %p133 = scmp.ne.s32.totalorder %s124, %s125
      %p134 = scmp.eq.s32.totalorder %s20, 0
      %p135 = por %p133, %p134
      %p136 = scmp.ne.s32.totalorder %s124, %s125
      %p137 = scmp.eq.s32.totalorder %s21, 1
      %p138 = por %p136, %p137
      %p140 = scmp.ne.s32.totalorder %s125, %s139
      %p141 = scmp.eq.s32.totalorder %s21, 0
      %p142 = por %p140, %p141
      %s144 = sadd.s32 %s143, 1
      %p147 = scmp.eq.s32.totalorder %s15, 1
      %p148 = scmp.ne.s32.totalorder %s143, %s145
      %p149 = scmp.eq.s32.totalorder %s15, 0
      %p150 = por %p148, %p149
      %p151 = scmp.ne.s32.totalorder %s143, %s145
      %p152 = scmp.eq.s32.totalorder %s20, 1
      %p153 = por %p151, %p152
      %p154 = scmp.ne.s32.totalorder %s145, %s146
      %p155 = scmp.eq.s32.totalorder %s20, 0
      %p156 = por %p154, %p155
      %p157 = scmp.ne.s32.totalorder %s145, %s146
      %p158 = scmp.eq.s32.totalorder %s21, 1
      %p159 = por %p157, %p158
      %p161 = scmp.ne.s32.totalorder %s146, %s160
      %p162 = scmp.eq.s32.totalorder %s21, 0
      %p163 = por %p161, %p162
      %s164 = ssub.s32 %s15, %s22
      %p165 = scmp.eq.s32.totalorder %s164, 0
      %s167 = sadd.s32 %s166, 1
      %s168 = scalar_select %p165, %s166, %s167
      %p171 = pneg %p165
      %p172 = scmp.eq.s32.totalorder %s15, 1
      %p173 = por %p171, %p172
      %p174 = scmp.ne.s32.totalorder %s166, %s169
      %p175 = scmp.eq.s32.totalorder %s15, 0
      %p176 = por %p174, %p175
      %p177 = scmp.ne.s32.totalorder %s166, %s169
      %p178 = scmp.eq.s32.totalorder %s20, 1
      %p179 = por %p177, %p178
      %p180 = scmp.ne.s32.totalorder %s169, %s170
      %p181 = scmp.eq.s32.totalorder %s20, 0
      %p182 = por %p180, %p181
      %p183 = scmp.ne.s32.totalorder %s169, %s170
      %p184 = scmp.eq.s32.totalorder %s21, 1
      %p185 = por %p183, %p184
      %p187 = scmp.ne.s32.totalorder %s170, %s186
      %p188 = scmp.eq.s32.totalorder %s21, 0
      %p189 = por %p187, %p188
      %s190 = ssub.s32 %s15, %s22
      %p191 = scmp.eq.s32.totalorder %s190, 0
      %s193 = sadd.s32 %s192, 1
      %s194 = scalar_select %p191, %s192, %s193
      %p197 = pneg %p191
      %p198 = scmp.eq.s32.totalorder %s15, 1
      %p199 = por %p197, %p198
      %p200 = scmp.ne.s32.totalorder %s192, %s195
      %p201 = scmp.eq.s32.totalorder %s15, 0
      %p202 = por %p200, %p201
      %p203 = scmp.ne.s32.totalorder %s192, %s195
      %p204 = scmp.eq.s32.totalorder %s20, 1
      %p205 = por %p203, %p204
      %p206 = scmp.ne.s32.totalorder %s195, %s196
      %p207 = scmp.eq.s32.totalorder %s20, 0
      %p208 = por %p206, %p207
      %p209 = scmp.ne.s32.totalorder %s195, %s196
      %p210 = scmp.eq.s32.totalorder %s21, 1
      %p211 = por %p209, %p210
      %p213 = scmp.ne.s32.totalorder %s196, %s212
      %p214 = scmp.eq.s32.totalorder %s21, 0
      %p215 = por %p213, %p214
      %s216 = ssub.s32 %s15, %s22
      %p217 = scmp.eq.s32.totalorder %s216, 0
      %s219 = sadd.s32 %s218, 1
      %s220 = scalar_select %p217, %s218, %s219
      %p223 = pneg %p217
      %p224 = scmp.eq.s32.totalorder %s15, 1
      %p225 = por %p223, %p224
      %p226 = scmp.ne.s32.totalorder %s218, %s221
      %p227 = scmp.eq.s32.totalorder %s15, 0
      %p228 = por %p226, %p227
      %p229 = scmp.ne.s32.totalorder %s218, %s221
      %p230 = scmp.eq.s32.totalorder %s20, 1
      %p231 = por %p229, %p230
      %p232 = scmp.ne.s32.totalorder %s221, %s222
      %p233 = scmp.eq.s32.totalorder %s20, 0
      %p234 = por %p232, %p233
      %p235 = scmp.ne.s32.totalorder %s221, %s222
      %p236 = scmp.eq.s32.totalorder %s21, 1
      %p237 = por %p235, %p236
      %p239 = scmp.ne.s32.totalorder %s222, %s238
      %p240 = scmp.eq.s32.totalorder %s21, 0
      %p241 = por %p239, %p240
      %p242 = scmp.le.s32.totalorder 1, %s15
      %p243 = scmp.lt.s32.totalorder %s15, 3
      %p244 = pnand %p242, %p243
      %p245 = pneg %p244
      // Predicated region
      $region9: #{meta_zo_forward.1} parent=5 // pred_check
        _
      $region10: #{meta_zo_forward.1} parent=5 // pred_check_branch
        %247 = sbr.rel (%p244) target = $region12
      $region11: #{meta_zo_forward.1} parent=5 // pred_region
        %s248 = ssub.s32 %s15, 1
        // Predicated region
        $region13: #{meta_zo_forward.1} parent=11 // pred_check
          %p249 = pneg %p114
        $region14: #{meta_zo_forward.1} parent=11 // pred_check_branch
          %251 = sbr.rel (%p249) target = $region16
        $region15: #{meta_zo_forward.1} parent=11 // pred_region
          _
        $region16: #{meta_zo_forward.1} parent=11 // pred_fallthru
          _
        // Predicated region
        $region17: #{meta_zo_forward.1} parent=11 // pred_check
          %p252 = pneg %p135
        $region18: #{meta_zo_forward.1} parent=11 // pred_check_branch
          %254 = sbr.rel (%p252) target = $region20
        $region19: #{meta_zo_forward.1} parent=11 // pred_region
          _
        $region20: #{meta_zo_forward.1} parent=11 // pred_fallthru
          _
        // Predicated region
        $region21: #{meta_zo_forward.1} parent=11 // pred_check
          %p255 = pneg %p156
        $region22: #{meta_zo_forward.1} parent=11 // pred_check_branch
          %257 = sbr.rel (%p255) target = $region24
        $region23: #{meta_zo_forward.1} parent=11 // pred_region
          _
        $region24: #{meta_zo_forward.1} parent=11 // pred_fallthru
          _
      $region12: #{meta_zo_forward.1} parent=5 // pred_fallthru
        _
      %p258 = scmp.lt.s32.totalorder %s15, 2
      // Predicated region
      $region25: #{meta_zo_forward.1} parent=5 // pred_check
        %p259 = pneg %p258
      $region26: #{meta_zo_forward.1} parent=5 // pred_check_branch
        %261 = sbr.rel (%p259) target = $region28
      $region27: #{meta_zo_forward.1} parent=5 // pred_region
        // Predicated region
        $region29: #{meta_zo_forward.1} parent=27 // pred_check
          %p262 = pneg %p35
        $region30: #{meta_zo_forward.1} parent=27 // pred_check_branch
          %264 = sbr.rel (%p262) target = $region32
        $region31: #{meta_zo_forward.1} parent=27 // pred_region
          %s265 = smul.u32 16, %s15
          %p266 = scmp.lt.s32.totalorder %s265, 31
          %s267 = scalar_select %p266, %s265, 31
          %s268 = scalar_lea.vmem %s0, %s267
          %s269 = smul.u32 16, %s15
        $region32: #{meta_zo_forward.1} parent=27 // pred_fallthru
          _
        // Predicated region
        $region33: #{meta_zo_forward.1} parent=27 // pred_check
          %p270 = pneg %p61
        $region34: #{meta_zo_forward.1} parent=27 // pred_check_branch
          %272 = sbr.rel (%p270) target = $region36
        $region35: #{meta_zo_forward.1} parent=27 // pred_region
          %s273 = sand.u32 %s51, 1
          %s274 = sand.u32 %s51, 1
          %s275 = smul.addr %s274, 512
          %s276 = scalar_lea.vmem [#allocation2], %s275
          %s277 = smul.u32 16, %s15
          %s278 = smul.addr %s277, 8
          %s279 = scalar_lea.vmem %s1, %s278
          // Predicated region
          $region37: #{meta_zo_forward.1} parent=35 // pred_check
            _
          $region38: #{meta_zo_forward.1} parent=35 // pred_check_branch
            %281 = sbr.rel (0) target = $region40
          $region39: #{meta_zo_forward.1} parent=35 // pred_region
            // Predicated region
            $region41: #{meta_zo_forward.1} parent=39 // pred_check
              _
            $region42: #{meta_zo_forward.1} parent=39 // pred_check_branch
              %283 = sbr.rel (0) target = $region44
            $region43: #{meta_zo_forward.1} parent=39 // pred_region
              loop: start=0, step=1, limit=1
              $region45: #{meta_zo_forward.1} parent=43 // loop_pre_header
                _
              $region46: #{meta_zo_forward.1} parent=43 // loop_header
                %s285 = sphi 0, %s289
                %p286 = scmp.ge.s32.totalorder %s285, 1
                %s290 = sphi %s279, %s279
                %s291 = sphi %s276, %s276
              $region47: #{meta_zo_forward.1} parent=43 // loop_header_branch
                %288 = sbr.rel (%p286) target = $region51
              $region48: #{meta_zo_forward.1} parent=43 // loop_body
                %v292 = vld [vmem:[%s290] sm:$0xff]
                %293 = vst [vmem:[%s291] sm:$0xff] %v292
                %v294 = vld [vmem:[%s290 + $0x8] sm:$0xff]
                %295 = vst [vmem:[%s291 + $0x8] sm:$0xff] %v294
                %v296 = vld [vmem:[%s290 + $0x10] sm:$0xff]
                %297 = vst [vmem:[%s291 + $0x10] sm:$0xff] %v296
                %v298 = vld [vmem:[%s290 + $0x18] sm:$0xff]
                %299 = vst [vmem:[%s291 + $0x18] sm:$0xff] %v298
                %v300 = vld [vmem:[%s290 + $0x20] sm:$0xff]
                %301 = vst [vmem:[%s291 + $0x20] sm:$0xff] %v300
                %v302 = vld [vmem:[%s290 + $0x28] sm:$0xff]
                %303 = vst [vmem:[%s291 + $0x28] sm:$0xff] %v302
                %v304 = vld [vmem:[%s290 + $0x30] sm:$0xff]
                %305 = vst [vmem:[%s291 + $0x30] sm:$0xff] %v304
                %v306 = vld [vmem:[%s290 + $0x38] sm:$0xff]
                %307 = vst [vmem:[%s291 + $0x38] sm:$0xff] %v306
                %v308 = vld [vmem:[%s290 + $0x40] sm:$0xff]
                %309 = vst [vmem:[%s291 + $0x40] sm:$0xff] %v308
                %v310 = vld [vmem:[%s290 + $0x48] sm:$0xff]
                %311 = vst [vmem:[%s291 + $0x48] sm:$0xff] %v310
                %v312 = vld [vmem:[%s290 + $0x50] sm:$0xff]
                %313 = vst [vmem:[%s291 + $0x50] sm:$0xff] %v312
                %v314 = vld [vmem:[%s290 + $0x58] sm:$0xff]
                %315 = vst [vmem:[%s291 + $0x58] sm:$0xff] %v314
                %v316 = vld [vmem:[%s290 + $0x60] sm:$0xff]
                %317 = vst [vmem:[%s291 + $0x60] sm:$0xff] %v316
                %v318 = vld [vmem:[%s290 + $0x68] sm:$0xff]
                %319 = vst [vmem:[%s291 + $0x68] sm:$0xff] %v318
                %v320 = vld [vmem:[%s290 + $0x70] sm:$0xff]
                %321 = vst [vmem:[%s291 + $0x70] sm:$0xff] %v320
                %v322 = vld [vmem:[%s290 + $0x78] sm:$0xff]
                %323 = vst [vmem:[%s291 + $0x78] sm:$0xff] %v322
                %v324 = vld [vmem:[%s290 + $0x100] sm:$0xff]
                %325 = vst [vmem:[%s291 + $0x80] sm:$0xff] %v324
                %v326 = vld [vmem:[%s290 + $0x108] sm:$0xff]
                %327 = vst [vmem:[%s291 + $0x88] sm:$0xff] %v326
                %v328 = vld [vmem:[%s290 + $0x110] sm:$0xff]
                %329 = vst [vmem:[%s291 + $0x90] sm:$0xff] %v328
                %v330 = vld [vmem:[%s290 + $0x118] sm:$0xff]
                %331 = vst [vmem:[%s291 + $0x98] sm:$0xff] %v330
                %v332 = vld [vmem:[%s290 + $0x120] sm:$0xff]
                %333 = vst [vmem:[%s291 + $0xa0] sm:$0xff] %v332
                %v334 = vld [vmem:[%s290 + $0x128] sm:$0xff]
                %335 = vst [vmem:[%s291 + $0xa8] sm:$0xff] %v334
                %v336 = vld [vmem:[%s290 + $0x130] sm:$0xff]
                %337 = vst [vmem:[%s291 + $0xb0] sm:$0xff] %v336
                %v338 = vld [vmem:[%s290 + $0x138] sm:$0xff]
                %339 = vst [vmem:[%s291 + $0xb8] sm:$0xff] %v338
                %v340 = vld [vmem:[%s290 + $0x140] sm:$0xff]
                %341 = vst [vmem:[%s291 + $0xc0] sm:$0xff] %v340
                %v342 = vld [vmem:[%s290 + $0x148] sm:$0xff]
                %343 = vst [vmem:[%s291 + $0xc8] sm:$0xff] %v342
                %v344 = vld [vmem:[%s290 + $0x150] sm:$0xff]
                %345 = vst [vmem:[%s291 + $0xd0] sm:$0xff] %v344
                %v346 = vld [vmem:[%s290 + $0x158] sm:$0xff]
                %347 = vst [vmem:[%s291 + $0xd8] sm:$0xff] %v346
                %v348 = vld [vmem:[%s290 + $0x160] sm:$0xff]
                %349 = vst [vmem:[%s291 + $0xe0] sm:$0xff] %v348
                %v350 = vld [vmem:[%s290 + $0x168] sm:$0xff]
                %351 = vst [vmem:[%s291 + $0xe8] sm:$0xff] %v350
                %v352 = vld [vmem:[%s290 + $0x170] sm:$0xff]
                %353 = vst [vmem:[%s291 + $0xf0] sm:$0xff] %v352
                %v354 = vld [vmem:[%s290 + $0x178] sm:$0xff]
                %355 = vst [vmem:[%s291 + $0xf8] sm:$0xff] %v354
                %v356 = vld [vmem:[%s290 + $0x200] sm:$0xff]
                %357 = vst [vmem:[%s291 + $0x100] sm:$0xff] %v356
                %v358 = vld [vmem:[%s290 + $0x208] sm:$0xff]
                %359 = vst [vmem:[%s291 + $0x108] sm:$0xff] %v358
                %v360 = vld [vmem:[%s290 + $0x210] sm:$0xff]
                %361 = vst [vmem:[%s291 + $0x110] sm:$0xff] %v360
                %v362 = vld [vmem:[%s290 + $0x218] sm:$0xff]
                %363 = vst [vmem:[%s291 + $0x118] sm:$0xff] %v362
                %v364 = vld [vmem:[%s290 + $0x220] sm:$0xff]
                %365 = vst [vmem:[%s291 + $0x120] sm:$0xff] %v364
                %v366 = vld [vmem:[%s290 + $0x228] sm:$0xff]
                %367 = vst [vmem:[%s291 + $0x128] sm:$0xff] %v366
                %v368 = vld [vmem:[%s290 + $0x230] sm:$0xff]
                %369 = vst [vmem:[%s291 + $0x130] sm:$0xff] %v368
                %v370 = vld [vmem:[%s290 + $0x238] sm:$0xff]
                %371 = vst [vmem:[%s291 + $0x138] sm:$0xff] %v370
                %v372 = vld [vmem:[%s290 + $0x240] sm:$0xff]
                %373 = vst [vmem:[%s291 + $0x140] sm:$0xff] %v372
                %v374 = vld [vmem:[%s290 + $0x248] sm:$0xff]
                %375 = vst [vmem:[%s291 + $0x148] sm:$0xff] %v374
                %v376 = vld [vmem:[%s290 + $0x250] sm:$0xff]
                %377 = vst [vmem:[%s291 + $0x150] sm:$0xff] %v376
                %v378 = vld [vmem:[%s290 + $0x258] sm:$0xff]
                %379 = vst [vmem:[%s291 + $0x158] sm:$0xff] %v378
                %v380 = vld [vmem:[%s290 + $0x260] sm:$0xff]
                %381 = vst [vmem:[%s291 + $0x160] sm:$0xff] %v380
                %v382 = vld [vmem:[%s290 + $0x268] sm:$0xff]
                %383 = vst [vmem:[%s291 + $0x168] sm:$0xff] %v382
                %v384 = vld [vmem:[%s290 + $0x270] sm:$0xff]
                %385 = vst [vmem:[%s291 + $0x170] sm:$0xff] %v384
                %v386 = vld [vmem:[%s290 + $0x278] sm:$0xff]
                %387 = vst [vmem:[%s291 + $0x178] sm:$0xff] %v386
                %v388 = vld [vmem:[%s290 + $0x300] sm:$0xff]
                %389 = vst [vmem:[%s291 + $0x180] sm:$0xff] %v388
                %v390 = vld [vmem:[%s290 + $0x308] sm:$0xff]
                %391 = vst [vmem:[%s291 + $0x188] sm:$0xff] %v390
                %v392 = vld [vmem:[%s290 + $0x310] sm:$0xff]
                %393 = vst [vmem:[%s291 + $0x190] sm:$0xff] %v392
                %v394 = vld [vmem:[%s290 + $0x318] sm:$0xff]
                %395 = vst [vmem:[%s291 + $0x198] sm:$0xff] %v394
                %v396 = vld [vmem:[%s290 + $0x320] sm:$0xff]
                %397 = vst [vmem:[%s291 + $0x1a0] sm:$0xff] %v396
                %v398 = vld [vmem:[%s290 + $0x328] sm:$0xff]
                %399 = vst [vmem:[%s291 + $0x1a8] sm:$0xff] %v398
                %v400 = vld [vmem:[%s290 + $0x330] sm:$0xff]
                %401 = vst [vmem:[%s291 + $0x1b0] sm:$0xff] %v400
                %v402 = vld [vmem:[%s290 + $0x338] sm:$0xff]
                %403 = vst [vmem:[%s291 + $0x1b8] sm:$0xff] %v402
                %v404 = vld [vmem:[%s290 + $0x340] sm:$0xff]
                %405 = vst [vmem:[%s291 + $0x1c0] sm:$0xff] %v404
                %v406 = vld [vmem:[%s290 + $0x348] sm:$0xff]
                %407 = vst [vmem:[%s291 + $0x1c8] sm:$0xff] %v406
                %v408 = vld [vmem:[%s290 + $0x350] sm:$0xff]
                %409 = vst [vmem:[%s291 + $0x1d0] sm:$0xff] %v408
                %v410 = vld [vmem:[%s290 + $0x358] sm:$0xff]
                %411 = vst [vmem:[%s291 + $0x1d8] sm:$0xff] %v410
                %v412 = vld [vmem:[%s290 + $0x360] sm:$0xff]
                %413 = vst [vmem:[%s291 + $0x1e0] sm:$0xff] %v412
                %v414 = vld [vmem:[%s290 + $0x368] sm:$0xff]
                %415 = vst [vmem:[%s291 + $0x1e8] sm:$0xff] %v414
                %v416 = vld [vmem:[%s290 + $0x370] sm:$0xff]
                %417 = vst [vmem:[%s291 + $0x1f0] sm:$0xff] %v416
                %v418 = vld [vmem:[%s290 + $0x378] sm:$0xff]
                %419 = vst [vmem:[%s291 + $0x1f8] sm:$0xff] %v418
              $region49: #{meta_zo_forward.1} parent=43 // loop_footer
                %s289 = sadd.s32 1, %s285
              $region50: #{meta_zo_forward.1} parent=43 // loop_footer_branch
                %284 = sbr.rel target = $region46
              $region51: #{meta_zo_forward.1} parent=43 // loop_exit
                _
            $region44: #{meta_zo_forward.1} parent=39 // pred_fallthru
              _
            // Predicated region
            $region52: #{meta_zo_forward.1} parent=39 // pred_check
              _
            $region53: #{meta_zo_forward.1} parent=39 // pred_check_branch
              %421 = sbr.rel target = $region55
            $region54: #{meta_zo_forward.1} parent=39 // pred_region
              _
            $region55: #{meta_zo_forward.1} parent=39 // pred_fallthru
              _
          $region40: #{meta_zo_forward.1} parent=35 // pred_fallthru
            _
          %422 = vnop
        $region36: #{meta_zo_forward.1} parent=27 // pred_fallthru
          _
        // Predicated region
        $region56: #{meta_zo_forward.1} parent=27 // pred_check
          %p423 = pneg %p87
        $region57: #{meta_zo_forward.1} parent=27 // pred_check_branch
          %425 = sbr.rel (%p423) target = $region59
        $region58: #{meta_zo_forward.1} parent=27 // pred_region
          %s426 = sand.u32 %s77, 1
          %s427 = sand.u32 %s77, 1
          %s428 = smul.addr %s427, 512
          %s429 = scalar_lea.vmem [#allocation3], %s428
          %s430 = smul.u32 16, %s15
          %s431 = smul.addr %s430, 8
          %s432 = scalar_lea.vmem %s2, %s431
          // Predicated region
          $region60: #{meta_zo_forward.1} parent=58 // pred_check
            _
          $region61: #{meta_zo_forward.1} parent=58 // pred_check_branch
            %434 = sbr.rel (0) target = $region63
          $region62: #{meta_zo_forward.1} parent=58 // pred_region
            // Predicated region
            $region64: #{meta_zo_forward.1} parent=62 // pred_check
              _
            $region65: #{meta_zo_forward.1} parent=62 // pred_check_branch
              %436 = sbr.rel (0) target = $region67
            $region66: #{meta_zo_forward.1} parent=62 // pred_region
              loop: start=0, step=1, limit=1
              $region68: #{meta_zo_forward.1} parent=66 // loop_pre_header
                _
              $region69: #{meta_zo_forward.1} parent=66 // loop_header
                %s438 = sphi 0, %s442
                %p439 = scmp.ge.s32.totalorder %s438, 1
                %s443 = sphi %s432, %s432
                %s444 = sphi %s429, %s429
              $region70: #{meta_zo_forward.1} parent=66 // loop_header_branch
                %441 = sbr.rel (%p439) target = $region74
              $region71: #{meta_zo_forward.1} parent=66 // loop_body
                %v445 = vld [vmem:[%s443] sm:$0xff]
                %446 = vst [vmem:[%s444] sm:$0xff] %v445
                %v447 = vld [vmem:[%s443 + $0x8] sm:$0xff]
                %448 = vst [vmem:[%s444 + $0x8] sm:$0xff] %v447
                %v449 = vld [vmem:[%s443 + $0x10] sm:$0xff]
                %450 = vst [vmem:[%s444 + $0x10] sm:$0xff] %v449
                %v451 = vld [vmem:[%s443 + $0x18] sm:$0xff]
                %452 = vst [vmem:[%s444 + $0x18] sm:$0xff] %v451
                %v453 = vld [vmem:[%s443 + $0x20] sm:$0xff]
                %454 = vst [vmem:[%s444 + $0x20] sm:$0xff] %v453
                %v455 = vld [vmem:[%s443 + $0x28] sm:$0xff]
                %456 = vst [vmem:[%s444 + $0x28] sm:$0xff] %v455
                %v457 = vld [vmem:[%s443 + $0x30] sm:$0xff]
                %458 = vst [vmem:[%s444 + $0x30] sm:$0xff] %v457
                %v459 = vld [vmem:[%s443 + $0x38] sm:$0xff]
                %460 = vst [vmem:[%s444 + $0x38] sm:$0xff] %v459
                %v461 = vld [vmem:[%s443 + $0x40] sm:$0xff]
                %462 = vst [vmem:[%s444 + $0x40] sm:$0xff] %v461
                %v463 = vld [vmem:[%s443 + $0x48] sm:$0xff]
                %464 = vst [vmem:[%s444 + $0x48] sm:$0xff] %v463
                %v465 = vld [vmem:[%s443 + $0x50] sm:$0xff]
                %466 = vst [vmem:[%s444 + $0x50] sm:$0xff] %v465
                %v467 = vld [vmem:[%s443 + $0x58] sm:$0xff]
                %468 = vst [vmem:[%s444 + $0x58] sm:$0xff] %v467
                %v469 = vld [vmem:[%s443 + $0x60] sm:$0xff]
                %470 = vst [vmem:[%s444 + $0x60] sm:$0xff] %v469
                %v471 = vld [vmem:[%s443 + $0x68] sm:$0xff]
                %472 = vst [vmem:[%s444 + $0x68] sm:$0xff] %v471
                %v473 = vld [vmem:[%s443 + $0x70] sm:$0xff]
                %474 = vst [vmem:[%s444 + $0x70] sm:$0xff] %v473
                %v475 = vld [vmem:[%s443 + $0x78] sm:$0xff]
                %476 = vst [vmem:[%s444 + $0x78] sm:$0xff] %v475
                %v477 = vld [vmem:[%s443 + $0x100] sm:$0xff]
                %478 = vst [vmem:[%s444 + $0x80] sm:$0xff] %v477
                %v479 = vld [vmem:[%s443 + $0x108] sm:$0xff]
                %480 = vst [vmem:[%s444 + $0x88] sm:$0xff] %v479
                %v481 = vld [vmem:[%s443 + $0x110] sm:$0xff]
                %482 = vst [vmem:[%s444 + $0x90] sm:$0xff] %v481
                %v483 = vld [vmem:[%s443 + $0x118] sm:$0xff]
                %484 = vst [vmem:[%s444 + $0x98] sm:$0xff] %v483
                %v485 = vld [vmem:[%s443 + $0x120] sm:$0xff]
                %486 = vst [vmem:[%s444 + $0xa0] sm:$0xff] %v485
                %v487 = vld [vmem:[%s443 + $0x128] sm:$0xff]
                %488 = vst [vmem:[%s444 + $0xa8] sm:$0xff] %v487
                %v489 = vld [vmem:[%s443 + $0x130] sm:$0xff]
                %490 = vst [vmem:[%s444 + $0xb0] sm:$0xff] %v489
                %v491 = vld [vmem:[%s443 + $0x138] sm:$0xff]
                %492 = vst [vmem:[%s444 + $0xb8] sm:$0xff] %v491
                %v493 = vld [vmem:[%s443 + $0x140] sm:$0xff]
                %494 = vst [vmem:[%s444 + $0xc0] sm:$0xff] %v493
                %v495 = vld [vmem:[%s443 + $0x148] sm:$0xff]
                %496 = vst [vmem:[%s444 + $0xc8] sm:$0xff] %v495
                %v497 = vld [vmem:[%s443 + $0x150] sm:$0xff]
                %498 = vst [vmem:[%s444 + $0xd0] sm:$0xff] %v497
                %v499 = vld [vmem:[%s443 + $0x158] sm:$0xff]
                %500 = vst [vmem:[%s444 + $0xd8] sm:$0xff] %v499
                %v501 = vld [vmem:[%s443 + $0x160] sm:$0xff]
                %502 = vst [vmem:[%s444 + $0xe0] sm:$0xff] %v501
                %v503 = vld [vmem:[%s443 + $0x168] sm:$0xff]
                %504 = vst [vmem:[%s444 + $0xe8] sm:$0xff] %v503
                %v505 = vld [vmem:[%s443 + $0x170] sm:$0xff]
                %506 = vst [vmem:[%s444 + $0xf0] sm:$0xff] %v505
                %v507 = vld [vmem:[%s443 + $0x178] sm:$0xff]
                %508 = vst [vmem:[%s444 + $0xf8] sm:$0xff] %v507
                %v509 = vld [vmem:[%s443 + $0x200] sm:$0xff]
                %510 = vst [vmem:[%s444 + $0x100] sm:$0xff] %v509
                %v511 = vld [vmem:[%s443 + $0x208] sm:$0xff]
                %512 = vst [vmem:[%s444 + $0x108] sm:$0xff] %v511
                %v513 = vld [vmem:[%s443 + $0x210] sm:$0xff]
                %514 = vst [vmem:[%s444 + $0x110] sm:$0xff] %v513
                %v515 = vld [vmem:[%s443 + $0x218] sm:$0xff]
                %516 = vst [vmem:[%s444 + $0x118] sm:$0xff] %v515
                %v517 = vld [vmem:[%s443 + $0x220] sm:$0xff]
                %518 = vst [vmem:[%s444 + $0x120] sm:$0xff] %v517
                %v519 = vld [vmem:[%s443 + $0x228] sm:$0xff]
                %520 = vst [vmem:[%s444 + $0x128] sm:$0xff] %v519
                %v521 = vld [vmem:[%s443 + $0x230] sm:$0xff]
                %522 = vst [vmem:[%s444 + $0x130] sm:$0xff] %v521
                %v523 = vld [vmem:[%s443 + $0x238] sm:$0xff]
                %524 = vst [vmem:[%s444 + $0x138] sm:$0xff] %v523
                %v525 = vld [vmem:[%s443 + $0x240] sm:$0xff]
                %526 = vst [vmem:[%s444 + $0x140] sm:$0xff] %v525
                %v527 = vld [vmem:[%s443 + $0x248] sm:$0xff]
                %528 = vst [vmem:[%s444 + $0x148] sm:$0xff] %v527
                %v529 = vld [vmem:[%s443 + $0x250] sm:$0xff]
                %530 = vst [vmem:[%s444 + $0x150] sm:$0xff] %v529
                %v531 = vld [vmem:[%s443 + $0x258] sm:$0xff]
                %532 = vst [vmem:[%s444 + $0x158] sm:$0xff] %v531
                %v533 = vld [vmem:[%s443 + $0x260] sm:$0xff]
                %534 = vst [vmem:[%s444 + $0x160] sm:$0xff] %v533
                %v535 = vld [vmem:[%s443 + $0x268] sm:$0xff]
                %536 = vst [vmem:[%s444 + $0x168] sm:$0xff] %v535
                %v537 = vld [vmem:[%s443 + $0x270] sm:$0xff]
                %538 = vst [vmem:[%s444 + $0x170] sm:$0xff] %v537
                %v539 = vld [vmem:[%s443 + $0x278] sm:$0xff]
                %540 = vst [vmem:[%s444 + $0x178] sm:$0xff] %v539
                %v541 = vld [vmem:[%s443 + $0x300] sm:$0xff]
                %542 = vst [vmem:[%s444 + $0x180] sm:$0xff] %v541
                %v543 = vld [vmem:[%s443 + $0x308] sm:$0xff]
                %544 = vst [vmem:[%s444 + $0x188] sm:$0xff] %v543
                %v545 = vld [vmem:[%s443 + $0x310] sm:$0xff]
                %546 = vst [vmem:[%s444 + $0x190] sm:$0xff] %v545
                %v547 = vld [vmem:[%s443 + $0x318] sm:$0xff]
                %548 = vst [vmem:[%s444 + $0x198] sm:$0xff] %v547
                %v549 = vld [vmem:[%s443 + $0x320] sm:$0xff]
                %550 = vst [vmem:[%s444 + $0x1a0] sm:$0xff] %v549
                %v551 = vld [vmem:[%s443 + $0x328] sm:$0xff]
                %552 = vst [vmem:[%s444 + $0x1a8] sm:$0xff] %v551
                %v553 = vld [vmem:[%s443 + $0x330] sm:$0xff]
                %554 = vst [vmem:[%s444 + $0x1b0] sm:$0xff] %v553
                %v555 = vld [vmem:[%s443 + $0x338] sm:$0xff]
                %556 = vst [vmem:[%s444 + $0x1b8] sm:$0xff] %v555
                %v557 = vld [vmem:[%s443 + $0x340] sm:$0xff]
                %558 = vst [vmem:[%s444 + $0x1c0] sm:$0xff] %v557
                %v559 = vld [vmem:[%s443 + $0x348] sm:$0xff]
                %560 = vst [vmem:[%s444 + $0x1c8] sm:$0xff] %v559
                %v561 = vld [vmem:[%s443 + $0x350] sm:$0xff]
                %562 = vst [vmem:[%s444 + $0x1d0] sm:$0xff] %v561
                %v563 = vld [vmem:[%s443 + $0x358] sm:$0xff]
                %564 = vst [vmem:[%s444 + $0x1d8] sm:$0xff] %v563
                %v565 = vld [vmem:[%s443 + $0x360] sm:$0xff]
                %566 = vst [vmem:[%s444 + $0x1e0] sm:$0xff] %v565
                %v567 = vld [vmem:[%s443 + $0x368] sm:$0xff]
                %568 = vst [vmem:[%s444 + $0x1e8] sm:$0xff] %v567
                %v569 = vld [vmem:[%s443 + $0x370] sm:$0xff]
                %570 = vst [vmem:[%s444 + $0x1f0] sm:$0xff] %v569
                %v571 = vld [vmem:[%s443 + $0x378] sm:$0xff]
                %572 = vst [vmem:[%s444 + $0x1f8] sm:$0xff] %v571
              $region72: #{meta_zo_forward.1} parent=66 // loop_footer
                %s442 = sadd.s32 1, %s438
              $region73: #{meta_zo_forward.1} parent=66 // loop_footer_branch
                %437 = sbr.rel target = $region69
              $region74: #{meta_zo_forward.1} parent=66 // loop_exit
                _
            $region67: #{meta_zo_forward.1} parent=62 // pred_fallthru
              _
            // Predicated region
            $region75: #{meta_zo_forward.1} parent=62 // pred_check
              _
            $region76: #{meta_zo_forward.1} parent=62 // pred_check_branch
              %574 = sbr.rel target = $region78
            $region77: #{meta_zo_forward.1} parent=62 // pred_region
              _
            $region78: #{meta_zo_forward.1} parent=62 // pred_fallthru
              _
          $region63: #{meta_zo_forward.1} parent=58 // pred_fallthru
            _
          %575 = vnop
        $region59: #{meta_zo_forward.1} parent=27 // pred_fallthru
          _
      $region28: #{meta_zo_forward.1} parent=5 // pred_fallthru
        _
      %p576 = scmp.le.s32.totalorder 1, %s15
      %p577 = scmp.lt.s32.totalorder %s15, 3
      %p578 = pnand %p576, %p577
      %p579 = pneg %p578
      // Predicated region
      $region79: #{meta_zo_forward.1} parent=5 // pred_check
        _
      $region80: #{meta_zo_forward.1} parent=5 // pred_check_branch
        %581 = sbr.rel (%p578) target = $region82
      $region81: #{meta_zo_forward.1} parent=5 // pred_region
        %s582 = ssub.s32 %s15, 1
        %s583 = sand.u32 %s54, 1
        %s584 = sand.u32 %s54, 1
        %s585 = smul.addr %s584, 512
        %s586 = scalar_lea.vmem [#allocation2], %s585
        // Predicated region
        $region83: #{meta_zo_forward.1} parent=81 // pred_check
          %p587 = pneg %p67
        $region84: #{meta_zo_forward.1} parent=81 // pred_check_branch
          %589 = sbr.rel (%p587) target = $region86
        $region85: #{meta_zo_forward.1} parent=81 // pred_region
          _
        $region86: #{meta_zo_forward.1} parent=81 // pred_fallthru
          _
        %s590 = sand.u32 %s80, 1
        %s591 = sand.u32 %s80, 1
        %s592 = smul.addr %s591, 512
        %s593 = scalar_lea.vmem [#allocation3], %s592
        // Predicated region
        $region87: #{meta_zo_forward.1} parent=81 // pred_check
          %p594 = pneg %p93
        $region88: #{meta_zo_forward.1} parent=81 // pred_check_branch
          %596 = sbr.rel (%p594) target = $region90
        $region89: #{meta_zo_forward.1} parent=81 // pred_region
          _
        $region90: #{meta_zo_forward.1} parent=81 // pred_fallthru
          _
        %s597 = smul.u32 16, %s20
        %p598 = scmp.lt.s32.totalorder %s597, 31
        %s599 = scalar_select %p598, %s597, 31
        %s600 = scalar_lea.vmem %s0, %s599
        %p601 = pneg %p41
        %p602 = pneg %p38
        %s603 = sand.u32 %s54, 1
        %s604 = sand.u32 %s54, 1
        %s605 = smul.addr %s604, 512
        %s606 = scalar_lea.vmem [#allocation2], %s605
        %p607 = pneg %p67
        %p608 = pneg %p64
        %s609 = sand.u32 %s80, 1
        %s610 = sand.u32 %s80, 1
        %s611 = smul.addr %s610, 512
        %s612 = scalar_lea.vmem [#allocation3], %s611
        %p613 = pneg %p93
        %p614 = pneg %p90
        %p615 = pneg %p114
        %p616 = pneg %p111
        %p617 = pneg %p135
        %p618 = pneg %p132
        %p619 = pneg %p156
        %p620 = pneg %p153
        %p621 = pneg %p182
        %p622 = pneg %p179
        %s623 = smul.u32 16, %s20
        %p624 = scmp.lt.s32.totalorder %s623, 31
        %s625 = scalar_select %p624, %s623, 31
        %s626 = scalar_lea.vmem %s6, %s625
        %p627 = pneg %p208
        %p628 = pneg %p205
        %s629 = sand.u32 %s195, 1
        %s630 = sand.u32 %s195, 1
        %s631 = smul.addr %s630, 512
        %s632 = scalar_lea.vmem [#allocation4], %s631
        %p633 = pneg %p234
        %p634 = pneg %p231
        %s635 = sand.u32 %s221, 1
        %s636 = sand.u32 %s221, 1
        %s637 = smul.addr %s636, 512
        %s638 = scalar_lea.vmem [#allocation5], %s637
        %s639 = smul.u32 16, %s20
        %p640 = scmp.lt.s32.totalorder %s639, 31
        %s641 = scalar_select %p640, %s639, 31
        %s642 = scalar_lea.vmem %s0, %s641
        %s643 = smul.u32 16, %s20
        %s644 = smul.u32 16, %s20
        %s645 = smul.u32 16, %s20
        %s646 = smul.u32 16, %s20
        %p647 = scmp.lt.s32.totalorder %s646, 31
        %s648 = scalar_select %p647, %s646, 31
        %s649 = scalar_lea.vmem %s6, %s648
        %s650 = smul.u32 16, %s20
        %s651 = smul.u32 16, %s20
        %s652 = smul.u32 16, %s20
        %v654 = vld [vmem:[%s642] sm:$0xff]
        %v655 = vld [vmem:[%s642 + $0x8] sm:$0xff]
        %v656 = vld [vmem:[%s586] sm:$0xff]
        %v657 = vld [vmem:[%s586 + $0x8] sm:$0xff]
        %v658 = vld [vmem:[%s586 + $0x10] sm:$0xff]
        %v659 = vld [vmem:[%s586 + $0x18] sm:$0xff]
        %v660 = vld [vmem:[%s586 + $0x20] sm:$0xff]
        %v661 = vld [vmem:[%s586 + $0x28] sm:$0xff]
        %v662 = vld [vmem:[%s586 + $0x30] sm:$0xff]
        %v663 = vld [vmem:[%s586 + $0x38] sm:$0xff]
        %v664 = vld [vmem:[%s586 + $0x40] sm:$0xff]
        %v665 = vld [vmem:[%s586 + $0x48] sm:$0xff]
        %v666 = vld [vmem:[%s586 + $0x50] sm:$0xff]
        %v667 = vld [vmem:[%s586 + $0x58] sm:$0xff]
        %v668 = vld [vmem:[%s586 + $0x60] sm:$0xff]
        %v669 = vld [vmem:[%s586 + $0x68] sm:$0xff]
        %v670 = vld [vmem:[%s586 + $0x70] sm:$0xff]
        %v671 = vld [vmem:[%s586 + $0x78] sm:$0xff]
        %v672 = vld [vmem:[%s586 + $0x80] sm:$0xff]
        %v673 = vld [vmem:[%s586 + $0x88] sm:$0xff]
        %v674 = vld [vmem:[%s586 + $0x90] sm:$0xff]
        %v675 = vld [vmem:[%s586 + $0x98] sm:$0xff]
        %v676 = vld [vmem:[%s586 + $0xa0] sm:$0xff]
        %v677 = vld [vmem:[%s586 + $0xa8] sm:$0xff]
        %v678 = vld [vmem:[%s586 + $0xb0] sm:$0xff]
        %v679 = vld [vmem:[%s586 + $0xb8] sm:$0xff]
        %v680 = vld [vmem:[%s586 + $0xc0] sm:$0xff]
        %v681 = vld [vmem:[%s586 + $0xc8] sm:$0xff]
        %v682 = vld [vmem:[%s586 + $0xd0] sm:$0xff]
        %v683 = vld [vmem:[%s586 + $0xd8] sm:$0xff]
        %v684 = vld [vmem:[%s586 + $0xe0] sm:$0xff]
        %v685 = vld [vmem:[%s586 + $0xe8] sm:$0xff]
        %v686 = vld [vmem:[%s586 + $0xf0] sm:$0xff]
        %v687 = vld [vmem:[%s586 + $0xf8] sm:$0xff]
        %v688 = vld [vmem:[%s586 + $0x100] sm:$0xff]
        %v689 = vld [vmem:[%s586 + $0x108] sm:$0xff]
        %v690 = vld [vmem:[%s586 + $0x110] sm:$0xff]
        %v691 = vld [vmem:[%s586 + $0x118] sm:$0xff]
        %v692 = vld [vmem:[%s586 + $0x120] sm:$0xff]
        %v693 = vld [vmem:[%s586 + $0x128] sm:$0xff]
        %v694 = vld [vmem:[%s586 + $0x130] sm:$0xff]
        %v695 = vld [vmem:[%s586 + $0x138] sm:$0xff]
        %v696 = vld [vmem:[%s586 + $0x140] sm:$0xff]
        %v697 = vld [vmem:[%s586 + $0x148] sm:$0xff]
        %v698 = vld [vmem:[%s586 + $0x150] sm:$0xff]
        %v699 = vld [vmem:[%s586 + $0x158] sm:$0xff]
        %v700 = vld [vmem:[%s586 + $0x160] sm:$0xff]
        %v701 = vld [vmem:[%s586 + $0x168] sm:$0xff]
        %v702 = vld [vmem:[%s586 + $0x170] sm:$0xff]
        %v703 = vld [vmem:[%s586 + $0x178] sm:$0xff]
        %v704 = vld [vmem:[%s586 + $0x180] sm:$0xff]
        %v705 = vld [vmem:[%s586 + $0x188] sm:$0xff]
        %v706 = vld [vmem:[%s586 + $0x190] sm:$0xff]
        %v707 = vld [vmem:[%s586 + $0x198] sm:$0xff]
        %v708 = vld [vmem:[%s586 + $0x1a0] sm:$0xff]
        %v709 = vld [vmem:[%s586 + $0x1a8] sm:$0xff]
        %v710 = vld [vmem:[%s586 + $0x1b0] sm:$0xff]
        %v711 = vld [vmem:[%s586 + $0x1b8] sm:$0xff]
        %v712 = vld [vmem:[%s586 + $0x1c0] sm:$0xff]
        %v713 = vld [vmem:[%s586 + $0x1c8] sm:$0xff]
        %v714 = vld [vmem:[%s586 + $0x1d0] sm:$0xff]
        %v715 = vld [vmem:[%s586 + $0x1d8] sm:$0xff]
        %v716 = vld [vmem:[%s586 + $0x1e0] sm:$0xff]
        %v717 = vld [vmem:[%s586 + $0x1e8] sm:$0xff]
        %v718 = vld [vmem:[%s586 + $0x1f0] sm:$0xff]
        %v719 = vld [vmem:[%s586 + $0x1f8] sm:$0xff]
        %v720 = vpack.c.bf16 %v672, %v656
        %v721 = vpack.c.bf16 %v673, %v657
        %v722 = vpack.c.bf16 %v674, %v658
        %v723 = vpack.c.bf16 %v675, %v659
        %v724 = vpack.c.bf16 %v676, %v660
        %v725 = vpack.c.bf16 %v677, %v661
        %v726 = vpack.c.bf16 %v678, %v662
        %v727 = vpack.c.bf16 %v679, %v663
        %v728 = vpack.c.bf16 %v680, %v664
        %v729 = vpack.c.bf16 %v681, %v665
        %v730 = vpack.c.bf16 %v682, %v666
        %v731 = vpack.c.bf16 %v683, %v667
        %v732 = vpack.c.bf16 %v684, %v668
        %v733 = vpack.c.bf16 %v685, %v669
        %v734 = vpack.c.bf16 %v686, %v670
        %v735 = vpack.c.bf16 %v687, %v671
        %v736 = vpack.c.bf16 %v704, %v688
        %v737 = vpack.c.bf16 %v705, %v689
        %v738 = vpack.c.bf16 %v706, %v690
        %v739 = vpack.c.bf16 %v707, %v691
        %v740 = vpack.c.bf16 %v708, %v692
        %v741 = vpack.c.bf16 %v709, %v693
        %v742 = vpack.c.bf16 %v710, %v694
        %v743 = vpack.c.bf16 %v711, %v695
        %v744 = vpack.c.bf16 %v712, %v696
        %v745 = vpack.c.bf16 %v713, %v697
        %v746 = vpack.c.bf16 %v714, %v698
        %v747 = vpack.c.bf16 %v715, %v699
        %v748 = vpack.c.bf16 %v716, %v700
        %v749 = vpack.c.bf16 %v717, %v701
        %v750 = vpack.c.bf16 %v718, %v702
        %v751 = vpack.c.bf16 %v719, %v703
        %v752 = vld [vmem:[%s4] sm:$0xf]
        %v753 = vld [vmem:[%s4 + $0x4] sm:$0xf]
        %v754 = vld [vmem:[%s4 + $0x8] sm:$0xf]
        %v755 = vld [vmem:[%s4 + $0xc] sm:$0xf]
        %v756 = vld [vmem:[%s4 + $0x10] sm:$0xf]
        %v757 = vld [vmem:[%s4 + $0x14] sm:$0xf]
        %v758 = vld [vmem:[%s4 + $0x18] sm:$0xf]
        %v759 = vld [vmem:[%s4 + $0x1c] sm:$0xf]
        %v760 = vld [vmem:[%s4 + $0x20] sm:$0xf]
        %v761 = vld [vmem:[%s4 + $0x24] sm:$0xf]
        %v762 = vld [vmem:[%s4 + $0x28] sm:$0xf]
        %v763 = vld [vmem:[%s4 + $0x2c] sm:$0xf]
        %v764 = vld [vmem:[%s4 + $0x30] sm:$0xf]
        %v765 = vld [vmem:[%s4 + $0x34] sm:$0xf]
        %v766 = vld [vmem:[%s4 + $0x38] sm:$0xf]
        %v767 = vld [vmem:[%s4 + $0x3c] sm:$0xf]
        %v768 = vld [vmem:[%s3] sm:$0xff]
        %v769 = vld [vmem:[%s3 + $0x8] sm:$0xff]
        %v770 = vld [vmem:[%s3 + $0x10] sm:$0xff]
        %v771 = vld [vmem:[%s3 + $0x18] sm:$0xff]
        %v772 = vld [vmem:[%s3 + $0x20] sm:$0xff]
        %v773 = vld [vmem:[%s3 + $0x28] sm:$0xff]
        %v774 = vld [vmem:[%s3 + $0x30] sm:$0xff]
        %v775 = vld [vmem:[%s3 + $0x38] sm:$0xff]
        %v776 = vld [vmem:[%s3 + $0x40] sm:$0xff]
        %v777 = vld [vmem:[%s3 + $0x48] sm:$0xff]
        %v778 = vld [vmem:[%s3 + $0x50] sm:$0xff]
        %v779 = vld [vmem:[%s3 + $0x58] sm:$0xff]
        %v780 = vld [vmem:[%s3 + $0x60] sm:$0xff]
        %v781 = vld [vmem:[%s3 + $0x68] sm:$0xff]
        %v782 = vld [vmem:[%s3 + $0x70] sm:$0xff]
        %v783 = vld [vmem:[%s3 + $0x78] sm:$0xff]
        %785 = vset.pattern.permute.xlu0 0
        %786 = vperm.xlu0 %785, %v768
        %v787 = vpop.permute.xlu0 %786
        %790 = vset.pattern.permute.xlu0 0
        %791 = vperm.xlu0 %790, %v769
        %v792 = vpop.permute.xlu0 %791
        %795 = vset.pattern.permute.xlu0 0
        %796 = vperm.xlu0 %795, %v770
        %v797 = vpop.permute.xlu0 %796
        %800 = vset.pattern.permute.xlu0 0
        %801 = vperm.xlu0 %800, %v771
        %v802 = vpop.permute.xlu0 %801
        %805 = vset.pattern.permute.xlu0 0
        %806 = vperm.xlu0 %805, %v772
        %v807 = vpop.permute.xlu0 %806
        %810 = vset.pattern.permute.xlu0 0
        %811 = vperm.xlu0 %810, %v773
        %v812 = vpop.permute.xlu0 %811
        %815 = vset.pattern.permute.xlu0 0
        %816 = vperm.xlu0 %815, %v774
        %v817 = vpop.permute.xlu0 %816
        %820 = vset.pattern.permute.xlu0 0
        %821 = vperm.xlu0 %820, %v775
        %v822 = vpop.permute.xlu0 %821
        %825 = vset.pattern.permute.xlu0 0
        %826 = vperm.xlu0 %825, %v776
        %v827 = vpop.permute.xlu0 %826
        %830 = vset.pattern.permute.xlu0 0
        %831 = vperm.xlu0 %830, %v777
        %v832 = vpop.permute.xlu0 %831
        %835 = vset.pattern.permute.xlu0 0
        %836 = vperm.xlu0 %835, %v778
        %v837 = vpop.permute.xlu0 %836
        %840 = vset.pattern.permute.xlu0 0
        %841 = vperm.xlu0 %840, %v779
        %v842 = vpop.permute.xlu0 %841
        %845 = vset.pattern.permute.xlu0 0
        %846 = vperm.xlu0 %845, %v780
        %v847 = vpop.permute.xlu0 %846
        %850 = vset.pattern.permute.xlu0 0
        %851 = vperm.xlu0 %850, %v781
        %v852 = vpop.permute.xlu0 %851
        %855 = vset.pattern.permute.xlu0 0
        %856 = vperm.xlu0 %855, %v782
        %v857 = vpop.permute.xlu0 %856
        %860 = vset.pattern.permute.xlu0 0
        %861 = vperm.xlu0 %860, %v783
        %v862 = vpop.permute.xlu0 %861
        %v866 = vlaneseq
        %v867 = vshrl.u32 %v866, 7
        %v868 = vsub.s32 0, %v867
        %v869 = vrot.slane %v654, %v868
        %v870 = vlaneseq
        %v871 = vshrl.u32 %v870, 7
        %v872 = vsub.s32 1, %v871
        %v873 = vrot.slane %v654, %v872
        %v874 = vlaneseq
        %v875 = vshrl.u32 %v874, 7
        %v876 = vsub.s32 2, %v875
        %v877 = vrot.slane %v654, %v876
        %v878 = vlaneseq
        %v879 = vshrl.u32 %v878, 7
        %v880 = vsub.s32 3, %v879
        %v881 = vrot.slane %v654, %v880
        %v882 = vlaneseq
        %v883 = vshrl.u32 %v882, 7
        %v884 = vsub.s32 4, %v883
        %v885 = vrot.slane %v654, %v884
        %v886 = vlaneseq
        %v887 = vshrl.u32 %v886, 7
        %v888 = vsub.s32 5, %v887
        %v889 = vrot.slane %v654, %v888
        %v890 = vlaneseq
        %v891 = vshrl.u32 %v890, 7
        %v892 = vsub.s32 6, %v891
        %v893 = vrot.slane %v654, %v892
        %v894 = vlaneseq
        %v895 = vshrl.u32 %v894, 7
        %v896 = vsub.s32 7, %v895
        %v897 = vrot.slane %v654, %v896
        %v898 = vlaneseq
        %v899 = vshrl.u32 %v898, 7
        %v900 = vsub.s32 0, %v899
        %v901 = vrot.slane %v655, %v900
        %v902 = vlaneseq
        %v903 = vshrl.u32 %v902, 7
        %v904 = vsub.s32 1, %v903
        %v905 = vrot.slane %v655, %v904
        %v906 = vlaneseq
        %v907 = vshrl.u32 %v906, 7
        %v908 = vsub.s32 2, %v907
        %v909 = vrot.slane %v655, %v908
        %v910 = vlaneseq
        %v911 = vshrl.u32 %v910, 7
        %v912 = vsub.s32 3, %v911
        %v913 = vrot.slane %v655, %v912
        %v914 = vlaneseq
        %v915 = vshrl.u32 %v914, 7
        %v916 = vsub.s32 4, %v915
        %v917 = vrot.slane %v655, %v916
        %v918 = vlaneseq
        %v919 = vshrl.u32 %v918, 7
        %v920 = vsub.s32 5, %v919
        %v921 = vrot.slane %v655, %v920
        %v922 = vlaneseq
        %v923 = vshrl.u32 %v922, 7
        %v924 = vsub.s32 6, %v923
        %v925 = vrot.slane %v655, %v924
        %v926 = vlaneseq
        %v927 = vshrl.u32 %v926, 7
        %v928 = vsub.s32 7, %v927
        %v929 = vrot.slane %v655, %v928
        %v946 = vmul.f32 %v787, %v869
        %v947 = vmul.f32 %v787, %v873
        %v948 = vmul.f32 %v787, %v877
        %v949 = vmul.f32 %v787, %v881
        %v950 = vmul.f32 %v787, %v885
        %v951 = vmul.f32 %v787, %v889
        %v952 = vmul.f32 %v787, %v893
        %v953 = vmul.f32 %v787, %v897
        %v954 = vmul.f32 %v787, %v901
        %v955 = vmul.f32 %v787, %v905
        %v956 = vmul.f32 %v787, %v909
        %v957 = vmul.f32 %v787, %v913
        %v958 = vmul.f32 %v787, %v917
        %v959 = vmul.f32 %v787, %v921
        %v960 = vmul.f32 %v787, %v925
        %v961 = vmul.f32 %v787, %v929
        %v962 = vmul.f32 %v792, %v869
        %v963 = vmul.f32 %v792, %v873
        %v964 = vmul.f32 %v792, %v877
        %v965 = vmul.f32 %v792, %v881
        %v966 = vmul.f32 %v792, %v885
        %v967 = vmul.f32 %v792, %v889
        %v968 = vmul.f32 %v792, %v893
        %v969 = vmul.f32 %v792, %v897
        %v970 = vmul.f32 %v792, %v901
        %v971 = vmul.f32 %v792, %v905
        %v972 = vmul.f32 %v792, %v909
        %v973 = vmul.f32 %v792, %v913
        %v974 = vmul.f32 %v792, %v917
        %v975 = vmul.f32 %v792, %v921
        %v976 = vmul.f32 %v792, %v925
        %v977 = vmul.f32 %v792, %v929
        %v978 = vmul.f32 %v797, %v869
        %v979 = vmul.f32 %v797, %v873
        %v980 = vmul.f32 %v797, %v877
        %v981 = vmul.f32 %v797, %v881
        %v982 = vmul.f32 %v797, %v885
        %v983 = vmul.f32 %v797, %v889
        %v984 = vmul.f32 %v797, %v893
        %v985 = vmul.f32 %v797, %v897
        %v986 = vmul.f32 %v797, %v901
        %v987 = vmul.f32 %v797, %v905
        %v988 = vmul.f32 %v797, %v909
        %v989 = vmul.f32 %v797, %v913
        %v990 = vmul.f32 %v797, %v917
        %v991 = vmul.f32 %v797, %v921
        %v992 = vmul.f32 %v797, %v925
        %v993 = vmul.f32 %v797, %v929
        %v994 = vmul.f32 %v802, %v869
        %v995 = vmul.f32 %v802, %v873
        %v996 = vmul.f32 %v802, %v877
        %v997 = vmul.f32 %v802, %v881
        %v998 = vmul.f32 %v802, %v885
        %v999 = vmul.f32 %v802, %v889
        %v1000 = vmul.f32 %v802, %v893
        %v1001 = vmul.f32 %v802, %v897
        %v1002 = vmul.f32 %v802, %v901
        %v1003 = vmul.f32 %v802, %v905
        %v1004 = vmul.f32 %v802, %v909
        %v1005 = vmul.f32 %v802, %v913
        %v1006 = vmul.f32 %v802, %v917
        %v1007 = vmul.f32 %v802, %v921
        %v1008 = vmul.f32 %v802, %v925
        %v1009 = vmul.f32 %v802, %v929
        %v1010 = vmul.f32 %v807, %v869
        %v1011 = vmul.f32 %v807, %v873
        %v1012 = vmul.f32 %v807, %v877
        %v1013 = vmul.f32 %v807, %v881
        %v1014 = vmul.f32 %v807, %v885
        %v1015 = vmul.f32 %v807, %v889
        %v1016 = vmul.f32 %v807, %v893
        %v1017 = vmul.f32 %v807, %v897
        %v1018 = vmul.f32 %v807, %v901
        %v1019 = vmul.f32 %v807, %v905
        %v1020 = vmul.f32 %v807, %v909
        %v1021 = vmul.f32 %v807, %v913
        %v1022 = vmul.f32 %v807, %v917
        %v1023 = vmul.f32 %v807, %v921
        %v1024 = vmul.f32 %v807, %v925
        %v1025 = vmul.f32 %v807, %v929
        %v1026 = vmul.f32 %v812, %v869
        %v1027 = vmul.f32 %v812, %v873
        %v1028 = vmul.f32 %v812, %v877
        %v1029 = vmul.f32 %v812, %v881
        %v1030 = vmul.f32 %v812, %v885
        %v1031 = vmul.f32 %v812, %v889
        %v1032 = vmul.f32 %v812, %v893
        %v1033 = vmul.f32 %v812, %v897
        %v1034 = vmul.f32 %v812, %v901
        %v1035 = vmul.f32 %v812, %v905
        %v1036 = vmul.f32 %v812, %v909
        %v1037 = vmul.f32 %v812, %v913
        %v1038 = vmul.f32 %v812, %v917
        %v1039 = vmul.f32 %v812, %v921
        %v1040 = vmul.f32 %v812, %v925
        %v1041 = vmul.f32 %v812, %v929
        %v1042 = vmul.f32 %v817, %v869
        %v1043 = vmul.f32 %v817, %v873
        %v1044 = vmul.f32 %v817, %v877
        %v1045 = vmul.f32 %v817, %v881
        %v1046 = vmul.f32 %v817, %v885
        %v1047 = vmul.f32 %v817, %v889
        %v1048 = vmul.f32 %v817, %v893
        %v1049 = vmul.f32 %v817, %v897
        %v1050 = vmul.f32 %v817, %v901
        %v1051 = vmul.f32 %v817, %v905
        %v1052 = vmul.f32 %v817, %v909
        %v1053 = vmul.f32 %v817, %v913
        %v1054 = vmul.f32 %v817, %v917
        %v1055 = vmul.f32 %v817, %v921
        %v1056 = vmul.f32 %v817, %v925
        %v1057 = vmul.f32 %v817, %v929
        %v1058 = vmul.f32 %v822, %v869
        %v1059 = vmul.f32 %v822, %v873
        %v1060 = vmul.f32 %v822, %v877
        %v1061 = vmul.f32 %v822, %v881
        %v1062 = vmul.f32 %v822, %v885
        %v1063 = vmul.f32 %v822, %v889
        %v1064 = vmul.f32 %v822, %v893
        %v1065 = vmul.f32 %v822, %v897
        %v1066 = vmul.f32 %v822, %v901
        %v1067 = vmul.f32 %v822, %v905
        %v1068 = vmul.f32 %v822, %v909
        %v1069 = vmul.f32 %v822, %v913
        %v1070 = vmul.f32 %v822, %v917
        %v1071 = vmul.f32 %v822, %v921
        %v1072 = vmul.f32 %v822, %v925
        %v1073 = vmul.f32 %v822, %v929
        %v1074 = vmul.f32 %v827, %v869
        %v1075 = vmul.f32 %v827, %v873
        %v1076 = vmul.f32 %v827, %v877
        %v1077 = vmul.f32 %v827, %v881
        %v1078 = vmul.f32 %v827, %v885
        %v1079 = vmul.f32 %v827, %v889
        %v1080 = vmul.f32 %v827, %v893
        %v1081 = vmul.f32 %v827, %v897
        %v1082 = vmul.f32 %v827, %v901
        %v1083 = vmul.f32 %v827, %v905
        %v1084 = vmul.f32 %v827, %v909
        %v1085 = vmul.f32 %v827, %v913
        %v1086 = vmul.f32 %v827, %v917
        %v1087 = vmul.f32 %v827, %v921
        %v1088 = vmul.f32 %v827, %v925
        %v1089 = vmul.f32 %v827, %v929
        %v1090 = vmul.f32 %v832, %v869
        %v1091 = vmul.f32 %v832, %v873
        %v1092 = vmul.f32 %v832, %v877
        %v1093 = vmul.f32 %v832, %v881
        %v1094 = vmul.f32 %v832, %v885
        %v1095 = vmul.f32 %v832, %v889
        %v1096 = vmul.f32 %v832, %v893
        %v1097 = vmul.f32 %v832, %v897
        %v1098 = vmul.f32 %v832, %v901
        %v1099 = vmul.f32 %v832, %v905
        %v1100 = vmul.f32 %v832, %v909
        %v1101 = vmul.f32 %v832, %v913
        %v1102 = vmul.f32 %v832, %v917
        %v1103 = vmul.f32 %v832, %v921
        %v1104 = vmul.f32 %v832, %v925
        %v1105 = vmul.f32 %v832, %v929
        %v1106 = vmul.f32 %v837, %v869
        %v1107 = vmul.f32 %v837, %v873
        %v1108 = vmul.f32 %v837, %v877
        %v1109 = vmul.f32 %v837, %v881
        %v1110 = vmul.f32 %v837, %v885
        %v1111 = vmul.f32 %v837, %v889
        %v1112 = vmul.f32 %v837, %v893
        %v1113 = vmul.f32 %v837, %v897
        %v1114 = vmul.f32 %v837, %v901
        %v1115 = vmul.f32 %v837, %v905
        %v1116 = vmul.f32 %v837, %v909
        %v1117 = vmul.f32 %v837, %v913
        %v1118 = vmul.f32 %v837, %v917
        %v1119 = vmul.f32 %v837, %v921
        %v1120 = vmul.f32 %v837, %v925
        %v1121 = vmul.f32 %v837, %v929
        %v1122 = vmul.f32 %v842, %v869
        %v1123 = vmul.f32 %v842, %v873
        %v1124 = vmul.f32 %v842, %v877
        %v1125 = vmul.f32 %v842, %v881
        %v1126 = vmul.f32 %v842, %v885
        %v1127 = vmul.f32 %v842, %v889
        %v1128 = vmul.f32 %v842, %v893
        %v1129 = vmul.f32 %v842, %v897
        %v1130 = vmul.f32 %v842, %v901
        %v1131 = vmul.f32 %v842, %v905
        %v1132 = vmul.f32 %v842, %v909
        %v1133 = vmul.f32 %v842, %v913
        %v1134 = vmul.f32 %v842, %v917
        %v1135 = vmul.f32 %v842, %v921
        %v1136 = vmul.f32 %v842, %v925
        %v1137 = vmul.f32 %v842, %v929
        %v1138 = vmul.f32 %v847, %v869
        %v1139 = vmul.f32 %v847, %v873
        %v1140 = vmul.f32 %v847, %v877
        %v1141 = vmul.f32 %v847, %v881
        %v1142 = vmul.f32 %v847, %v885
        %v1143 = vmul.f32 %v847, %v889
        %v1144 = vmul.f32 %v847, %v893
        %v1145 = vmul.f32 %v847, %v897
        %v1146 = vmul.f32 %v847, %v901
        %v1147 = vmul.f32 %v847, %v905
        %v1148 = vmul.f32 %v847, %v909
        %v1149 = vmul.f32 %v847, %v913
        %v1150 = vmul.f32 %v847, %v917
        %v1151 = vmul.f32 %v847, %v921
        %v1152 = vmul.f32 %v847, %v925
        %v1153 = vmul.f32 %v847, %v929
        %v1154 = vmul.f32 %v852, %v869
        %v1155 = vmul.f32 %v852, %v873
        %v1156 = vmul.f32 %v852, %v877
        %v1157 = vmul.f32 %v852, %v881
        %v1158 = vmul.f32 %v852, %v885
        %v1159 = vmul.f32 %v852, %v889
        %v1160 = vmul.f32 %v852, %v893
        %v1161 = vmul.f32 %v852, %v897
        %v1162 = vmul.f32 %v852, %v901
        %v1163 = vmul.f32 %v852, %v905
        %v1164 = vmul.f32 %v852, %v909
        %v1165 = vmul.f32 %v852, %v913
        %v1166 = vmul.f32 %v852, %v917
        %v1167 = vmul.f32 %v852, %v921
        %v1168 = vmul.f32 %v852, %v925
        %v1169 = vmul.f32 %v852, %v929
        %v1170 = vmul.f32 %v857, %v869
        %v1171 = vmul.f32 %v857, %v873
        %v1172 = vmul.f32 %v857, %v877
        %v1173 = vmul.f32 %v857, %v881
        %v1174 = vmul.f32 %v857, %v885
        %v1175 = vmul.f32 %v857, %v889
        %v1176 = vmul.f32 %v857, %v893
        %v1177 = vmul.f32 %v857, %v897
        %v1178 = vmul.f32 %v857, %v901
        %v1179 = vmul.f32 %v857, %v905
        %v1180 = vmul.f32 %v857, %v909
        %v1181 = vmul.f32 %v857, %v913
        %v1182 = vmul.f32 %v857, %v917
        %v1183 = vmul.f32 %v857, %v921
        %v1184 = vmul.f32 %v857, %v925
        %v1185 = vmul.f32 %v857, %v929
        %v1186 = vmul.f32 %v862, %v869
        %v1187 = vmul.f32 %v862, %v873
        %v1188 = vmul.f32 %v862, %v877
        %v1189 = vmul.f32 %v862, %v881
        %v1190 = vmul.f32 %v862, %v885
        %v1191 = vmul.f32 %v862, %v889
        %v1192 = vmul.f32 %v862, %v893
        %v1193 = vmul.f32 %v862, %v897
        %v1194 = vmul.f32 %v862, %v901
        %v1195 = vmul.f32 %v862, %v905
        %v1196 = vmul.f32 %v862, %v909
        %v1197 = vmul.f32 %v862, %v913
        %v1198 = vmul.f32 %v862, %v917
        %v1199 = vmul.f32 %v862, %v921
        %v1200 = vmul.f32 %v862, %v925
        %v1201 = vmul.f32 %v862, %v929
        %v1218 = vunpack.c.l.b16 %v752
        %v1219 = vunpack.c.l.b16 %v753
        %v1220 = vunpack.c.l.b16 %v754
        %v1221 = vunpack.c.l.b16 %v755
        %v1222 = vunpack.c.l.b16 %v756
        %v1223 = vunpack.c.l.b16 %v757
        %v1224 = vunpack.c.l.b16 %v758
        %v1225 = vunpack.c.l.b16 %v759
        %v1226 = vunpack.c.l.b16 %v760
        %v1227 = vunpack.c.l.b16 %v761
        %v1228 = vunpack.c.l.b16 %v762
        %v1229 = vunpack.c.l.b16 %v763
        %v1230 = vunpack.c.l.b16 %v764
        %v1231 = vunpack.c.l.b16 %v765
        %v1232 = vunpack.c.l.b16 %v766
        %v1233 = vunpack.c.l.b16 %v767
        %v1234 = vpack.c.b16 %v1219, %v1218
        %v1235 = vpack.c.b16 %v1221, %v1220
        %v1236 = vpack.c.b16 %v1223, %v1222
        %v1237 = vpack.c.b16 %v1225, %v1224
        %v1238 = vpack.c.b16 %v1227, %v1226
        %v1239 = vpack.c.b16 %v1229, %v1228
        %v1240 = vpack.c.b16 %v1231, %v1230
        %v1241 = vpack.c.b16 %v1233, %v1232
        %vm1242 = vcmask 261120
        %v1244 = vsel %vm1242, %v1234, 0
        %v1247 = vsel %vm1242, %v1235, 0
        %v1250 = vsel %vm1242, %v1236, 0
        %v1253 = vsel %vm1242, %v1237, 0
        %v1256 = vsel %vm1242, %v1238, 0
        %v1259 = vsel %vm1242, %v1239, 0
        %v1262 = vsel %vm1242, %v1240, 0
        %v1265 = vsel %vm1242, %v1241, 0
        %1267 = vmatprep.subr.bf16.mxu0 %v721
        %1268 = vmatpush1.bf16.msra.mxu0 %v720
        %1269 = vmatprep.subr.bf16.mxu0 %v737
        %1270 = vmatpush1.bf16.msra.mxu0 %v736
        %1271 = vmatprep.subr.bf16.mxu0 0
        %1272 = vmatpush1.bf16.msra.mxu0 0
        %1273 = vmatprep.subr.bf16.mxu0 0
        %1274 = vmatpush1.bf16.msra.mxu0 0
        %1275 = vmatprep.subr.bf16.mxu0 0
        %1276 = vmatpush1.bf16.msra.mxu0 0
        %1277 = vmatprep.subr.bf16.mxu0 0
        %1278 = vmatpush1.bf16.msra.mxu0 0
        %1279 = vmatprep.subr.bf16.mxu0 0
        %1280 = vmatpush1.bf16.msra.mxu0 0
        %1281 = vmatprep.subr.bf16.mxu0 0
        %1282 = vmatpush1.bf16.msra.mxu0 0
        %1283 = vmatprep.subr.bf16.mxu0 0
        %1284 = vmatpush1.bf16.msra.mxu0 0
        %1285 = vmatprep.subr.bf16.mxu0 0
        %1286 = vmatpush1.bf16.msra.mxu0 0
        %1287 = vmatprep.subr.bf16.mxu0 0
        %1288 = vmatpush1.bf16.msra.mxu0 0
        %1289 = vmatprep.subr.bf16.mxu0 0
        %1290 = vmatpush1.bf16.msra.mxu0 0
        %1291 = vmatprep.subr.bf16.mxu0 0
        %1292 = vmatpush1.bf16.msra.mxu0 0
        %1293 = vmatprep.subr.bf16.mxu0 0
        %1294 = vmatpush1.bf16.msra.mxu0 0
        %1295 = vmatprep.subr.bf16.mxu0 0
        %1296 = vmatpush1.bf16.msra.mxu0 0
        %1297 = vmatprep.subr.bf16.mxu0 0
        %1298 = vmatpush1.bf16.msra.mxu0 0
        %1299 = vmatprep.mubr.bf16.mxu0 0
        %1300 = vmatmul.mubr.bf16.gmra.mrb[0].mxu0 %v1244
        %v1301 = vpop.f32.mrb[0].mxu0
        %v1302 = vadd.f32 %v946, %v1301
        %v1303 = vpop.f32.mrb[0].mxu0
        %v1304 = vadd.f32 %v947, %v1303
        %v1305 = vpop.f32.mrb[0].mxu0
        %v1306 = vadd.f32 %v962, %v1305
        %v1307 = vpop.f32.mrb[0].mxu0
        %v1308 = vadd.f32 %v963, %v1307
        %1309 = vmatprep.mubr.bf16.mxu0 0
        %1310 = vmatmul.mubr.bf16.gmra.mrb[0].mxu0 %v1247
        %v1311 = vpop.f32.mrb[0].mxu0
        %v1312 = vadd.f32 %v978, %v1311
        %v1313 = vpop.f32.mrb[0].mxu0
        %v1314 = vadd.f32 %v979, %v1313
        %v1315 = vpop.f32.mrb[0].mxu0
        %v1316 = vadd.f32 %v994, %v1315
        %v1317 = vpop.f32.mrb[0].mxu0
        %v1318 = vadd.f32 %v995, %v1317
        %1319 = vmatprep.mubr.bf16.mxu0 0
        %1320 = vmatmul.mubr.bf16.gmra.mrb[0].mxu0 %v1250
        %v1321 = vpop.f32.mrb[0].mxu0
        %v1322 = vadd.f32 %v1010, %v1321
        %v1323 = vpop.f32.mrb[0].mxu0
        %v1324 = vadd.f32 %v1011, %v1323
        %v1325 = vpop.f32.mrb[0].mxu0
        %v1326 = vadd.f32 %v1026, %v1325
        %v1327 = vpop.f32.mrb[0].mxu0
        %v1328 = vadd.f32 %v1027, %v1327
        %1329 = vmatprep.mubr.bf16.mxu0 0
        %1330 = vmatmul.mubr.bf16.gmra.mrb[0].mxu0 %v1253
        %v1331 = vpop.f32.mrb[0].mxu0
        %v1332 = vadd.f32 %v1042, %v1331
        %v1333 = vpop.f32.mrb[0].mxu0
        %v1334 = vadd.f32 %v1043, %v1333
        %v1335 = vpop.f32.mrb[0].mxu0
        %v1336 = vadd.f32 %v1058, %v1335
        %v1337 = vpop.f32.mrb[0].mxu0
        %v1338 = vadd.f32 %v1059, %v1337
        %1339 = vmatprep.mubr.bf16.mxu0 0
        %1340 = vmatmul.mubr.bf16.gmra.mrb[0].mxu0 %v1256
        %v1341 = vpop.f32.mrb[0].mxu0
        %v1342 = vadd.f32 %v1074, %v1341
        %v1343 = vpop.f32.mrb[0].mxu0
        %v1344 = vadd.f32 %v1075, %v1343
        %v1345 = vpop.f32.mrb[0].mxu0
        %v1346 = vadd.f32 %v1090, %v1345
        %v1347 = vpop.f32.mrb[0].mxu0
        %v1348 = vadd.f32 %v1091, %v1347
        %1349 = vmatprep.mubr.bf16.mxu0 0
        %1350 = vmatmul.mubr.bf16.gmra.mrb[0].mxu0 %v1259
        %v1351 = vpop.f32.mrb[0].mxu0
        %v1352 = vadd.f32 %v1106, %v1351
        %v1353 = vpop.f32.mrb[0].mxu0
        %v1354 = vadd.f32 %v1107, %v1353
        %v1355 = vpop.f32.mrb[0].mxu0
        %v1356 = vadd.f32 %v1122, %v1355
        %v1357 = vpop.f32.mrb[0].mxu0
        %v1358 = vadd.f32 %v1123, %v1357
        %1359 = vmatprep.mubr.bf16.mxu0 0
        %1360 = vmatmul.mubr.bf16.gmra.mrb[0].mxu0 %v1262
        %v1361 = vpop.f32.mrb[0].mxu0
        %v1362 = vadd.f32 %v1138, %v1361
        %v1363 = vpop.f32.mrb[0].mxu0
        %v1364 = vadd.f32 %v1139, %v1363
        %v1365 = vpop.f32.mrb[0].mxu0
        %v1366 = vadd.f32 %v1154, %v1365
        %v1367 = vpop.f32.mrb[0].mxu0
        %v1368 = vadd.f32 %v1155, %v1367
        %1369 = vmatprep.mubr.bf16.mxu0 0
        %1370 = vmatmul.mubr.bf16.gmra.mrb[0].mxu0 %v1265
        %v1371 = vpop.f32.mrb[0].mxu0
        %v1372 = vadd.f32 %v1170, %v1371
        %v1373 = vpop.f32.mrb[0].mxu0
        %v1374 = vadd.f32 %v1171, %v1373
        %v1375 = vpop.f32.mrb[0].mxu0
        %v1376 = vadd.f32 %v1186, %v1375
        %v1377 = vpop.f32.mrb[0].mxu0
        %v1378 = vadd.f32 %v1187, %v1377
        %1379 = vdwg.mxu0
        %1380 = vmatprep.subr.bf16.mxu0 %v723
        %1381 = vmatpush1.bf16.msra.mxu0 %v722
        %1382 = vmatprep.subr.bf16.mxu0 %v739
        %1383 = vmatpush1.bf16.msra.mxu0 %v738
        %1384 = vmatprep.subr.bf16.mxu0 0
        %1385 = vmatpush1.bf16.msra.mxu0 0
        %1386 = vmatprep.subr.bf16.mxu0 0
        %1387 = vmatpush1.bf16.msra.mxu0 0
        %1388 = vmatprep.subr.bf16.mxu0 0
        %1389 = vmatpush1.bf16.msra.mxu0 0
        %1390 = vmatprep.subr.bf16.mxu0 0
        %1391 = vmatpush1.bf16.msra.mxu0 0
        %1392 = vmatprep.subr.bf16.mxu0 0
        %1393 = vmatpush1.bf16.msra.mxu0 0
        %1394 = vmatprep.subr.bf16.mxu0 0
        %1395 = vmatpush1.bf16.msra.mxu0 0
        %1396 = vmatprep.subr.bf16.mxu0 0
        %1397 = vmatpush1.bf16.msra.mxu0 0
        %1398 = vmatprep.subr.bf16.mxu0 0
        %1399 = vmatpush1.bf16.msra.mxu0 0
        %1400 = vmatprep.subr.bf16.mxu0 0
        %1401 = vmatpush1.bf16.msra.mxu0 0
        %1402 = vmatprep.subr.bf16.mxu0 0
        %1403 = vmatpush1.bf16.msra.mxu0 0
        %1404 = vmatprep.subr.bf16.mxu0 0
        %1405 = vmatpush1.bf16.msra.mxu0 0
        %1406 = vmatprep.subr.bf16.mxu0 0
        %1407 = vmatpush1.bf16.msra.mxu0 0
        %1408 = vmatprep.subr.bf16.mxu0 0
        %1409 = vmatpush1.bf16.msra.mxu0 0
        %1410 = vmatprep.subr.bf16.mxu0 0
        %1411 = vmatpush1.bf16.msra.mxu0 0
        %1412 = vmatprep.mubr.bf16.mxu0 0
        %1413 = vmatmul.mubr.bf16.gmra.mrb[0].mxu0 %v1244
        %v1414 = vpop.f32.mrb[0].mxu0
        %v1415 = vadd.f32 %v948, %v1414
        %v1416 = vpop.f32.mrb[0].mxu0
        %v1417 = vadd.f32 %v949, %v1416
        %v1418 = vpop.f32.mrb[0].mxu0
        %v1419 = vadd.f32 %v964, %v1418
        %v1420 = vpop.f32.mrb[0].mxu0
        %v1421 = vadd.f32 %v965, %v1420
        %1422 = vmatprep.mubr.bf16.mxu0 0
        %1423 = vmatmul.mubr.bf16.gmra.mrb[0].mxu0 %v1247
        %v1424 = vpop.f32.mrb[0].mxu0
        %v1425 = vadd.f32 %v980, %v1424
        %v1426 = vpop.f32.mrb[0].mxu0
        %v1427 = vadd.f32 %v981, %v1426
        %v1428 = vpop.f32.mrb[0].mxu0
        %v1429 = vadd.f32 %v996, %v1428
        %v1430 = vpop.f32.mrb[0].mxu0
        %v1431 = vadd.f32 %v997, %v1430
        %1432 = vmatprep.mubr.bf16.mxu0 0
        %1433 = vmatmul.mubr.bf16.gmra.mrb[0].mxu0 %v1250
        %v1434 = vpop.f32.mrb[0].mxu0
        %v1435 = vadd.f32 %v1012, %v1434
        %v1436 = vpop.f32.mrb[0].mxu0
        %v1437 = vadd.f32 %v1013, %v1436
        %v1438 = vpop.f32.mrb[0].mxu0
        %v1439 = vadd.f32 %v1028, %v1438
        %v1440 = vpop.f32.mrb[0].mxu0
        %v1441 = vadd.f32 %v1029, %v1440
        %1442 = vmatprep.mubr.bf16.mxu0 0
        %1443 = vmatmul.mubr.bf16.gmra.mrb[0].mxu0 %v1253
        %v1444 = vpop.f32.mrb[0].mxu0
        %v1445 = vadd.f32 %v1044, %v1444
        %v1446 = vpop.f32.mrb[0].mxu0
        %v1447 = vadd.f32 %v1045, %v1446
        %v1448 = vpop.f32.mrb[0].mxu0
        %v1449 = vadd.f32 %v1060, %v1448
        %v1450 = vpop.f32.mrb[0].mxu0
        %v1451 = vadd.f32 %v1061, %v1450
        %1452 = vmatprep.mubr.bf16.mxu0 0
        %1453 = vmatmul.mubr.bf16.gmra.mrb[0].mxu0 %v1256
        %v1454 = vpop.f32.mrb[0].mxu0
        %v1455 = vadd.f32 %v1076, %v1454
        %v1456 = vpop.f32.mrb[0].mxu0
        %v1457 = vadd.f32 %v1077, %v1456
        %v1458 = vpop.f32.mrb[0].mxu0
        %v1459 = vadd.f32 %v1092, %v1458
        %v1460 = vpop.f32.mrb[0].mxu0
        %v1461 = vadd.f32 %v1093, %v1460
        %1462 = vmatprep.mubr.bf16.mxu0 0
        %1463 = vmatmul.mubr.bf16.gmra.mrb[0].mxu0 %v1259
        %v1464 = vpop.f32.mrb[0].mxu0
        %v1465 = vadd.f32 %v1108, %v1464
        %v1466 = vpop.f32.mrb[0].mxu0
        %v1467 = vadd.f32 %v1109, %v1466
        %v1468 = vpop.f32.mrb[0].mxu0
        %v1469 = vadd.f32 %v1124, %v1468
        %v1470 = vpop.f32.mrb[0].mxu0
        %v1471 = vadd.f32 %v1125, %v1470
        %1472 = vmatprep.mubr.bf16.mxu0 0
        %1473 = vmatmul.mubr.bf16.gmra.mrb[0].mxu0 %v1262
        %v1474 = vpop.f32.mrb[0].mxu0
        %v1475 = vadd.f32 %v1140, %v1474
        %v1476 = vpop.f32.mrb[0].mxu0
        %v1477 = vadd.f32 %v1141, %v1476
        %v1478 = vpop.f32.mrb[0].mxu0
        %v1479 = vadd.f32 %v1156, %v1478
        %v1480 = vpop.f32.mrb[0].mxu0
        %v1481 = vadd.f32 %v1157, %v1480
        %1482 = vmatprep.mubr.bf16.mxu0 0
        %1483 = vmatmul.mubr.bf16.gmra.mrb[0].mxu0 %v1265
        %v1484 = vpop.f32.mrb[0].mxu0
        %v1485 = vadd.f32 %v1172, %v1484
        %v1486 = vpop.f32.mrb[0].mxu0
        %v1487 = vadd.f32 %v1173, %v1486
        %v1488 = vpop.f32.mrb[0].mxu0
        %v1489 = vadd.f32 %v1188, %v1488
        %v1490 = vpop.f32.mrb[0].mxu0
        %v1491 = vadd.f32 %v1189, %v1490
        %1492 = vdwg.mxu0
        %1493 = vmatprep.subr.bf16.mxu0 %v725
        %1494 = vmatpush1.bf16.msra.mxu0 %v724
        %1495 = vmatprep.subr.bf16.mxu0 %v741
        %1496 = vmatpush1.bf16.msra.mxu0 %v740
        %1497 = vmatprep.subr.bf16.mxu0 0
        %1498 = vmatpush1.bf16.msra.mxu0 0
        %1499 = vmatprep.subr.bf16.mxu0 0
        %1500 = vmatpush1.bf16.msra.mxu0 0
        %1501 = vmatprep.subr.bf16.mxu0 0
        %1502 = vmatpush1.bf16.msra.mxu0 0
        %1503 = vmatprep.subr.bf16.mxu0 0
        %1504 = vmatpush1.bf16.msra.mxu0 0
        %1505 = vmatprep.subr.bf16.mxu0 0
        %1506 = vmatpush1.bf16.msra.mxu0 0
        %1507 = vmatprep.subr.bf16.mxu0 0
        %1508 = vmatpush1.bf16.msra.mxu0 0
        %1509 = vmatprep.subr.bf16.mxu0 0
        %1510 = vmatpush1.bf16.msra.mxu0 0
        %1511 = vmatprep.subr.bf16.mxu0 0
        %1512 = vmatpush1.bf16.msra.mxu0 0
        %1513 = vmatprep.subr.bf16.mxu0 0
        %1514 = vmatpush1.bf16.msra.mxu0 0
        %1515 = vmatprep.subr.bf16.mxu0 0
        %1516 = vmatpush1.bf16.msra.mxu0 0
        %1517 = vmatprep.subr.bf16.mxu0 0
        %1518 = vmatpush1.bf16.msra.mxu0 0
        %1519 = vmatprep.subr.bf16.mxu0 0
        %1520 = vmatpush1.bf16.msra.mxu0 0
        %1521 = vmatprep.subr.bf16.mxu0 0
        %1522 = vmatpush1.bf16.msra.mxu0 0
        %1523 = vmatprep.subr.bf16.mxu0 0
        %1524 = vmatpush1.bf16.msra.mxu0 0
        %1525 = vmatprep.mubr.bf16.mxu0 0
        %1526 = vmatmul.mubr.bf16.gmra.mrb[0].mxu0 %v1244
        %v1527 = vpop.f32.mrb[0].mxu0
        %v1528 = vadd.f32 %v950, %v1527
        %v1529 = vpop.f32.mrb[0].mxu0
        %v1530 = vadd.f32 %v951, %v1529
        %v1531 = vpop.f32.mrb[0].mxu0
        %v1532 = vadd.f32 %v966, %v1531
        %v1533 = vpop.f32.mrb[0].mxu0
        %v1534 = vadd.f32 %v967, %v1533
        %1535 = vmatprep.mubr.bf16.mxu0 0
        %1536 = vmatmul.mubr.bf16.gmra.mrb[0].mxu0 %v1247
        %v1537 = vpop.f32.mrb[0].mxu0
        %v1538 = vadd.f32 %v982, %v1537
        %v1539 = vpop.f32.mrb[0].mxu0
        %v1540 = vadd.f32 %v983, %v1539
        %v1541 = vpop.f32.mrb[0].mxu0
        %v1542 = vadd.f32 %v998, %v1541
        %v1543 = vpop.f32.mrb[0].mxu0
        %v1544 = vadd.f32 %v999, %v1543
        %1545 = vmatprep.mubr.bf16.mxu0 0
        %1546 = vmatmul.mubr.bf16.gmra.mrb[0].mxu0 %v1250
        %v1547 = vpop.f32.mrb[0].mxu0
        %v1548 = vadd.f32 %v1014, %v1547
        %v1549 = vpop.f32.mrb[0].mxu0
        %v1550 = vadd.f32 %v1015, %v1549
        %v1551 = vpop.f32.mrb[0].mxu0
        %v1552 = vadd.f32 %v1030, %v1551
        %v1553 = vpop.f32.mrb[0].mxu0
        %v1554 = vadd.f32 %v1031, %v1553
        %1555 = vmatprep.mubr.bf16.mxu0 0
        %1556 = vmatmul.mubr.bf16.gmra.mrb[0].mxu0 %v1253
        %v1557 = vpop.f32.mrb[0].mxu0
        %v1558 = vadd.f32 %v1046, %v1557
        %v1559 = vpop.f32.mrb[0].mxu0
        %v1560 = vadd.f32 %v1047, %v1559
        %v1561 = vpop.f32.mrb[0].mxu0
        %v1562 = vadd.f32 %v1062, %v1561
        %v1563 = vpop.f32.mrb[0].mxu0
        %v1564 = vadd.f32 %v1063, %v1563
        %1565 = vmatprep.mubr.bf16.mxu0 0
        %1566 = vmatmul.mubr.bf16.gmra.mrb[0].mxu0 %v1256
        %v1567 = vpop.f32.mrb[0].mxu0
        %v1568 = vadd.f32 %v1078, %v1567
        %v1569 = vpop.f32.mrb[0].mxu0
        %v1570 = vadd.f32 %v1079, %v1569
        %v1571 = vpop.f32.mrb[0].mxu0
        %v1572 = vadd.f32 %v1094, %v1571
        %v1573 = vpop.f32.mrb[0].mxu0
        %v1574 = vadd.f32 %v1095, %v1573
        %1575 = vmatprep.mubr.bf16.mxu0 0
        %1576 = vmatmul.mubr.bf16.gmra.mrb[0].mxu0 %v1259
        %v1577 = vpop.f32.mrb[0].mxu0
        %v1578 = vadd.f32 %v1110, %v1577
        %v1579 = vpop.f32.mrb[0].mxu0
        %v1580 = vadd.f32 %v1111, %v1579
        %v1581 = vpop.f32.mrb[0].mxu0
        %v1582 = vadd.f32 %v1126, %v1581
        %v1583 = vpop.f32.mrb[0].mxu0
        %v1584 = vadd.f32 %v1127, %v1583
        %1585 = vmatprep.mubr.bf16.mxu0 0
        %1586 = vmatmul.mubr.bf16.gmra.mrb[0].mxu0 %v1262
        %v1587 = vpop.f32.mrb[0].mxu0
        %v1588 = vadd.f32 %v1142, %v1587
        %v1589 = vpop.f32.mrb[0].mxu0
        %v1590 = vadd.f32 %v1143, %v1589
        %v1591 = vpop.f32.mrb[0].mxu0
        %v1592 = vadd.f32 %v1158, %v1591
        %v1593 = vpop.f32.mrb[0].mxu0
        %v1594 = vadd.f32 %v1159, %v1593
        %1595 = vmatprep.mubr.bf16.mxu0 0
        %1596 = vmatmul.mubr.bf16.gmra.mrb[0].mxu0 %v1265
        %v1597 = vpop.f32.mrb[0].mxu0
        %v1598 = vadd.f32 %v1174, %v1597
        %v1599 = vpop.f32.mrb[0].mxu0
        %v1600 = vadd.f32 %v1175, %v1599
        %v1601 = vpop.f32.mrb[0].mxu0
        %v1602 = vadd.f32 %v1190, %v1601
        %v1603 = vpop.f32.mrb[0].mxu0
        %v1604 = vadd.f32 %v1191, %v1603
        %1605 = vdwg.mxu0
        %1606 = vmatprep.subr.bf16.mxu0 %v727
        %1607 = vmatpush1.bf16.msra.mxu0 %v726
        %1608 = vmatprep.subr.bf16.mxu0 %v743
        %1609 = vmatpush1.bf16.msra.mxu0 %v742
        %1610 = vmatprep.subr.bf16.mxu0 0
        %1611 = vmatpush1.bf16.msra.mxu0 0
        %1612 = vmatprep.subr.bf16.mxu0 0
        %1613 = vmatpush1.bf16.msra.mxu0 0
        %1614 = vmatprep.subr.bf16.mxu0 0
        %1615 = vmatpush1.bf16.msra.mxu0 0
        %1616 = vmatprep.subr.bf16.mxu0 0
        %1617 = vmatpush1.bf16.msra.mxu0 0
        %1618 = vmatprep.subr.bf16.mxu0 0
        %1619 = vmatpush1.bf16.msra.mxu0 0
        %1620 = vmatprep.subr.bf16.mxu0 0
        %1621 = vmatpush1.bf16.msra.mxu0 0
        %1622 = vmatprep.subr.bf16.mxu0 0
        %1623 = vmatpush1.bf16.msra.mxu0 0
        %1624 = vmatprep.subr.bf16.mxu0 0
        %1625 = vmatpush1.bf16.msra.mxu0 0
        %1626 = vmatprep.subr.bf16.mxu0 0
        %1627 = vmatpush1.bf16.msra.mxu0 0
        %1628 = vmatprep.subr.bf16.mxu0 0
        %1629 = vmatpush1.bf16.msra.mxu0 0
        %1630 = vmatprep.subr.bf16.mxu0 0
        %1631 = vmatpush1.bf16.msra.mxu0 0
        %1632 = vmatprep.subr.bf16.mxu0 0
        %1633 = vmatpush1.bf16.msra.mxu0 0
        %1634 = vmatprep.subr.bf16.mxu0 0
        %1635 = vmatpush1.bf16.msra.mxu0 0
        %1636 = vmatprep.subr.bf16.mxu0 0
        %1637 = vmatpush1.bf16.msra.mxu0 0
        %1638 = vmatprep.mubr.bf16.mxu0 0
        %1639 = vmatmul.mubr.bf16.gmra.mrb[0].mxu0 %v1244
        %v1640 = vpop.f32.mrb[0].mxu0
        %v1641 = vadd.f32 %v952, %v1640
        %v1642 = vpop.f32.mrb[0].mxu0
        %v1643 = vadd.f32 %v953, %v1642
        %v1644 = vpop.f32.mrb[0].mxu0
        %v1645 = vadd.f32 %v968, %v1644
        %v1646 = vpop.f32.mrb[0].mxu0
        %v1647 = vadd.f32 %v969, %v1646
        %1648 = vmatprep.mubr.bf16.mxu0 0
        %1649 = vmatmul.mubr.bf16.gmra.mrb[0].mxu0 %v1247
        %v1650 = vpop.f32.mrb[0].mxu0
        %v1651 = vadd.f32 %v984, %v1650
        %v1652 = vpop.f32.mrb[0].mxu0
        %v1653 = vadd.f32 %v985, %v1652
        %v1654 = vpop.f32.mrb[0].mxu0
        %v1655 = vadd.f32 %v1000, %v1654
        %v1656 = vpop.f32.mrb[0].mxu0
        %v1657 = vadd.f32 %v1001, %v1656
        %1658 = vmatprep.mubr.bf16.mxu0 0
        %1659 = vmatmul.mubr.bf16.gmra.mrb[0].mxu0 %v1250
        %v1660 = vpop.f32.mrb[0].mxu0
        %v1661 = vadd.f32 %v1016, %v1660
        %v1662 = vpop.f32.mrb[0].mxu0
        %v1663 = vadd.f32 %v1017, %v1662
        %v1664 = vpop.f32.mrb[0].mxu0
        %v1665 = vadd.f32 %v1032, %v1664
        %v1666 = vpop.f32.mrb[0].mxu0
        %v1667 = vadd.f32 %v1033, %v1666
        %1668 = vmatprep.mubr.bf16.mxu0 0
        %1669 = vmatmul.mubr.bf16.gmra.mrb[0].mxu0 %v1253
        %v1670 = vpop.f32.mrb[0].mxu0
        %v1671 = vadd.f32 %v1048, %v1670
        %v1672 = vpop.f32.mrb[0].mxu0
        %v1673 = vadd.f32 %v1049, %v1672
        %v1674 = vpop.f32.mrb[0].mxu0
        %v1675 = vadd.f32 %v1064, %v1674
        %v1676 = vpop.f32.mrb[0].mxu0
        %v1677 = vadd.f32 %v1065, %v1676
        %1678 = vmatprep.mubr.bf16.mxu0 0
        %1679 = vmatmul.mubr.bf16.gmra.mrb[0].mxu0 %v1256
        %v1680 = vpop.f32.mrb[0].mxu0
        %v1681 = vadd.f32 %v1080, %v1680
        %v1682 = vpop.f32.mrb[0].mxu0
        %v1683 = vadd.f32 %v1081, %v1682
        %v1684 = vpop.f32.mrb[0].mxu0
        %v1685 = vadd.f32 %v1096, %v1684
        %v1686 = vpop.f32.mrb[0].mxu0
        %v1687 = vadd.f32 %v1097, %v1686
        %1688 = vmatprep.mubr.bf16.mxu0 0
        %1689 = vmatmul.mubr.bf16.gmra.mrb[0].mxu0 %v1259
        %v1690 = vpop.f32.mrb[0].mxu0
        %v1691 = vadd.f32 %v1112, %v1690
        %v1692 = vpop.f32.mrb[0].mxu0
        %v1693 = vadd.f32 %v1113, %v1692
        %v1694 = vpop.f32.mrb[0].mxu0
        %v1695 = vadd.f32 %v1128, %v1694
        %v1696 = vpop.f32.mrb[0].mxu0
        %v1697 = vadd.f32 %v1129, %v1696
        %1698 = vmatprep.mubr.bf16.mxu0 0
        %1699 = vmatmul.mubr.bf16.gmra.mrb[0].mxu0 %v1262
        %v1700 = vpop.f32.mrb[0].mxu0
        %v1701 = vadd.f32 %v1144, %v1700
        %v1702 = vpop.f32.mrb[0].mxu0
        %v1703 = vadd.f32 %v1145, %v1702
        %v1704 = vpop.f32.mrb[0].mxu0
        %v1705 = vadd.f32 %v1160, %v1704
        %v1706 = vpop.f32.mrb[0].mxu0
        %v1707 = vadd.f32 %v1161, %v1706
        %1708 = vmatprep.mubr.bf16.mxu0 0
        %1709 = vmatmul.mubr.bf16.gmra.mrb[0].mxu0 %v1265
        %v1710 = vpop.f32.mrb[0].mxu0
        %v1711 = vadd.f32 %v1176, %v1710
        %v1712 = vpop.f32.mrb[0].mxu0
        %v1713 = vadd.f32 %v1177, %v1712
        %v1714 = vpop.f32.mrb[0].mxu0
        %v1715 = vadd.f32 %v1192, %v1714
        %v1716 = vpop.f32.mrb[0].mxu0
        %v1717 = vadd.f32 %v1193, %v1716
        %1718 = vdwg.mxu0
        %1719 = vmatprep.subr.bf16.mxu0 %v729
        %1720 = vmatpush1.bf16.msra.mxu0 %v728
        %1721 = vmatprep.subr.bf16.mxu0 %v745
        %1722 = vmatpush1.bf16.msra.mxu0 %v744
        %1723 = vmatprep.subr.bf16.mxu0 0
        %1724 = vmatpush1.bf16.msra.mxu0 0
        %1725 = vmatprep.subr.bf16.mxu0 0
        %1726 = vmatpush1.bf16.msra.mxu0 0
        %1727 = vmatprep.subr.bf16.mxu0 0
        %1728 = vmatpush1.bf16.msra.mxu0 0
        %1729 = vmatprep.subr.bf16.mxu0 0
        %1730 = vmatpush1.bf16.msra.mxu0 0
        %1731 = vmatprep.subr.bf16.mxu0 0
        %1732 = vmatpush1.bf16.msra.mxu0 0
        %1733 = vmatprep.subr.bf16.mxu0 0
        %1734 = vmatpush1.bf16.msra.mxu0 0
        %1735 = vmatprep.subr.bf16.mxu0 0
        %1736 = vmatpush1.bf16.msra.mxu0 0
        %1737 = vmatprep.subr.bf16.mxu0 0
        %1738 = vmatpush1.bf16.msra.mxu0 0
        %1739 = vmatprep.subr.bf16.mxu0 0
        %1740 = vmatpush1.bf16.msra.mxu0 0
        %1741 = vmatprep.subr.bf16.mxu0 0
        %1742 = vmatpush1.bf16.msra.mxu0 0
        %1743 = vmatprep.subr.bf16.mxu0 0
        %1744 = vmatpush1.bf16.msra.mxu0 0
        %1745 = vmatprep.subr.bf16.mxu0 0
        %1746 = vmatpush1.bf16.msra.mxu0 0
        %1747 = vmatprep.subr.bf16.mxu0 0
        %1748 = vmatpush1.bf16.msra.mxu0 0
        %1749 = vmatprep.subr.bf16.mxu0 0
        %1750 = vmatpush1.bf16.msra.mxu0 0
        %1751 = vmatprep.mubr.bf16.mxu0 0
        %1752 = vmatmul.mubr.bf16.gmra.mrb[0].mxu0 %v1244
        %v1753 = vpop.f32.mrb[0].mxu0
        %v1754 = vadd.f32 %v954, %v1753
        %v1755 = vpop.f32.mrb[0].mxu0
        %v1756 = vadd.f32 %v955, %v1755
        %v1757 = vpop.f32.mrb[0].mxu0
        %v1758 = vadd.f32 %v970, %v1757
        %v1759 = vpop.f32.mrb[0].mxu0
        %v1760 = vadd.f32 %v971, %v1759
        %1761 = vmatprep.mubr.bf16.mxu0 0
        %1762 = vmatmul.mubr.bf16.gmra.mrb[0].mxu0 %v1247
        %v1763 = vpop.f32.mrb[0].mxu0
        %v1764 = vadd.f32 %v986, %v1763
        %v1765 = vpop.f32.mrb[0].mxu0
        %v1766 = vadd.f32 %v987, %v1765
        %v1767 = vpop.f32.mrb[0].mxu0
        %v1768 = vadd.f32 %v1002, %v1767
        %v1769 = vpop.f32.mrb[0].mxu0
        %v1770 = vadd.f32 %v1003, %v1769
        %1771 = vmatprep.mubr.bf16.mxu0 0
        %1772 = vmatmul.mubr.bf16.gmra.mrb[0].mxu0 %v1250
        %v1773 = vpop.f32.mrb[0].mxu0
        %v1774 = vadd.f32 %v1018, %v1773
        %v1775 = vpop.f32.mrb[0].mxu0
        %v1776 = vadd.f32 %v1019, %v1775
        %v1777 = vpop.f32.mrb[0].mxu0
        %v1778 = vadd.f32 %v1034, %v1777
        %v1779 = vpop.f32.mrb[0].mxu0
        %v1780 = vadd.f32 %v1035, %v1779
        %1781 = vmatprep.mubr.bf16.mxu0 0
        %1782 = vmatmul.mubr.bf16.gmra.mrb[0].mxu0 %v1253
        %v1783 = vpop.f32.mrb[0].mxu0
        %v1784 = vadd.f32 %v1050, %v1783
        %v1785 = vpop.f32.mrb[0].mxu0
        %v1786 = vadd.f32 %v1051, %v1785
        %v1787 = vpop.f32.mrb[0].mxu0
        %v1788 = vadd.f32 %v1066, %v1787
        %v1789 = vpop.f32.mrb[0].mxu0
        %v1790 = vadd.f32 %v1067, %v1789
        %1791 = vmatprep.mubr.bf16.mxu0 0
        %1792 = vmatmul.mubr.bf16.gmra.mrb[0].mxu0 %v1256
        %v1793 = vpop.f32.mrb[0].mxu0
        %v1794 = vadd.f32 %v1082, %v1793
        %v1795 = vpop.f32.mrb[0].mxu0
        %v1796 = vadd.f32 %v1083, %v1795
        %v1797 = vpop.f32.mrb[0].mxu0
        %v1798 = vadd.f32 %v1098, %v1797
        %v1799 = vpop.f32.mrb[0].mxu0
        %v1800 = vadd.f32 %v1099, %v1799
        %1801 = vmatprep.mubr.bf16.mxu0 0
        %1802 = vmatmul.mubr.bf16.gmra.mrb[0].mxu0 %v1259
        %v1803 = vpop.f32.mrb[0].mxu0
        %v1804 = vadd.f32 %v1114, %v1803
        %v1805 = vpop.f32.mrb[0].mxu0
        %v1806 = vadd.f32 %v1115, %v1805
        %v1807 = vpop.f32.mrb[0].mxu0
        %v1808 = vadd.f32 %v1130, %v1807
        %v1809 = vpop.f32.mrb[0].mxu0
        %v1810 = vadd.f32 %v1131, %v1809
        %1811 = vmatprep.mubr.bf16.mxu0 0
        %1812 = vmatmul.mubr.bf16.gmra.mrb[0].mxu0 %v1262
        %v1813 = vpop.f32.mrb[0].mxu0
        %v1814 = vadd.f32 %v1146, %v1813
        %v1815 = vpop.f32.mrb[0].mxu0
        %v1816 = vadd.f32 %v1147, %v1815
        %v1817 = vpop.f32.mrb[0].mxu0
        %v1818 = vadd.f32 %v1162, %v1817
        %v1819 = vpop.f32.mrb[0].mxu0
        %v1820 = vadd.f32 %v1163, %v1819
        %1821 = vmatprep.mubr.bf16.mxu0 0
        %1822 = vmatmul.mubr.bf16.gmra.mrb[0].mxu0 %v1265
        %v1823 = vpop.f32.mrb[0].mxu0
        %v1824 = vadd.f32 %v1178, %v1823
        %v1825 = vpop.f32.mrb[0].mxu0
        %v1826 = vadd.f32 %v1179, %v1825
        %v1827 = vpop.f32.mrb[0].mxu0
        %v1828 = vadd.f32 %v1194, %v1827
        %v1829 = vpop.f32.mrb[0].mxu0
        %v1830 = vadd.f32 %v1195, %v1829
        %1831 = vdwg.mxu0
        %1832 = vmatprep.subr.bf16.mxu0 %v731
        %1833 = vmatpush1.bf16.msra.mxu0 %v730
        %1834 = vmatprep.subr.bf16.mxu0 %v747
        %1835 = vmatpush1.bf16.msra.mxu0 %v746
        %1836 = vmatprep.subr.bf16.mxu0 0
        %1837 = vmatpush1.bf16.msra.mxu0 0
        %1838 = vmatprep.subr.bf16.mxu0 0
        %1839 = vmatpush1.bf16.msra.mxu0 0
        %1840 = vmatprep.subr.bf16.mxu0 0
        %1841 = vmatpush1.bf16.msra.mxu0 0
        %1842 = vmatprep.subr.bf16.mxu0 0
        %1843 = vmatpush1.bf16.msra.mxu0 0
        %1844 = vmatprep.subr.bf16.mxu0 0
        %1845 = vmatpush1.bf16.msra.mxu0 0
        %1846 = vmatprep.subr.bf16.mxu0 0
        %1847 = vmatpush1.bf16.msra.mxu0 0
        %1848 = vmatprep.subr.bf16.mxu0 0
        %1849 = vmatpush1.bf16.msra.mxu0 0
        %1850 = vmatprep.subr.bf16.mxu0 0
        %1851 = vmatpush1.bf16.msra.mxu0 0
        %1852 = vmatprep.subr.bf16.mxu0 0
        %1853 = vmatpush1.bf16.msra.mxu0 0
        %1854 = vmatprep.subr.bf16.mxu0 0
        %1855 = vmatpush1.bf16.msra.mxu0 0
        %1856 = vmatprep.subr.bf16.mxu0 0
        %1857 = vmatpush1.bf16.msra.mxu0 0
        %1858 = vmatprep.subr.bf16.mxu0 0
        %1859 = vmatpush1.bf16.msra.mxu0 0
        %1860 = vmatprep.subr.bf16.mxu0 0
        %1861 = vmatpush1.bf16.msra.mxu0 0
        %1862 = vmatprep.subr.bf16.mxu0 0
        %1863 = vmatpush1.bf16.msra.mxu0 0
        %1864 = vmatprep.mubr.bf16.mxu0 0
        %1865 = vmatmul.mubr.bf16.gmra.mrb[0].mxu0 %v1244
        %v1866 = vpop.f32.mrb[0].mxu0
        %v1867 = vadd.f32 %v956, %v1866
        %v1868 = vpop.f32.mrb[0].mxu0
        %v1869 = vadd.f32 %v957, %v1868
        %v1870 = vpop.f32.mrb[0].mxu0
        %v1871 = vadd.f32 %v972, %v1870
        %v1872 = vpop.f32.mrb[0].mxu0
        %v1873 = vadd.f32 %v973, %v1872
        %1874 = vmatprep.mubr.bf16.mxu0 0
        %1875 = vmatmul.mubr.bf16.gmra.mrb[0].mxu0 %v1247
        %v1876 = vpop.f32.mrb[0].mxu0
        %v1877 = vadd.f32 %v988, %v1876
        %v1878 = vpop.f32.mrb[0].mxu0
        %v1879 = vadd.f32 %v989, %v1878
        %v1880 = vpop.f32.mrb[0].mxu0
        %v1881 = vadd.f32 %v1004, %v1880
        %v1882 = vpop.f32.mrb[0].mxu0
        %v1883 = vadd.f32 %v1005, %v1882
        %1884 = vmatprep.mubr.bf16.mxu0 0
        %1885 = vmatmul.mubr.bf16.gmra.mrb[0].mxu0 %v1250
        %v1886 = vpop.f32.mrb[0].mxu0
        %v1887 = vadd.f32 %v1020, %v1886
        %v1888 = vpop.f32.mrb[0].mxu0
        %v1889 = vadd.f32 %v1021, %v1888
        %v1890 = vpop.f32.mrb[0].mxu0
        %v1891 = vadd.f32 %v1036, %v1890
        %v1892 = vpop.f32.mrb[0].mxu0
        %v1893 = vadd.f32 %v1037, %v1892
        %1894 = vmatprep.mubr.bf16.mxu0 0
        %1895 = vmatmul.mubr.bf16.gmra.mrb[0].mxu0 %v1253
        %v1896 = vpop.f32.mrb[0].mxu0
        %v1897 = vadd.f32 %v1052, %v1896
        %v1898 = vpop.f32.mrb[0].mxu0
        %v1899 = vadd.f32 %v1053, %v1898
        %v1900 = vpop.f32.mrb[0].mxu0
        %v1901 = vadd.f32 %v1068, %v1900
        %v1902 = vpop.f32.mrb[0].mxu0
        %v1903 = vadd.f32 %v1069, %v1902
        %1904 = vmatprep.mubr.bf16.mxu0 0
        %1905 = vmatmul.mubr.bf16.gmra.mrb[0].mxu0 %v1256
        %v1906 = vpop.f32.mrb[0].mxu0
        %v1907 = vadd.f32 %v1084, %v1906
        %v1908 = vpop.f32.mrb[0].mxu0
        %v1909 = vadd.f32 %v1085, %v1908
        %v1910 = vpop.f32.mrb[0].mxu0
        %v1911 = vadd.f32 %v1100, %v1910
        %v1912 = vpop.f32.mrb[0].mxu0
        %v1913 = vadd.f32 %v1101, %v1912
        %1914 = vmatprep.mubr.bf16.mxu0 0
        %1915 = vmatmul.mubr.bf16.gmra.mrb[0].mxu0 %v1259
        %v1916 = vpop.f32.mrb[0].mxu0
        %v1917 = vadd.f32 %v1116, %v1916
        %v1918 = vpop.f32.mrb[0].mxu0
        %v1919 = vadd.f32 %v1117, %v1918
        %v1920 = vpop.f32.mrb[0].mxu0
        %v1921 = vadd.f32 %v1132, %v1920
        %v1922 = vpop.f32.mrb[0].mxu0
        %v1923 = vadd.f32 %v1133, %v1922
        %1924 = vmatprep.mubr.bf16.mxu0 0
        %1925 = vmatmul.mubr.bf16.gmra.mrb[0].mxu0 %v1262
        %v1926 = vpop.f32.mrb[0].mxu0
        %v1927 = vadd.f32 %v1148, %v1926
        %v1928 = vpop.f32.mrb[0].mxu0
        %v1929 = vadd.f32 %v1149, %v1928
        %v1930 = vpop.f32.mrb[0].mxu0
        %v1931 = vadd.f32 %v1164, %v1930
        %v1932 = vpop.f32.mrb[0].mxu0
        %v1933 = vadd.f32 %v1165, %v1932
        %1934 = vmatprep.mubr.bf16.mxu0 0
        %1935 = vmatmul.mubr.bf16.gmra.mrb[0].mxu0 %v1265
        %v1936 = vpop.f32.mrb[0].mxu0
        %v1937 = vadd.f32 %v1180, %v1936
        %v1938 = vpop.f32.mrb[0].mxu0
        %v1939 = vadd.f32 %v1181, %v1938
        %v1940 = vpop.f32.mrb[0].mxu0
        %v1941 = vadd.f32 %v1196, %v1940
        %v1942 = vpop.f32.mrb[0].mxu0
        %v1943 = vadd.f32 %v1197, %v1942
        %1944 = vdwg.mxu0
        %1945 = vmatprep.subr.bf16.mxu0 %v733
        %1946 = vmatpush1.bf16.msra.mxu0 %v732
        %1947 = vmatprep.subr.bf16.mxu0 %v749
        %1948 = vmatpush1.bf16.msra.mxu0 %v748
        %1949 = vmatprep.subr.bf16.mxu0 0
        %1950 = vmatpush1.bf16.msra.mxu0 0
        %1951 = vmatprep.subr.bf16.mxu0 0
        %1952 = vmatpush1.bf16.msra.mxu0 0
        %1953 = vmatprep.subr.bf16.mxu0 0
        %1954 = vmatpush1.bf16.msra.mxu0 0
        %1955 = vmatprep.subr.bf16.mxu0 0
        %1956 = vmatpush1.bf16.msra.mxu0 0
        %1957 = vmatprep.subr.bf16.mxu0 0
        %1958 = vmatpush1.bf16.msra.mxu0 0
        %1959 = vmatprep.subr.bf16.mxu0 0
        %1960 = vmatpush1.bf16.msra.mxu0 0
        %1961 = vmatprep.subr.bf16.mxu0 0
        %1962 = vmatpush1.bf16.msra.mxu0 0
        %1963 = vmatprep.subr.bf16.mxu0 0
        %1964 = vmatpush1.bf16.msra.mxu0 0
        %1965 = vmatprep.subr.bf16.mxu0 0
        %1966 = vmatpush1.bf16.msra.mxu0 0
        %1967 = vmatprep.subr.bf16.mxu0 0
        %1968 = vmatpush1.bf16.msra.mxu0 0
        %1969 = vmatprep.subr.bf16.mxu0 0
        %1970 = vmatpush1.bf16.msra.mxu0 0
        %1971 = vmatprep.subr.bf16.mxu0 0
        %1972 = vmatpush1.bf16.msra.mxu0 0
        %1973 = vmatprep.subr.bf16.mxu0 0
        %1974 = vmatpush1.bf16.msra.mxu0 0
        %1975 = vmatprep.subr.bf16.mxu0 0
        %1976 = vmatpush1.bf16.msra.mxu0 0
        %1977 = vmatprep.mubr.bf16.mxu0 0
        %1978 = vmatmul.mubr.bf16.gmra.mrb[0].mxu0 %v1244
        %v1979 = vpop.f32.mrb[0].mxu0
        %v1980 = vadd.f32 %v958, %v1979
        %v1981 = vpop.f32.mrb[0].mxu0
        %v1982 = vadd.f32 %v959, %v1981
        %v1983 = vpop.f32.mrb[0].mxu0
        %v1984 = vadd.f32 %v974, %v1983
        %v1985 = vpop.f32.mrb[0].mxu0
        %v1986 = vadd.f32 %v975, %v1985
        %1987 = vmatprep.mubr.bf16.mxu0 0
        %1988 = vmatmul.mubr.bf16.gmra.mrb[0].mxu0 %v1247
        %v1989 = vpop.f32.mrb[0].mxu0
        %v1990 = vadd.f32 %v990, %v1989
        %v1991 = vpop.f32.mrb[0].mxu0
        %v1992 = vadd.f32 %v991, %v1991
        %v1993 = vpop.f32.mrb[0].mxu0
        %v1994 = vadd.f32 %v1006, %v1993
        %v1995 = vpop.f32.mrb[0].mxu0
        %v1996 = vadd.f32 %v1007, %v1995
        %1997 = vmatprep.mubr.bf16.mxu0 0
        %1998 = vmatmul.mubr.bf16.gmra.mrb[0].mxu0 %v1250
        %v1999 = vpop.f32.mrb[0].mxu0
        %v2000 = vadd.f32 %v1022, %v1999
        %v2001 = vpop.f32.mrb[0].mxu0
        %v2002 = vadd.f32 %v1023, %v2001
        %v2003 = vpop.f32.mrb[0].mxu0
        %v2004 = vadd.f32 %v1038, %v2003
        %v2005 = vpop.f32.mrb[0].mxu0
        %v2006 = vadd.f32 %v1039, %v2005
        %2007 = vmatprep.mubr.bf16.mxu0 0
        %2008 = vmatmul.mubr.bf16.gmra.mrb[0].mxu0 %v1253
        %v2009 = vpop.f32.mrb[0].mxu0
        %v2010 = vadd.f32 %v1054, %v2009
        %v2011 = vpop.f32.mrb[0].mxu0
        %v2012 = vadd.f32 %v1055, %v2011
        %v2013 = vpop.f32.mrb[0].mxu0
        %v2014 = vadd.f32 %v1070, %v2013
        %v2015 = vpop.f32.mrb[0].mxu0
        %v2016 = vadd.f32 %v1071, %v2015
        %2017 = vmatprep.mubr.bf16.mxu0 0
        %2018 = vmatmul.mubr.bf16.gmra.mrb[0].mxu0 %v1256
        %v2019 = vpop.f32.mrb[0].mxu0
        %v2020 = vadd.f32 %v1086, %v2019
        %v2021 = vpop.f32.mrb[0].mxu0
        %v2022 = vadd.f32 %v1087, %v2021
        %v2023 = vpop.f32.mrb[0].mxu0
        %v2024 = vadd.f32 %v1102, %v2023
        %v2025 = vpop.f32.mrb[0].mxu0
        %v2026 = vadd.f32 %v1103, %v2025
        %2027 = vmatprep.mubr.bf16.mxu0 0
        %2028 = vmatmul.mubr.bf16.gmra.mrb[0].mxu0 %v1259
        %v2029 = vpop.f32.mrb[0].mxu0
        %v2030 = vadd.f32 %v1118, %v2029
        %v2031 = vpop.f32.mrb[0].mxu0
        %v2032 = vadd.f32 %v1119, %v2031
        %v2033 = vpop.f32.mrb[0].mxu0
        %v2034 = vadd.f32 %v1134, %v2033
        %v2035 = vpop.f32.mrb[0].mxu0
        %v2036 = vadd.f32 %v1135, %v2035
        %2037 = vmatprep.mubr.bf16.mxu0 0
        %2038 = vmatmul.mubr.bf16.gmra.mrb[0].mxu0 %v1262
        %v2039 = vpop.f32.mrb[0].mxu0
        %v2040 = vadd.f32 %v1150, %v2039
        %v2041 = vpop.f32.mrb[0].mxu0
        %v2042 = vadd.f32 %v1151, %v2041
        %v2043 = vpop.f32.mrb[0].mxu0
        %v2044 = vadd.f32 %v1166, %v2043
        %v2045 = vpop.f32.mrb[0].mxu0
        %v2046 = vadd.f32 %v1167, %v2045
        %2047 = vmatprep.mubr.bf16.mxu0 0
        %2048 = vmatmul.mubr.bf16.gmra.mrb[0].mxu0 %v1265
        %v2049 = vpop.f32.mrb[0].mxu0
        %v2050 = vadd.f32 %v1182, %v2049
        %v2051 = vpop.f32.mrb[0].mxu0
        %v2052 = vadd.f32 %v1183, %v2051
        %v2053 = vpop.f32.mrb[0].mxu0
        %v2054 = vadd.f32 %v1198, %v2053
        %v2055 = vpop.f32.mrb[0].mxu0
        %v2056 = vadd.f32 %v1199, %v2055
        %2057 = vdwg.mxu0
        %2058 = vmatprep.subr.bf16.mxu0 %v735
        %2059 = vmatpush1.bf16.msra.mxu0 %v734
        %2060 = vmatprep.subr.bf16.mxu0 %v751
        %2061 = vmatpush1.bf16.msra.mxu0 %v750
        %2062 = vmatprep.subr.bf16.mxu0 0
        %2063 = vmatpush1.bf16.msra.mxu0 0
        %2064 = vmatprep.subr.bf16.mxu0 0
        %2065 = vmatpush1.bf16.msra.mxu0 0
        %2066 = vmatprep.subr.bf16.mxu0 0
        %2067 = vmatpush1.bf16.msra.mxu0 0
        %2068 = vmatprep.subr.bf16.mxu0 0
        %2069 = vmatpush1.bf16.msra.mxu0 0
        %2070 = vmatprep.subr.bf16.mxu0 0
        %2071 = vmatpush1.bf16.msra.mxu0 0
        %2072 = vmatprep.subr.bf16.mxu0 0
        %2073 = vmatpush1.bf16.msra.mxu0 0
        %2074 = vmatprep.subr.bf16.mxu0 0
        %2075 = vmatpush1.bf16.msra.mxu0 0
        %2076 = vmatprep.subr.bf16.mxu0 0
        %2077 = vmatpush1.bf16.msra.mxu0 0
        %2078 = vmatprep.subr.bf16.mxu0 0
        %2079 = vmatpush1.bf16.msra.mxu0 0
        %2080 = vmatprep.subr.bf16.mxu0 0
        %2081 = vmatpush1.bf16.msra.mxu0 0
        %2082 = vmatprep.subr.bf16.mxu0 0
        %2083 = vmatpush1.bf16.msra.mxu0 0
        %2084 = vmatprep.subr.bf16.mxu0 0
        %2085 = vmatpush1.bf16.msra.mxu0 0
        %2086 = vmatprep.subr.bf16.mxu0 0
        %2087 = vmatpush1.bf16.msra.mxu0 0
        %2088 = vmatprep.subr.bf16.mxu0 0
        %2089 = vmatpush1.bf16.msra.mxu0 0
        %2090 = vmatprep.mubr.bf16.mxu0 0
        %2091 = vmatmul.mubr.bf16.gmra.mrb[0].mxu0 %v1244
        %v2092 = vpop.f32.mrb[0].mxu0
        %v2093 = vadd.f32 %v960, %v2092
        %v2094 = vpop.f32.mrb[0].mxu0
        %v2095 = vadd.f32 %v961, %v2094
        %v2096 = vpop.f32.mrb[0].mxu0
        %v2097 = vadd.f32 %v976, %v2096
        %v2098 = vpop.f32.mrb[0].mxu0
        %v2099 = vadd.f32 %v977, %v2098
        %2100 = vmatprep.mubr.bf16.mxu0 0
        %2101 = vmatmul.mubr.bf16.gmra.mrb[0].mxu0 %v1247
        %v2102 = vpop.f32.mrb[0].mxu0
        %v2103 = vadd.f32 %v992, %v2102
        %v2104 = vpop.f32.mrb[0].mxu0
        %v2105 = vadd.f32 %v993, %v2104
        %v2106 = vpop.f32.mrb[0].mxu0
        %v2107 = vadd.f32 %v1008, %v2106
        %v2108 = vpop.f32.mrb[0].mxu0
        %v2109 = vadd.f32 %v1009, %v2108
        %2110 = vmatprep.mubr.bf16.mxu0 0
        %2111 = vmatmul.mubr.bf16.gmra.mrb[0].mxu0 %v1250
        %v2112 = vpop.f32.mrb[0].mxu0
        %v2113 = vadd.f32 %v1024, %v2112
        %v2114 = vpop.f32.mrb[0].mxu0
        %v2115 = vadd.f32 %v1025, %v2114
        %v2116 = vpop.f32.mrb[0].mxu0
        %v2117 = vadd.f32 %v1040, %v2116
        %v2118 = vpop.f32.mrb[0].mxu0
        %v2119 = vadd.f32 %v1041, %v2118
        %2120 = vmatprep.mubr.bf16.mxu0 0
        %2121 = vmatmul.mubr.bf16.gmra.mrb[0].mxu0 %v1253
        %v2122 = vpop.f32.mrb[0].mxu0
        %v2123 = vadd.f32 %v1056, %v2122
        %v2124 = vpop.f32.mrb[0].mxu0
        %v2125 = vadd.f32 %v1057, %v2124
        %v2126 = vpop.f32.mrb[0].mxu0
        %v2127 = vadd.f32 %v1072, %v2126
        %v2128 = vpop.f32.mrb[0].mxu0
        %v2129 = vadd.f32 %v1073, %v2128
        %2130 = vmatprep.mubr.bf16.mxu0 0
        %2131 = vmatmul.mubr.bf16.gmra.mrb[0].mxu0 %v1256
        %v2132 = vpop.f32.mrb[0].mxu0
        %v2133 = vadd.f32 %v1088, %v2132
        %v2134 = vpop.f32.mrb[0].mxu0
        %v2135 = vadd.f32 %v1089, %v2134
        %v2136 = vpop.f32.mrb[0].mxu0
        %v2137 = vadd.f32 %v1104, %v2136
        %v2138 = vpop.f32.mrb[0].mxu0
        %v2139 = vadd.f32 %v1105, %v2138
        %2140 = vmatprep.mubr.bf16.mxu0 0
        %2141 = vmatmul.mubr.bf16.gmra.mrb[0].mxu0 %v1259
        %v2142 = vpop.f32.mrb[0].mxu0
        %v2143 = vadd.f32 %v1120, %v2142
        %v2144 = vpop.f32.mrb[0].mxu0
        %v2145 = vadd.f32 %v1121, %v2144
        %v2146 = vpop.f32.mrb[0].mxu0
        %v2147 = vadd.f32 %v1136, %v2146
        %v2148 = vpop.f32.mrb[0].mxu0
        %v2149 = vadd.f32 %v1137, %v2148
        %2150 = vmatprep.mubr.bf16.mxu0 0
        %2151 = vmatmul.mubr.bf16.gmra.mrb[0].mxu0 %v1262
        %v2152 = vpop.f32.mrb[0].mxu0
        %v2153 = vadd.f32 %v1152, %v2152
        %v2154 = vpop.f32.mrb[0].mxu0
        %v2155 = vadd.f32 %v1153, %v2154
        %v2156 = vpop.f32.mrb[0].mxu0
        %v2157 = vadd.f32 %v1168, %v2156
        %v2158 = vpop.f32.mrb[0].mxu0
        %v2159 = vadd.f32 %v1169, %v2158
        %2160 = vmatprep.mubr.bf16.mxu0 0
        %2161 = vmatmul.mubr.bf16.gmra.mrb[0].mxu0 %v1265
        %v2162 = vpop.f32.mrb[0].mxu0
        %v2163 = vadd.f32 %v1184, %v2162
        %v2164 = vpop.f32.mrb[0].mxu0
        %v2165 = vadd.f32 %v1185, %v2164
        %v2166 = vpop.f32.mrb[0].mxu0
        %v2167 = vadd.f32 %v1200, %v2166
        %v2168 = vpop.f32.mrb[0].mxu0
        %v2169 = vadd.f32 %v1201, %v2168
        %2170 = vdwg.mxu0
        %v2171 = vmul.f32 %v1302, 0.5
        %v2172 = vmul.f32 %v1304, 0.5
        %v2173 = vmul.f32 %v1415, 0.5
        %v2174 = vmul.f32 %v1417, 0.5
        %v2175 = vmul.f32 %v1528, 0.5
        %v2176 = vmul.f32 %v1530, 0.5
        %v2177 = vmul.f32 %v1641, 0.5
        %v2178 = vmul.f32 %v1643, 0.5
        %v2179 = vmul.f32 %v1754, 0.5
        %v2180 = vmul.f32 %v1756, 0.5
        %v2181 = vmul.f32 %v1867, 0.5
        %v2182 = vmul.f32 %v1869, 0.5
        %v2183 = vmul.f32 %v1980, 0.5
        %v2184 = vmul.f32 %v1982, 0.5
        %v2185 = vmul.f32 %v2093, 0.5
        %v2186 = vmul.f32 %v2095, 0.5
        %v2187 = vmul.f32 %v1306, 0.5
        %v2188 = vmul.f32 %v1308, 0.5
        %v2189 = vmul.f32 %v1419, 0.5
        %v2190 = vmul.f32 %v1421, 0.5
        %v2191 = vmul.f32 %v1532, 0.5
        %v2192 = vmul.f32 %v1534, 0.5
        %v2193 = vmul.f32 %v1645, 0.5
        %v2194 = vmul.f32 %v1647, 0.5
        %v2195 = vmul.f32 %v1758, 0.5
        %v2196 = vmul.f32 %v1760, 0.5
        %v2197 = vmul.f32 %v1871, 0.5
        %v2198 = vmul.f32 %v1873, 0.5
        %v2199 = vmul.f32 %v1984, 0.5
        %v2200 = vmul.f32 %v1986, 0.5
        %v2201 = vmul.f32 %v2097, 0.5
        %v2202 = vmul.f32 %v2099, 0.5
        %v2203 = vmul.f32 %v1312, 0.5
        %v2204 = vmul.f32 %v1314, 0.5
        %v2205 = vmul.f32 %v1425, 0.5
        %v2206 = vmul.f32 %v1427, 0.5
        %v2207 = vmul.f32 %v1538, 0.5
        %v2208 = vmul.f32 %v1540, 0.5
        %v2209 = vmul.f32 %v1651, 0.5
        %v2210 = vmul.f32 %v1653, 0.5
        %v2211 = vmul.f32 %v1764, 0.5
        %v2212 = vmul.f32 %v1766, 0.5
        %v2213 = vmul.f32 %v1877, 0.5
        %v2214 = vmul.f32 %v1879, 0.5
        %v2215 = vmul.f32 %v1990, 0.5
        %v2216 = vmul.f32 %v1992, 0.5
        %v2217 = vmul.f32 %v2103, 0.5
        %v2218 = vmul.f32 %v2105, 0.5
        %v2219 = vmul.f32 %v1316, 0.5
        %v2220 = vmul.f32 %v1318, 0.5
        %v2221 = vmul.f32 %v1429, 0.5
        %v2222 = vmul.f32 %v1431, 0.5
        %v2223 = vmul.f32 %v1542, 0.5
        %v2224 = vmul.f32 %v1544, 0.5
        %v2225 = vmul.f32 %v1655, 0.5
        %v2226 = vmul.f32 %v1657, 0.5
        %v2227 = vmul.f32 %v1768, 0.5
        %v2228 = vmul.f32 %v1770, 0.5
        %v2229 = vmul.f32 %v1881, 0.5
        %v2230 = vmul.f32 %v1883, 0.5
        %v2231 = vmul.f32 %v1994, 0.5
        %v2232 = vmul.f32 %v1996, 0.5
        %v2233 = vmul.f32 %v2107, 0.5
        %v2234 = vmul.f32 %v2109, 0.5
        %v2235 = vtanh.pop %v2171
        %v2236 = vtanh.pop %v2172
        %v2237 = vtanh.pop %v2173
        %v2238 = vtanh.pop %v2174
        %v2239 = vtanh.pop %v2175
        %v2240 = vtanh.pop %v2176
        %v2241 = vtanh.pop %v2177
        %v2242 = vtanh.pop %v2178
        %v2243 = vtanh.pop %v2179
        %v2244 = vtanh.pop %v2180
        %v2245 = vtanh.pop %v2181
        %v2246 = vtanh.pop %v2182
        %v2247 = vtanh.pop %v2183
        %v2248 = vtanh.pop %v2184
        %v2249 = vtanh.pop %v2185
        %v2250 = vtanh.pop %v2186
        %v2251 = vtanh.pop %v2187
        %v2252 = vtanh.pop %v2188
        %v2253 = vtanh.pop %v2189
        %v2254 = vtanh.pop %v2190
        %v2255 = vtanh.pop %v2191
        %v2256 = vtanh.pop %v2192
        %v2257 = vtanh.pop %v2193
        %v2258 = vtanh.pop %v2194
        %v2259 = vtanh.pop %v2195
        %v2260 = vtanh.pop %v2196
        %v2261 = vtanh.pop %v2197
        %v2262 = vtanh.pop %v2198
        %v2263 = vtanh.pop %v2199
        %v2264 = vtanh.pop %v2200
        %v2265 = vtanh.pop %v2201
        %v2266 = vtanh.pop %v2202
        %v2267 = vtanh.pop %v2203
        %v2268 = vtanh.pop %v2204
        %v2269 = vtanh.pop %v2205
        %v2270 = vtanh.pop %v2206
        %v2271 = vtanh.pop %v2207
        %v2272 = vtanh.pop %v2208
        %v2273 = vtanh.pop %v2209
        %v2274 = vtanh.pop %v2210
        %v2275 = vtanh.pop %v2211
        %v2276 = vtanh.pop %v2212
        %v2277 = vtanh.pop %v2213
        %v2278 = vtanh.pop %v2214
        %v2279 = vtanh.pop %v2215
        %v2280 = vtanh.pop %v2216
        %v2281 = vtanh.pop %v2217
        %v2282 = vtanh.pop %v2218
        %v2283 = vtanh.pop %v2219
        %v2284 = vtanh.pop %v2220
        %v2285 = vtanh.pop %v2221
        %v2286 = vtanh.pop %v2222
        %v2287 = vtanh.pop %v2223
        %v2288 = vtanh.pop %v2224
        %v2289 = vtanh.pop %v2225
        %v2290 = vtanh.pop %v2226
        %v2291 = vtanh.pop %v2227
        %v2292 = vtanh.pop %v2228
        %v2293 = vtanh.pop %v2229
        %v2294 = vtanh.pop %v2230
        %v2295 = vtanh.pop %v2231
        %v2296 = vtanh.pop %v2232
        %v2297 = vtanh.pop %v2233
        %v2298 = vtanh.pop %v2234
        %v2299 = vmul.f32 %v2235, 0.5
        %v2300 = vmul.f32 %v2236, 0.5
        %v2301 = vmul.f32 %v2237, 0.5
        %v2302 = vmul.f32 %v2238, 0.5
        %v2303 = vmul.f32 %v2239, 0.5
        %v2304 = vmul.f32 %v2240, 0.5
        %v2305 = vmul.f32 %v2241, 0.5
        %v2306 = vmul.f32 %v2242, 0.5
        %v2307 = vmul.f32 %v2243, 0.5
        %v2308 = vmul.f32 %v2244, 0.5
        %v2309 = vmul.f32 %v2245, 0.5
        %v2310 = vmul.f32 %v2246, 0.5
        %v2311 = vmul.f32 %v2247, 0.5
        %v2312 = vmul.f32 %v2248, 0.5
        %v2313 = vmul.f32 %v2249, 0.5
        %v2314 = vmul.f32 %v2250, 0.5
        %v2315 = vmul.f32 %v2251, 0.5
        %v2316 = vmul.f32 %v2252, 0.5
        %v2317 = vmul.f32 %v2253, 0.5
        %v2318 = vmul.f32 %v2254, 0.5
        %v2319 = vmul.f32 %v2255, 0.5
        %v2320 = vmul.f32 %v2256, 0.5
        %v2321 = vmul.f32 %v2257, 0.5
        %v2322 = vmul.f32 %v2258, 0.5
        %v2323 = vmul.f32 %v2259, 0.5
        %v2324 = vmul.f32 %v2260, 0.5
        %v2325 = vmul.f32 %v2261, 0.5
        %v2326 = vmul.f32 %v2262, 0.5
        %v2327 = vmul.f32 %v2263, 0.5
        %v2328 = vmul.f32 %v2264, 0.5
        %v2329 = vmul.f32 %v2265, 0.5
        %v2330 = vmul.f32 %v2266, 0.5
        %v2331 = vmul.f32 %v2267, 0.5
        %v2332 = vmul.f32 %v2268, 0.5
        %v2333 = vmul.f32 %v2269, 0.5
        %v2334 = vmul.f32 %v2270, 0.5
        %v2335 = vmul.f32 %v2271, 0.5
        %v2336 = vmul.f32 %v2272, 0.5
        %v2337 = vmul.f32 %v2273, 0.5
        %v2338 = vmul.f32 %v2274, 0.5
        %v2339 = vmul.f32 %v2275, 0.5
        %v2340 = vmul.f32 %v2276, 0.5
        %v2341 = vmul.f32 %v2277, 0.5
        %v2342 = vmul.f32 %v2278, 0.5
        %v2343 = vmul.f32 %v2279, 0.5
        %v2344 = vmul.f32 %v2280, 0.5
        %v2345 = vmul.f32 %v2281, 0.5
        %v2346 = vmul.f32 %v2282, 0.5
        %v2347 = vmul.f32 %v2283, 0.5
        %v2348 = vmul.f32 %v2284, 0.5
        %v2349 = vmul.f32 %v2285, 0.5
        %v2350 = vmul.f32 %v2286, 0.5
        %v2351 = vmul.f32 %v2287, 0.5
        %v2352 = vmul.f32 %v2288, 0.5
        %v2353 = vmul.f32 %v2289, 0.5
        %v2354 = vmul.f32 %v2290, 0.5
        %v2355 = vmul.f32 %v2291, 0.5
        %v2356 = vmul.f32 %v2292, 0.5
        %v2357 = vmul.f32 %v2293, 0.5
        %v2358 = vmul.f32 %v2294, 0.5
        %v2359 = vmul.f32 %v2295, 0.5
        %v2360 = vmul.f32 %v2296, 0.5
        %v2361 = vmul.f32 %v2297, 0.5
        %v2362 = vmul.f32 %v2298, 0.5
        %v2363 = vadd.f32 %v2299, 0.5
        %v2364 = vadd.f32 %v2300, 0.5
        %v2365 = vadd.f32 %v2301, 0.5
        %v2366 = vadd.f32 %v2302, 0.5
        %v2367 = vadd.f32 %v2303, 0.5
        %v2368 = vadd.f32 %v2304, 0.5
        %v2369 = vadd.f32 %v2305, 0.5
        %v2370 = vadd.f32 %v2306, 0.5
        %v2371 = vadd.f32 %v2307, 0.5
        %v2372 = vadd.f32 %v2308, 0.5
        %v2373 = vadd.f32 %v2309, 0.5
        %v2374 = vadd.f32 %v2310, 0.5
        %v2375 = vadd.f32 %v2311, 0.5
        %v2376 = vadd.f32 %v2312, 0.5
        %v2377 = vadd.f32 %v2313, 0.5
        %v2378 = vadd.f32 %v2314, 0.5
        %v2379 = vadd.f32 %v2315, 0.5
        %v2380 = vadd.f32 %v2316, 0.5
        %v2381 = vadd.f32 %v2317, 0.5
        %v2382 = vadd.f32 %v2318, 0.5
        %v2383 = vadd.f32 %v2319, 0.5
        %v2384 = vadd.f32 %v2320, 0.5
        %v2385 = vadd.f32 %v2321, 0.5
        %v2386 = vadd.f32 %v2322, 0.5
        %v2387 = vadd.f32 %v2323, 0.5
        %v2388 = vadd.f32 %v2324, 0.5
        %v2389 = vadd.f32 %v2325, 0.5
        %v2390 = vadd.f32 %v2326, 0.5
        %v2391 = vadd.f32 %v2327, 0.5
        %v2392 = vadd.f32 %v2328, 0.5
        %v2393 = vadd.f32 %v2329, 0.5
        %v2394 = vadd.f32 %v2330, 0.5
        %v2395 = vadd.f32 %v2331, 0.5
        %v2396 = vadd.f32 %v2332, 0.5
        %v2397 = vadd.f32 %v2333, 0.5
        %v2398 = vadd.f32 %v2334, 0.5
        %v2399 = vadd.f32 %v2335, 0.5
        %v2400 = vadd.f32 %v2336, 0.5
        %v2401 = vadd.f32 %v2337, 0.5
        %v2402 = vadd.f32 %v2338, 0.5
        %v2403 = vadd.f32 %v2339, 0.5
        %v2404 = vadd.f32 %v2340, 0.5
        %v2405 = vadd.f32 %v2341, 0.5
        %v2406 = vadd.f32 %v2342, 0.5
        %v2407 = vadd.f32 %v2343, 0.5
        %v2408 = vadd.f32 %v2344, 0.5
        %v2409 = vadd.f32 %v2345, 0.5
        %v2410 = vadd.f32 %v2346, 0.5
        %v2411 = vadd.f32 %v2347, 0.5
        %v2412 = vadd.f32 %v2348, 0.5
        %v2413 = vadd.f32 %v2349, 0.5
        %v2414 = vadd.f32 %v2350, 0.5
        %v2415 = vadd.f32 %v2351, 0.5
        %v2416 = vadd.f32 %v2352, 0.5
        %v2417 = vadd.f32 %v2353, 0.5
        %v2418 = vadd.f32 %v2354, 0.5
        %v2419 = vadd.f32 %v2355, 0.5
        %v2420 = vadd.f32 %v2356, 0.5
        %v2421 = vadd.f32 %v2357, 0.5
        %v2422 = vadd.f32 %v2358, 0.5
        %v2423 = vadd.f32 %v2359, 0.5
        %v2424 = vadd.f32 %v2360, 0.5
        %v2425 = vadd.f32 %v2361, 0.5
        %v2426 = vadd.f32 %v2362, 0.5
        %v2427 = vmul.f32 %v1322, 0.5
        %v2428 = vmul.f32 %v1324, 0.5
        %v2429 = vmul.f32 %v1435, 0.5
        %v2430 = vmul.f32 %v1437, 0.5
        %v2431 = vmul.f32 %v1548, 0.5
        %v2432 = vmul.f32 %v1550, 0.5
        %v2433 = vmul.f32 %v1661, 0.5
        %v2434 = vmul.f32 %v1663, 0.5
        %v2435 = vmul.f32 %v1774, 0.5
        %v2436 = vmul.f32 %v1776, 0.5
        %v2437 = vmul.f32 %v1887, 0.5
        %v2438 = vmul.f32 %v1889, 0.5
        %v2439 = vmul.f32 %v2000, 0.5
        %v2440 = vmul.f32 %v2002, 0.5
        %v2441 = vmul.f32 %v2113, 0.5
        %v2442 = vmul.f32 %v2115, 0.5
        %v2443 = vmul.f32 %v1326, 0.5
        %v2444 = vmul.f32 %v1328, 0.5
        %v2445 = vmul.f32 %v1439, 0.5
        %v2446 = vmul.f32 %v1441, 0.5
        %v2447 = vmul.f32 %v1552, 0.5
        %v2448 = vmul.f32 %v1554, 0.5
        %v2449 = vmul.f32 %v1665, 0.5
        %v2450 = vmul.f32 %v1667, 0.5
        %v2451 = vmul.f32 %v1778, 0.5
        %v2452 = vmul.f32 %v1780, 0.5
        %v2453 = vmul.f32 %v1891, 0.5
        %v2454 = vmul.f32 %v1893, 0.5
        %v2455 = vmul.f32 %v2004, 0.5
        %v2456 = vmul.f32 %v2006, 0.5
        %v2457 = vmul.f32 %v2117, 0.5
        %v2458 = vmul.f32 %v2119, 0.5
        %v2459 = vmul.f32 %v1332, 0.5
        %v2460 = vmul.f32 %v1334, 0.5
        %v2461 = vmul.f32 %v1445, 0.5
        %v2462 = vmul.f32 %v1447, 0.5
        %v2463 = vmul.f32 %v1558, 0.5
        %v2464 = vmul.f32 %v1560, 0.5
        %v2465 = vmul.f32 %v1671, 0.5
        %v2466 = vmul.f32 %v1673, 0.5
        %v2467 = vmul.f32 %v1784, 0.5
        %v2468 = vmul.f32 %v1786, 0.5
        %v2469 = vmul.f32 %v1897, 0.5
        %v2470 = vmul.f32 %v1899, 0.5
        %v2471 = vmul.f32 %v2010, 0.5
        %v2472 = vmul.f32 %v2012, 0.5
        %v2473 = vmul.f32 %v2123, 0.5
        %v2474 = vmul.f32 %v2125, 0.5
        %v2475 = vmul.f32 %v1336, 0.5
        %v2476 = vmul.f32 %v1338, 0.5
        %v2477 = vmul.f32 %v1449, 0.5
        %v2478 = vmul.f32 %v1451, 0.5
        %v2479 = vmul.f32 %v1562, 0.5
        %v2480 = vmul.f32 %v1564, 0.5
        %v2481 = vmul.f32 %v1675, 0.5
        %v2482 = vmul.f32 %v1677, 0.5
        %v2483 = vmul.f32 %v1788, 0.5
        %v2484 = vmul.f32 %v1790, 0.5
        %v2485 = vmul.f32 %v1901, 0.5
        %v2486 = vmul.f32 %v1903, 0.5
        %v2487 = vmul.f32 %v2014, 0.5
        %v2488 = vmul.f32 %v2016, 0.5
        %v2489 = vmul.f32 %v2127, 0.5
        %v2490 = vmul.f32 %v2129, 0.5
        %v2491 = vtanh.pop %v2427
        %v2492 = vtanh.pop %v2428
        %v2493 = vtanh.pop %v2429
        %v2494 = vtanh.pop %v2430
        %v2495 = vtanh.pop %v2431
        %v2496 = vtanh.pop %v2432
        %v2497 = vtanh.pop %v2433
        %v2498 = vtanh.pop %v2434
        %v2499 = vtanh.pop %v2435
        %v2500 = vtanh.pop %v2436
        %v2501 = vtanh.pop %v2437
        %v2502 = vtanh.pop %v2438
        %v2503 = vtanh.pop %v2439
        %v2504 = vtanh.pop %v2440
        %v2505 = vtanh.pop %v2441
        %v2506 = vtanh.pop %v2442
        %v2507 = vtanh.pop %v2443
        %v2508 = vtanh.pop %v2444
        %v2509 = vtanh.pop %v2445
        %v2510 = vtanh.pop %v2446
        %v2511 = vtanh.pop %v2447
        %v2512 = vtanh.pop %v2448
        %v2513 = vtanh.pop %v2449
        %v2514 = vtanh.pop %v2450
        %v2515 = vtanh.pop %v2451
        %v2516 = vtanh.pop %v2452
        %v2517 = vtanh.pop %v2453
        %v2518 = vtanh.pop %v2454
        %v2519 = vtanh.pop %v2455
        %v2520 = vtanh.pop %v2456
        %v2521 = vtanh.pop %v2457
        %v2522 = vtanh.pop %v2458
        %v2523 = vtanh.pop %v2459
        %v2524 = vtanh.pop %v2460
        %v2525 = vtanh.pop %v2461
        %v2526 = vtanh.pop %v2462
        %v2527 = vtanh.pop %v2463
        %v2528 = vtanh.pop %v2464
        %v2529 = vtanh.pop %v2465
        %v2530 = vtanh.pop %v2466
        %v2531 = vtanh.pop %v2467
        %v2532 = vtanh.pop %v2468
        %v2533 = vtanh.pop %v2469
        %v2534 = vtanh.pop %v2470
        %v2535 = vtanh.pop %v2471
        %v2536 = vtanh.pop %v2472
        %v2537 = vtanh.pop %v2473
        %v2538 = vtanh.pop %v2474
        %v2539 = vtanh.pop %v2475
        %v2540 = vtanh.pop %v2476
        %v2541 = vtanh.pop %v2477
        %v2542 = vtanh.pop %v2478
        %v2543 = vtanh.pop %v2479
        %v2544 = vtanh.pop %v2480
        %v2545 = vtanh.pop %v2481
        %v2546 = vtanh.pop %v2482
        %v2547 = vtanh.pop %v2483
        %v2548 = vtanh.pop %v2484
        %v2549 = vtanh.pop %v2485
        %v2550 = vtanh.pop %v2486
        %v2551 = vtanh.pop %v2487
        %v2552 = vtanh.pop %v2488
        %v2553 = vtanh.pop %v2489
        %v2554 = vtanh.pop %v2490
        %v2555 = vmul.f32 %v2491, 0.5
        %v2556 = vmul.f32 %v2492, 0.5
        %v2557 = vmul.f32 %v2493, 0.5
        %v2558 = vmul.f32 %v2494, 0.5
        %v2559 = vmul.f32 %v2495, 0.5
        %v2560 = vmul.f32 %v2496, 0.5
        %v2561 = vmul.f32 %v2497, 0.5
        %v2562 = vmul.f32 %v2498, 0.5
        %v2563 = vmul.f32 %v2499, 0.5
        %v2564 = vmul.f32 %v2500, 0.5
        %v2565 = vmul.f32 %v2501, 0.5
        %v2566 = vmul.f32 %v2502, 0.5
        %v2567 = vmul.f32 %v2503, 0.5
        %v2568 = vmul.f32 %v2504, 0.5
        %v2569 = vmul.f32 %v2505, 0.5
        %v2570 = vmul.f32 %v2506, 0.5
        %v2571 = vmul.f32 %v2507, 0.5
        %v2572 = vmul.f32 %v2508, 0.5
        %v2573 = vmul.f32 %v2509, 0.5
        %v2574 = vmul.f32 %v2510, 0.5
        %v2575 = vmul.f32 %v2511, 0.5
        %v2576 = vmul.f32 %v2512, 0.5
        %v2577 = vmul.f32 %v2513, 0.5
        %v2578 = vmul.f32 %v2514, 0.5
        %v2579 = vmul.f32 %v2515, 0.5
        %v2580 = vmul.f32 %v2516, 0.5
        %v2581 = vmul.f32 %v2517, 0.5
        %v2582 = vmul.f32 %v2518, 0.5
        %v2583 = vmul.f32 %v2519, 0.5
        %v2584 = vmul.f32 %v2520, 0.5
        %v2585 = vmul.f32 %v2521, 0.5
        %v2586 = vmul.f32 %v2522, 0.5
        %v2587 = vmul.f32 %v2523, 0.5
        %v2588 = vmul.f32 %v2524, 0.5
        %v2589 = vmul.f32 %v2525, 0.5
        %v2590 = vmul.f32 %v2526, 0.5
        %v2591 = vmul.f32 %v2527, 0.5
        %v2592 = vmul.f32 %v2528, 0.5
        %v2593 = vmul.f32 %v2529, 0.5
        %v2594 = vmul.f32 %v2530, 0.5
        %v2595 = vmul.f32 %v2531, 0.5
        %v2596 = vmul.f32 %v2532, 0.5
        %v2597 = vmul.f32 %v2533, 0.5
        %v2598 = vmul.f32 %v2534, 0.5
        %v2599 = vmul.f32 %v2535, 0.5
        %v2600 = vmul.f32 %v2536, 0.5
        %v2601 = vmul.f32 %v2537, 0.5
        %v2602 = vmul.f32 %v2538, 0.5
        %v2603 = vmul.f32 %v2539, 0.5
        %v2604 = vmul.f32 %v2540, 0.5
        %v2605 = vmul.f32 %v2541, 0.5
        %v2606 = vmul.f32 %v2542, 0.5
        %v2607 = vmul.f32 %v2543, 0.5
        %v2608 = vmul.f32 %v2544, 0.5
        %v2609 = vmul.f32 %v2545, 0.5
        %v2610 = vmul.f32 %v2546, 0.5
        %v2611 = vmul.f32 %v2547, 0.5
        %v2612 = vmul.f32 %v2548, 0.5
        %v2613 = vmul.f32 %v2549, 0.5
        %v2614 = vmul.f32 %v2550, 0.5
        %v2615 = vmul.f32 %v2551, 0.5
        %v2616 = vmul.f32 %v2552, 0.5
        %v2617 = vmul.f32 %v2553, 0.5
        %v2618 = vmul.f32 %v2554, 0.5
        %v2619 = vadd.f32 %v2555, 0.5
        %v2620 = vadd.f32 %v2556, 0.5
        %v2621 = vadd.f32 %v2557, 0.5
        %v2622 = vadd.f32 %v2558, 0.5
        %v2623 = vadd.f32 %v2559, 0.5
        %v2624 = vadd.f32 %v2560, 0.5
        %v2625 = vadd.f32 %v2561, 0.5
        %v2626 = vadd.f32 %v2562, 0.5
        %v2627 = vadd.f32 %v2563, 0.5
        %v2628 = vadd.f32 %v2564, 0.5
        %v2629 = vadd.f32 %v2565, 0.5
        %v2630 = vadd.f32 %v2566, 0.5
        %v2631 = vadd.f32 %v2567, 0.5
        %v2632 = vadd.f32 %v2568, 0.5
        %v2633 = vadd.f32 %v2569, 0.5
        %v2634 = vadd.f32 %v2570, 0.5
        %v2635 = vadd.f32 %v2571, 0.5
        %v2636 = vadd.f32 %v2572, 0.5
        %v2637 = vadd.f32 %v2573, 0.5
        %v2638 = vadd.f32 %v2574, 0.5
        %v2639 = vadd.f32 %v2575, 0.5
        %v2640 = vadd.f32 %v2576, 0.5
        %v2641 = vadd.f32 %v2577, 0.5
        %v2642 = vadd.f32 %v2578, 0.5
        %v2643 = vadd.f32 %v2579, 0.5
        %v2644 = vadd.f32 %v2580, 0.5
        %v2645 = vadd.f32 %v2581, 0.5
        %v2646 = vadd.f32 %v2582, 0.5
        %v2647 = vadd.f32 %v2583, 0.5
        %v2648 = vadd.f32 %v2584, 0.5
        %v2649 = vadd.f32 %v2585, 0.5
        %v2650 = vadd.f32 %v2586, 0.5
        %v2651 = vadd.f32 %v2587, 0.5
        %v2652 = vadd.f32 %v2588, 0.5
        %v2653 = vadd.f32 %v2589, 0.5
        %v2654 = vadd.f32 %v2590, 0.5
        %v2655 = vadd.f32 %v2591, 0.5
        %v2656 = vadd.f32 %v2592, 0.5
        %v2657 = vadd.f32 %v2593, 0.5
        %v2658 = vadd.f32 %v2594, 0.5
        %v2659 = vadd.f32 %v2595, 0.5
        %v2660 = vadd.f32 %v2596, 0.5
        %v2661 = vadd.f32 %v2597, 0.5
        %v2662 = vadd.f32 %v2598, 0.5
        %v2663 = vadd.f32 %v2599, 0.5
        %v2664 = vadd.f32 %v2600, 0.5
        %v2665 = vadd.f32 %v2601, 0.5
        %v2666 = vadd.f32 %v2602, 0.5
        %v2667 = vadd.f32 %v2603, 0.5
        %v2668 = vadd.f32 %v2604, 0.5
        %v2669 = vadd.f32 %v2605, 0.5
        %v2670 = vadd.f32 %v2606, 0.5
        %v2671 = vadd.f32 %v2607, 0.5
        %v2672 = vadd.f32 %v2608, 0.5
        %v2673 = vadd.f32 %v2609, 0.5
        %v2674 = vadd.f32 %v2610, 0.5
        %v2675 = vadd.f32 %v2611, 0.5
        %v2676 = vadd.f32 %v2612, 0.5
        %v2677 = vadd.f32 %v2613, 0.5
        %v2678 = vadd.f32 %v2614, 0.5
        %v2679 = vadd.f32 %v2615, 0.5
        %v2680 = vadd.f32 %v2616, 0.5
        %v2681 = vadd.f32 %v2617, 0.5
        %v2682 = vadd.f32 %v2618, 0.5
        %v2683 = vtanh.pop %v1342
        %v2684 = vtanh.pop %v1344
        %v2685 = vtanh.pop %v1455
        %v2686 = vtanh.pop %v1457
        %v2687 = vtanh.pop %v1568
        %v2688 = vtanh.pop %v1570
        %v2689 = vtanh.pop %v1681
        %v2690 = vtanh.pop %v1683
        %v2691 = vtanh.pop %v1794
        %v2692 = vtanh.pop %v1796
        %v2693 = vtanh.pop %v1907
        %v2694 = vtanh.pop %v1909
        %v2695 = vtanh.pop %v2020
        %v2696 = vtanh.pop %v2022
        %v2697 = vtanh.pop %v2133
        %v2698 = vtanh.pop %v2135
        %v2699 = vtanh.pop %v1346
        %v2700 = vtanh.pop %v1348
        %v2701 = vtanh.pop %v1459
        %v2702 = vtanh.pop %v1461
        %v2703 = vtanh.pop %v1572
        %v2704 = vtanh.pop %v1574
        %v2705 = vtanh.pop %v1685
        %v2706 = vtanh.pop %v1687
        %v2707 = vtanh.pop %v1798
        %v2708 = vtanh.pop %v1800
        %v2709 = vtanh.pop %v1911
        %v2710 = vtanh.pop %v1913
        %v2711 = vtanh.pop %v2024
        %v2712 = vtanh.pop %v2026
        %v2713 = vtanh.pop %v2137
        %v2714 = vtanh.pop %v2139
        %v2715 = vtanh.pop %v1352
        %v2716 = vtanh.pop %v1354
        %v2717 = vtanh.pop %v1465
        %v2718 = vtanh.pop %v1467
        %v2719 = vtanh.pop %v1578
        %v2720 = vtanh.pop %v1580
        %v2721 = vtanh.pop %v1691
        %v2722 = vtanh.pop %v1693
        %v2723 = vtanh.pop %v1804
        %v2724 = vtanh.pop %v1806
        %v2725 = vtanh.pop %v1917
        %v2726 = vtanh.pop %v1919
        %v2727 = vtanh.pop %v2030
        %v2728 = vtanh.pop %v2032
        %v2729 = vtanh.pop %v2143
        %v2730 = vtanh.pop %v2145
        %v2731 = vtanh.pop %v1356
        %v2732 = vtanh.pop %v1358
        %v2733 = vtanh.pop %v1469
        %v2734 = vtanh.pop %v1471
        %v2735 = vtanh.pop %v1582
        %v2736 = vtanh.pop %v1584
        %v2737 = vtanh.pop %v1695
        %v2738 = vtanh.pop %v1697
        %v2739 = vtanh.pop %v1808
        %v2740 = vtanh.pop %v1810
        %v2741 = vtanh.pop %v1921
        %v2742 = vtanh.pop %v1923
        %v2743 = vtanh.pop %v2034
        %v2744 = vtanh.pop %v2036
        %v2745 = vtanh.pop %v2147
        %v2746 = vtanh.pop %v2149
        %v2747 = vmul.f32 %v1362, 0.5
        %v2748 = vmul.f32 %v1364, 0.5
        %v2749 = vmul.f32 %v1475, 0.5
        %v2750 = vmul.f32 %v1477, 0.5
        %v2751 = vmul.f32 %v1588, 0.5
        %v2752 = vmul.f32 %v1590, 0.5
        %v2753 = vmul.f32 %v1701, 0.5
        %v2754 = vmul.f32 %v1703, 0.5
        %v2755 = vmul.f32 %v1814, 0.5
        %v2756 = vmul.f32 %v1816, 0.5
        %v2757 = vmul.f32 %v1927, 0.5
        %v2758 = vmul.f32 %v1929, 0.5
        %v2759 = vmul.f32 %v2040, 0.5
        %v2760 = vmul.f32 %v2042, 0.5
        %v2761 = vmul.f32 %v2153, 0.5
        %v2762 = vmul.f32 %v2155, 0.5
        %v2763 = vmul.f32 %v1366, 0.5
        %v2764 = vmul.f32 %v1368, 0.5
        %v2765 = vmul.f32 %v1479, 0.5
        %v2766 = vmul.f32 %v1481, 0.5
        %v2767 = vmul.f32 %v1592, 0.5
        %v2768 = vmul.f32 %v1594, 0.5
        %v2769 = vmul.f32 %v1705, 0.5
        %v2770 = vmul.f32 %v1707, 0.5
        %v2771 = vmul.f32 %v1818, 0.5
        %v2772 = vmul.f32 %v1820, 0.5
        %v2773 = vmul.f32 %v1931, 0.5
        %v2774 = vmul.f32 %v1933, 0.5
        %v2775 = vmul.f32 %v2044, 0.5
        %v2776 = vmul.f32 %v2046, 0.5
        %v2777 = vmul.f32 %v2157, 0.5
        %v2778 = vmul.f32 %v2159, 0.5
        %v2779 = vmul.f32 %v1372, 0.5
        %v2780 = vmul.f32 %v1374, 0.5
        %v2781 = vmul.f32 %v1485, 0.5
        %v2782 = vmul.f32 %v1487, 0.5
        %v2783 = vmul.f32 %v1598, 0.5
        %v2784 = vmul.f32 %v1600, 0.5
        %v2785 = vmul.f32 %v1711, 0.5
        %v2786 = vmul.f32 %v1713, 0.5
        %v2787 = vmul.f32 %v1824, 0.5
        %v2788 = vmul.f32 %v1826, 0.5
        %v2789 = vmul.f32 %v1937, 0.5
        %v2790 = vmul.f32 %v1939, 0.5
        %v2791 = vmul.f32 %v2050, 0.5
        %v2792 = vmul.f32 %v2052, 0.5
        %v2793 = vmul.f32 %v2163, 0.5
        %v2794 = vmul.f32 %v2165, 0.5
        %v2795 = vmul.f32 %v1376, 0.5
        %v2796 = vmul.f32 %v1378, 0.5
        %v2797 = vmul.f32 %v1489, 0.5
        %v2798 = vmul.f32 %v1491, 0.5
        %v2799 = vmul.f32 %v1602, 0.5
        %v2800 = vmul.f32 %v1604, 0.5
        %v2801 = vmul.f32 %v1715, 0.5
        %v2802 = vmul.f32 %v1717, 0.5
        %v2803 = vmul.f32 %v1828, 0.5
        %v2804 = vmul.f32 %v1830, 0.5
        %v2805 = vmul.f32 %v1941, 0.5
        %v2806 = vmul.f32 %v1943, 0.5
        %v2807 = vmul.f32 %v2054, 0.5
        %v2808 = vmul.f32 %v2056, 0.5
        %v2809 = vmul.f32 %v2167, 0.5
        %v2810 = vmul.f32 %v2169, 0.5
        %v2811 = vtanh.pop %v2747
        %v2812 = vtanh.pop %v2748
        %v2813 = vtanh.pop %v2749
        %v2814 = vtanh.pop %v2750
        %v2815 = vtanh.pop %v2751
        %v2816 = vtanh.pop %v2752
        %v2817 = vtanh.pop %v2753
        %v2818 = vtanh.pop %v2754
        %v2819 = vtanh.pop %v2755
        %v2820 = vtanh.pop %v2756
        %v2821 = vtanh.pop %v2757
        %v2822 = vtanh.pop %v2758
        %v2823 = vtanh.pop %v2759
        %v2824 = vtanh.pop %v2760
        %v2825 = vtanh.pop %v2761
        %v2826 = vtanh.pop %v2762
        %v2827 = vtanh.pop %v2763
        %v2828 = vtanh.pop %v2764
        %v2829 = vtanh.pop %v2765
        %v2830 = vtanh.pop %v2766
        %v2831 = vtanh.pop %v2767
        %v2832 = vtanh.pop %v2768
        %v2833 = vtanh.pop %v2769
        %v2834 = vtanh.pop %v2770
        %v2835 = vtanh.pop %v2771
        %v2836 = vtanh.pop %v2772
        %v2837 = vtanh.pop %v2773
        %v2838 = vtanh.pop %v2774
        %v2839 = vtanh.pop %v2775
        %v2840 = vtanh.pop %v2776
        %v2841 = vtanh.pop %v2777
        %v2842 = vtanh.pop %v2778
        %v2843 = vtanh.pop %v2779
        %v2844 = vtanh.pop %v2780
        %v2845 = vtanh.pop %v2781
        %v2846 = vtanh.pop %v2782
        %v2847 = vtanh.pop %v2783
        %v2848 = vtanh.pop %v2784
        %v2849 = vtanh.pop %v2785
        %v2850 = vtanh.pop %v2786
        %v2851 = vtanh.pop %v2787
        %v2852 = vtanh.pop %v2788
        %v2853 = vtanh.pop %v2789
        %v2854 = vtanh.pop %v2790
        %v2855 = vtanh.pop %v2791
        %v2856 = vtanh.pop %v2792
        %v2857 = vtanh.pop %v2793
        %v2858 = vtanh.pop %v2794
        %v2859 = vtanh.pop %v2795
        %v2860 = vtanh.pop %v2796
        %v2861 = vtanh.pop %v2797
        %v2862 = vtanh.pop %v2798
        %v2863 = vtanh.pop %v2799
        %v2864 = vtanh.pop %v2800
        %v2865 = vtanh.pop %v2801
        %v2866 = vtanh.pop %v2802
        %v2867 = vtanh.pop %v2803
        %v2868 = vtanh.pop %v2804
        %v2869 = vtanh.pop %v2805
        %v2870 = vtanh.pop %v2806
        %v2871 = vtanh.pop %v2807
        %v2872 = vtanh.pop %v2808
        %v2873 = vtanh.pop %v2809
        %v2874 = vtanh.pop %v2810
        %v2875 = vmul.f32 %v2811, 0.5
        %v2876 = vmul.f32 %v2812, 0.5
        %v2877 = vmul.f32 %v2813, 0.5
        %v2878 = vmul.f32 %v2814, 0.5
        %v2879 = vmul.f32 %v2815, 0.5
        %v2880 = vmul.f32 %v2816, 0.5
        %v2881 = vmul.f32 %v2817, 0.5
        %v2882 = vmul.f32 %v2818, 0.5
        %v2883 = vmul.f32 %v2819, 0.5
        %v2884 = vmul.f32 %v2820, 0.5
        %v2885 = vmul.f32 %v2821, 0.5
        %v2886 = vmul.f32 %v2822, 0.5
        %v2887 = vmul.f32 %v2823, 0.5
        %v2888 = vmul.f32 %v2824, 0.5
        %v2889 = vmul.f32 %v2825, 0.5
        %v2890 = vmul.f32 %v2826, 0.5
        %v2891 = vmul.f32 %v2827, 0.5
        %v2892 = vmul.f32 %v2828, 0.5
        %v2893 = vmul.f32 %v2829, 0.5
        %v2894 = vmul.f32 %v2830, 0.5
        %v2895 = vmul.f32 %v2831, 0.5
        %v2896 = vmul.f32 %v2832, 0.5
        %v2897 = vmul.f32 %v2833, 0.5
        %v2898 = vmul.f32 %v2834, 0.5
        %v2899 = vmul.f32 %v2835, 0.5
        %v2900 = vmul.f32 %v2836, 0.5
        %v2901 = vmul.f32 %v2837, 0.5
        %v2902 = vmul.f32 %v2838, 0.5
        %v2903 = vmul.f32 %v2839, 0.5
        %v2904 = vmul.f32 %v2840, 0.5
        %v2905 = vmul.f32 %v2841, 0.5
        %v2906 = vmul.f32 %v2842, 0.5
        %v2907 = vmul.f32 %v2843, 0.5
        %v2908 = vmul.f32 %v2844, 0.5
        %v2909 = vmul.f32 %v2845, 0.5
        %v2910 = vmul.f32 %v2846, 0.5
        %v2911 = vmul.f32 %v2847, 0.5
        %v2912 = vmul.f32 %v2848, 0.5
        %v2913 = vmul.f32 %v2849, 0.5
        %v2914 = vmul.f32 %v2850, 0.5
        %v2915 = vmul.f32 %v2851, 0.5
        %v2916 = vmul.f32 %v2852, 0.5
        %v2917 = vmul.f32 %v2853, 0.5
        %v2918 = vmul.f32 %v2854, 0.5
        %v2919 = vmul.f32 %v2855, 0.5
        %v2920 = vmul.f32 %v2856, 0.5
        %v2921 = vmul.f32 %v2857, 0.5
        %v2922 = vmul.f32 %v2858, 0.5
        %v2923 = vmul.f32 %v2859, 0.5
        %v2924 = vmul.f32 %v2860, 0.5
        %v2925 = vmul.f32 %v2861, 0.5
        %v2926 = vmul.f32 %v2862, 0.5
        %v2927 = vmul.f32 %v2863, 0.5
        %v2928 = vmul.f32 %v2864, 0.5
        %v2929 = vmul.f32 %v2865, 0.5
        %v2930 = vmul.f32 %v2866, 0.5
        %v2931 = vmul.f32 %v2867, 0.5
        %v2932 = vmul.f32 %v2868, 0.5
        %v2933 = vmul.f32 %v2869, 0.5
        %v2934 = vmul.f32 %v2870, 0.5
        %v2935 = vmul.f32 %v2871, 0.5
        %v2936 = vmul.f32 %v2872, 0.5
        %v2937 = vmul.f32 %v2873, 0.5
        %v2938 = vmul.f32 %v2874, 0.5
        %v2939 = vadd.f32 %v2875, 0.5
        %v2940 = vadd.f32 %v2876, 0.5
        %v2941 = vadd.f32 %v2877, 0.5
        %v2942 = vadd.f32 %v2878, 0.5
        %v2943 = vadd.f32 %v2879, 0.5
        %v2944 = vadd.f32 %v2880, 0.5
        %v2945 = vadd.f32 %v2881, 0.5
        %v2946 = vadd.f32 %v2882, 0.5
        %v2947 = vadd.f32 %v2883, 0.5
        %v2948 = vadd.f32 %v2884, 0.5
        %v2949 = vadd.f32 %v2885, 0.5
        %v2950 = vadd.f32 %v2886, 0.5
        %v2951 = vadd.f32 %v2887, 0.5
        %v2952 = vadd.f32 %v2888, 0.5
        %v2953 = vadd.f32 %v2889, 0.5
        %v2954 = vadd.f32 %v2890, 0.5
        %v2955 = vadd.f32 %v2891, 0.5
        %v2956 = vadd.f32 %v2892, 0.5
        %v2957 = vadd.f32 %v2893, 0.5
        %v2958 = vadd.f32 %v2894, 0.5
        %v2959 = vadd.f32 %v2895, 0.5
        %v2960 = vadd.f32 %v2896, 0.5
        %v2961 = vadd.f32 %v2897, 0.5
        %v2962 = vadd.f32 %v2898, 0.5
        %v2963 = vadd.f32 %v2899, 0.5
        %v2964 = vadd.f32 %v2900, 0.5
        %v2965 = vadd.f32 %v2901, 0.5
        %v2966 = vadd.f32 %v2902, 0.5
        %v2967 = vadd.f32 %v2903, 0.5
        %v2968 = vadd.f32 %v2904, 0.5
        %v2969 = vadd.f32 %v2905, 0.5
        %v2970 = vadd.f32 %v2906, 0.5
        %v2971 = vadd.f32 %v2907, 0.5
        %v2972 = vadd.f32 %v2908, 0.5
        %v2973 = vadd.f32 %v2909, 0.5
        %v2974 = vadd.f32 %v2910, 0.5
        %v2975 = vadd.f32 %v2911, 0.5
        %v2976 = vadd.f32 %v2912, 0.5
        %v2977 = vadd.f32 %v2913, 0.5
        %v2978 = vadd.f32 %v2914, 0.5
        %v2979 = vadd.f32 %v2915, 0.5
        %v2980 = vadd.f32 %v2916, 0.5
        %v2981 = vadd.f32 %v2917, 0.5
        %v2982 = vadd.f32 %v2918, 0.5
        %v2983 = vadd.f32 %v2919, 0.5
        %v2984 = vadd.f32 %v2920, 0.5
        %v2985 = vadd.f32 %v2921, 0.5
        %v2986 = vadd.f32 %v2922, 0.5
        %v2987 = vadd.f32 %v2923, 0.5
        %v2988 = vadd.f32 %v2924, 0.5
        %v2989 = vadd.f32 %v2925, 0.5
        %v2990 = vadd.f32 %v2926, 0.5
        %v2991 = vadd.f32 %v2927, 0.5
        %v2992 = vadd.f32 %v2928, 0.5
        %v2993 = vadd.f32 %v2929, 0.5
        %v2994 = vadd.f32 %v2930, 0.5
        %v2995 = vadd.f32 %v2931, 0.5
        %v2996 = vadd.f32 %v2932, 0.5
        %v2997 = vadd.f32 %v2933, 0.5
        %v2998 = vadd.f32 %v2934, 0.5
        %v2999 = vadd.f32 %v2935, 0.5
        %v3000 = vadd.f32 %v2936, 0.5
        %v3001 = vadd.f32 %v2937, 0.5
        %v3002 = vadd.f32 %v2938, 0.5
        %v3003 = vld [vmem:[%s593] sm:$0xff]
        %v3004 = vld [vmem:[%s593 + $0x8] sm:$0xff]
        %v3005 = vld [vmem:[%s593 + $0x10] sm:$0xff]
        %v3006 = vld [vmem:[%s593 + $0x18] sm:$0xff]
        %v3007 = vld [vmem:[%s593 + $0x20] sm:$0xff]
        %v3008 = vld [vmem:[%s593 + $0x28] sm:$0xff]
        %v3009 = vld [vmem:[%s593 + $0x30] sm:$0xff]
        %v3010 = vld [vmem:[%s593 + $0x38] sm:$0xff]
        %v3011 = vld [vmem:[%s593 + $0x40] sm:$0xff]
        %v3012 = vld [vmem:[%s593 + $0x48] sm:$0xff]
        %v3013 = vld [vmem:[%s593 + $0x50] sm:$0xff]
        %v3014 = vld [vmem:[%s593 + $0x58] sm:$0xff]
        %v3015 = vld [vmem:[%s593 + $0x60] sm:$0xff]
        %v3016 = vld [vmem:[%s593 + $0x68] sm:$0xff]
        %v3017 = vld [vmem:[%s593 + $0x70] sm:$0xff]
        %v3018 = vld [vmem:[%s593 + $0x78] sm:$0xff]
        %v3019 = vld [vmem:[%s593 + $0x80] sm:$0xff]
        %v3020 = vld [vmem:[%s593 + $0x88] sm:$0xff]
        %v3021 = vld [vmem:[%s593 + $0x90] sm:$0xff]
        %v3022 = vld [vmem:[%s593 + $0x98] sm:$0xff]
        %v3023 = vld [vmem:[%s593 + $0xa0] sm:$0xff]
        %v3024 = vld [vmem:[%s593 + $0xa8] sm:$0xff]
        %v3025 = vld [vmem:[%s593 + $0xb0] sm:$0xff]
        %v3026 = vld [vmem:[%s593 + $0xb8] sm:$0xff]
        %v3027 = vld [vmem:[%s593 + $0xc0] sm:$0xff]
        %v3028 = vld [vmem:[%s593 + $0xc8] sm:$0xff]
        %v3029 = vld [vmem:[%s593 + $0xd0] sm:$0xff]
        %v3030 = vld [vmem:[%s593 + $0xd8] sm:$0xff]
        %v3031 = vld [vmem:[%s593 + $0xe0] sm:$0xff]
        %v3032 = vld [vmem:[%s593 + $0xe8] sm:$0xff]
        %v3033 = vld [vmem:[%s593 + $0xf0] sm:$0xff]
        %v3034 = vld [vmem:[%s593 + $0xf8] sm:$0xff]
        %v3035 = vld [vmem:[%s593 + $0x100] sm:$0xff]
        %v3036 = vld [vmem:[%s593 + $0x108] sm:$0xff]
        %v3037 = vld [vmem:[%s593 + $0x110] sm:$0xff]
        %v3038 = vld [vmem:[%s593 + $0x118] sm:$0xff]
        %v3039 = vld [vmem:[%s593 + $0x120] sm:$0xff]
        %v3040 = vld [vmem:[%s593 + $0x128] sm:$0xff]
        %v3041 = vld [vmem:[%s593 + $0x130] sm:$0xff]
        %v3042 = vld [vmem:[%s593 + $0x138] sm:$0xff]
        %v3043 = vld [vmem:[%s593 + $0x140] sm:$0xff]
        %v3044 = vld [vmem:[%s593 + $0x148] sm:$0xff]
        %v3045 = vld [vmem:[%s593 + $0x150] sm:$0xff]
        %v3046 = vld [vmem:[%s593 + $0x158] sm:$0xff]
        %v3047 = vld [vmem:[%s593 + $0x160] sm:$0xff]
        %v3048 = vld [vmem:[%s593 + $0x168] sm:$0xff]
        %v3049 = vld [vmem:[%s593 + $0x170] sm:$0xff]
        %v3050 = vld [vmem:[%s593 + $0x178] sm:$0xff]
        %v3051 = vld [vmem:[%s593 + $0x180] sm:$0xff]
        %v3052 = vld [vmem:[%s593 + $0x188] sm:$0xff]
        %v3053 = vld [vmem:[%s593 + $0x190] sm:$0xff]
        %v3054 = vld [vmem:[%s593 + $0x198] sm:$0xff]
        %v3055 = vld [vmem:[%s593 + $0x1a0] sm:$0xff]
        %v3056 = vld [vmem:[%s593 + $0x1a8] sm:$0xff]
        %v3057 = vld [vmem:[%s593 + $0x1b0] sm:$0xff]
        %v3058 = vld [vmem:[%s593 + $0x1b8] sm:$0xff]
        %v3059 = vld [vmem:[%s593 + $0x1c0] sm:$0xff]
        %v3060 = vld [vmem:[%s593 + $0x1c8] sm:$0xff]
        %v3061 = vld [vmem:[%s593 + $0x1d0] sm:$0xff]
        %v3062 = vld [vmem:[%s593 + $0x1d8] sm:$0xff]
        %v3063 = vld [vmem:[%s593 + $0x1e0] sm:$0xff]
        %v3064 = vld [vmem:[%s593 + $0x1e8] sm:$0xff]
        %v3065 = vld [vmem:[%s593 + $0x1f0] sm:$0xff]
        %v3066 = vld [vmem:[%s593 + $0x1f8] sm:$0xff]
        %v3067 = vmul.f32 %v2619, %v3003
        %v3068 = vmul.f32 %v2620, %v3004
        %v3069 = vmul.f32 %v2621, %v3005
        %v3070 = vmul.f32 %v2622, %v3006
        %v3071 = vmul.f32 %v2623, %v3007
        %v3072 = vmul.f32 %v2624, %v3008
        %v3073 = vmul.f32 %v2625, %v3009
        %v3074 = vmul.f32 %v2626, %v3010
        %v3075 = vmul.f32 %v2627, %v3011
        %v3076 = vmul.f32 %v2628, %v3012
        %v3077 = vmul.f32 %v2629, %v3013
        %v3078 = vmul.f32 %v2630, %v3014
        %v3079 = vmul.f32 %v2631, %v3015
        %v3080 = vmul.f32 %v2632, %v3016
        %v3081 = vmul.f32 %v2633, %v3017
        %v3082 = vmul.f32 %v2634, %v3018
        %v3083 = vmul.f32 %v2635, %v3019
        %v3084 = vmul.f32 %v2636, %v3020
        %v3085 = vmul.f32 %v2637, %v3021
        %v3086 = vmul.f32 %v2638, %v3022
        %v3087 = vmul.f32 %v2639, %v3023
        %v3088 = vmul.f32 %v2640, %v3024
        %v3089 = vmul.f32 %v2641, %v3025
        %v3090 = vmul.f32 %v2642, %v3026
        %v3091 = vmul.f32 %v2643, %v3027
        %v3092 = vmul.f32 %v2644, %v3028
        %v3093 = vmul.f32 %v2645, %v3029
        %v3094 = vmul.f32 %v2646, %v3030
        %v3095 = vmul.f32 %v2647, %v3031
        %v3096 = vmul.f32 %v2648, %v3032
        %v3097 = vmul.f32 %v2649, %v3033
        %v3098 = vmul.f32 %v2650, %v3034
        %v3099 = vmul.f32 %v2651, %v3035
        %v3100 = vmul.f32 %v2652, %v3036
        %v3101 = vmul.f32 %v2653, %v3037
        %v3102 = vmul.f32 %v2654, %v3038
        %v3103 = vmul.f32 %v2655, %v3039
        %v3104 = vmul.f32 %v2656, %v3040
        %v3105 = vmul.f32 %v2657, %v3041
        %v3106 = vmul.f32 %v2658, %v3042
        %v3107 = vmul.f32 %v2659, %v3043
        %v3108 = vmul.f32 %v2660, %v3044
        %v3109 = vmul.f32 %v2661, %v3045
        %v3110 = vmul.f32 %v2662, %v3046
        %v3111 = vmul.f32 %v2663, %v3047
        %v3112 = vmul.f32 %v2664, %v3048
        %v3113 = vmul.f32 %v2665, %v3049
        %v3114 = vmul.f32 %v2666, %v3050
        %v3115 = vmul.f32 %v2667, %v3051
        %v3116 = vmul.f32 %v2668, %v3052
        %v3117 = vmul.f32 %v2669, %v3053
        %v3118 = vmul.f32 %v2670, %v3054
        %v3119 = vmul.f32 %v2671, %v3055
        %v3120 = vmul.f32 %v2672, %v3056
        %v3121 = vmul.f32 %v2673, %v3057
        %v3122 = vmul.f32 %v2674, %v3058
        %v3123 = vmul.f32 %v2675, %v3059
        %v3124 = vmul.f32 %v2676, %v3060
        %v3125 = vmul.f32 %v2677, %v3061
        %v3126 = vmul.f32 %v2678, %v3062
        %v3127 = vmul.f32 %v2679, %v3063
        %v3128 = vmul.f32 %v2680, %v3064
        %v3129 = vmul.f32 %v2681, %v3065
        %v3130 = vmul.f32 %v2682, %v3066
        %v3131 = vmul.f32 %v2363, %v2683
        %v3132 = vmul.f32 %v2364, %v2684
        %v3133 = vmul.f32 %v2365, %v2685
        %v3134 = vmul.f32 %v2366, %v2686
        %v3135 = vmul.f32 %v2367, %v2687
        %v3136 = vmul.f32 %v2368, %v2688
        %v3137 = vmul.f32 %v2369, %v2689
        %v3138 = vmul.f32 %v2370, %v2690
        %v3139 = vmul.f32 %v2371, %v2691
        %v3140 = vmul.f32 %v2372, %v2692
        %v3141 = vmul.f32 %v2373, %v2693
        %v3142 = vmul.f32 %v2374, %v2694
        %v3143 = vmul.f32 %v2375, %v2695
        %v3144 = vmul.f32 %v2376, %v2696
        %v3145 = vmul.f32 %v2377, %v2697
        %v3146 = vmul.f32 %v2378, %v2698
        %v3147 = vmul.f32 %v2379, %v2699
        %v3148 = vmul.f32 %v2380, %v2700
        %v3149 = vmul.f32 %v2381, %v2701
        %v3150 = vmul.f32 %v2382, %v2702
        %v3151 = vmul.f32 %v2383, %v2703
        %v3152 = vmul.f32 %v2384, %v2704
        %v3153 = vmul.f32 %v2385, %v2705
        %v3154 = vmul.f32 %v2386, %v2706
        %v3155 = vmul.f32 %v2387, %v2707
        %v3156 = vmul.f32 %v2388, %v2708
        %v3157 = vmul.f32 %v2389, %v2709
        %v3158 = vmul.f32 %v2390, %v2710
        %v3159 = vmul.f32 %v2391, %v2711
        %v3160 = vmul.f32 %v2392, %v2712
        %v3161 = vmul.f32 %v2393, %v2713
        %v3162 = vmul.f32 %v2394, %v2714
        %v3163 = vmul.f32 %v2395, %v2715
        %v3164 = vmul.f32 %v2396, %v2716
        %v3165 = vmul.f32 %v2397, %v2717
        %v3166 = vmul.f32 %v2398, %v2718
        %v3167 = vmul.f32 %v2399, %v2719
        %v3168 = vmul.f32 %v2400, %v2720
        %v3169 = vmul.f32 %v2401, %v2721
        %v3170 = vmul.f32 %v2402, %v2722
        %v3171 = vmul.f32 %v2403, %v2723
        %v3172 = vmul.f32 %v2404, %v2724
        %v3173 = vmul.f32 %v2405, %v2725
        %v3174 = vmul.f32 %v2406, %v2726
        %v3175 = vmul.f32 %v2407, %v2727
        %v3176 = vmul.f32 %v2408, %v2728
        %v3177 = vmul.f32 %v2409, %v2729
        %v3178 = vmul.f32 %v2410, %v2730
        %v3179 = vmul.f32 %v2411, %v2731
        %v3180 = vmul.f32 %v2412, %v2732
        %v3181 = vmul.f32 %v2413, %v2733
        %v3182 = vmul.f32 %v2414, %v2734
        %v3183 = vmul.f32 %v2415, %v2735
        %v3184 = vmul.f32 %v2416, %v2736
        %v3185 = vmul.f32 %v2417, %v2737
        %v3186 = vmul.f32 %v2418, %v2738
        %v3187 = vmul.f32 %v2419, %v2739
        %v3188 = vmul.f32 %v2420, %v2740
        %v3189 = vmul.f32 %v2421, %v2741
        %v3190 = vmul.f32 %v2422, %v2742
        %v3191 = vmul.f32 %v2423, %v2743
        %v3192 = vmul.f32 %v2424, %v2744
        %v3193 = vmul.f32 %v2425, %v2745
        %v3194 = vmul.f32 %v2426, %v2746
        %v3195 = vadd.f32 %v3067, %v3131
        %v3196 = vadd.f32 %v3068, %v3132
        %v3197 = vadd.f32 %v3069, %v3133
        %v3198 = vadd.f32 %v3070, %v3134
        %v3199 = vadd.f32 %v3071, %v3135
        %v3200 = vadd.f32 %v3072, %v3136
        %v3201 = vadd.f32 %v3073, %v3137
        %v3202 = vadd.f32 %v3074, %v3138
        %v3203 = vadd.f32 %v3075, %v3139
        %v3204 = vadd.f32 %v3076, %v3140
        %v3205 = vadd.f32 %v3077, %v3141
        %v3206 = vadd.f32 %v3078, %v3142
        %v3207 = vadd.f32 %v3079, %v3143
        %v3208 = vadd.f32 %v3080, %v3144
        %v3209 = vadd.f32 %v3081, %v3145
        %v3210 = vadd.f32 %v3082, %v3146
        %v3211 = vadd.f32 %v3083, %v3147
        %v3212 = vadd.f32 %v3084, %v3148
        %v3213 = vadd.f32 %v3085, %v3149
        %v3214 = vadd.f32 %v3086, %v3150
        %v3215 = vadd.f32 %v3087, %v3151
        %v3216 = vadd.f32 %v3088, %v3152
        %v3217 = vadd.f32 %v3089, %v3153
        %v3218 = vadd.f32 %v3090, %v3154
        %v3219 = vadd.f32 %v3091, %v3155
        %v3220 = vadd.f32 %v3092, %v3156
        %v3221 = vadd.f32 %v3093, %v3157
        %v3222 = vadd.f32 %v3094, %v3158
        %v3223 = vadd.f32 %v3095, %v3159
        %v3224 = vadd.f32 %v3096, %v3160
        %v3225 = vadd.f32 %v3097, %v3161
        %v3226 = vadd.f32 %v3098, %v3162
        %v3227 = vadd.f32 %v3099, %v3163
        %v3228 = vadd.f32 %v3100, %v3164
        %v3229 = vadd.f32 %v3101, %v3165
        %v3230 = vadd.f32 %v3102, %v3166
        %v3231 = vadd.f32 %v3103, %v3167
        %v3232 = vadd.f32 %v3104, %v3168
        %v3233 = vadd.f32 %v3105, %v3169
        %v3234 = vadd.f32 %v3106, %v3170
        %v3235 = vadd.f32 %v3107, %v3171
        %v3236 = vadd.f32 %v3108, %v3172
        %v3237 = vadd.f32 %v3109, %v3173
        %v3238 = vadd.f32 %v3110, %v3174
        %v3239 = vadd.f32 %v3111, %v3175
        %v3240 = vadd.f32 %v3112, %v3176
        %v3241 = vadd.f32 %v3113, %v3177
        %v3242 = vadd.f32 %v3114, %v3178
        %v3243 = vadd.f32 %v3115, %v3179
        %v3244 = vadd.f32 %v3116, %v3180
        %v3245 = vadd.f32 %v3117, %v3181
        %v3246 = vadd.f32 %v3118, %v3182
        %v3247 = vadd.f32 %v3119, %v3183
        %v3248 = vadd.f32 %v3120, %v3184
        %v3249 = vadd.f32 %v3121, %v3185
        %v3250 = vadd.f32 %v3122, %v3186
        %v3251 = vadd.f32 %v3123, %v3187
        %v3252 = vadd.f32 %v3124, %v3188
        %v3253 = vadd.f32 %v3125, %v3189
        %v3254 = vadd.f32 %v3126, %v3190
        %v3255 = vadd.f32 %v3127, %v3191
        %v3256 = vadd.f32 %v3128, %v3192
        %v3257 = vadd.f32 %v3129, %v3193
        %v3258 = vadd.f32 %v3130, %v3194
        %v3259 = vtanh.pop %v3195
        %v3260 = vtanh.pop %v3196
        %v3261 = vtanh.pop %v3197
        %v3262 = vtanh.pop %v3198
        %v3263 = vtanh.pop %v3199
        %v3264 = vtanh.pop %v3200
        %v3265 = vtanh.pop %v3201
        %v3266 = vtanh.pop %v3202
        %v3267 = vtanh.pop %v3203
        %v3268 = vtanh.pop %v3204
        %v3269 = vtanh.pop %v3205
        %v3270 = vtanh.pop %v3206
        %v3271 = vtanh.pop %v3207
        %v3272 = vtanh.pop %v3208
        %v3273 = vtanh.pop %v3209
        %v3274 = vtanh.pop %v3210
        %v3275 = vtanh.pop %v3211
        %v3276 = vtanh.pop %v3212
        %v3277 = vtanh.pop %v3213
        %v3278 = vtanh.pop %v3214
        %v3279 = vtanh.pop %v3215
        %v3280 = vtanh.pop %v3216
        %v3281 = vtanh.pop %v3217
        %v3282 = vtanh.pop %v3218
        %v3283 = vtanh.pop %v3219
        %v3284 = vtanh.pop %v3220
        %v3285 = vtanh.pop %v3221
        %v3286 = vtanh.pop %v3222
        %v3287 = vtanh.pop %v3223
        %v3288 = vtanh.pop %v3224
        %v3289 = vtanh.pop %v3225
        %v3290 = vtanh.pop %v3226
        %v3291 = vtanh.pop %v3227
        %v3292 = vtanh.pop %v3228
        %v3293 = vtanh.pop %v3229
        %v3294 = vtanh.pop %v3230
        %v3295 = vtanh.pop %v3231
        %v3296 = vtanh.pop %v3232
        %v3297 = vtanh.pop %v3233
        %v3298 = vtanh.pop %v3234
        %v3299 = vtanh.pop %v3235
        %v3300 = vtanh.pop %v3236
        %v3301 = vtanh.pop %v3237
        %v3302 = vtanh.pop %v3238
        %v3303 = vtanh.pop %v3239
        %v3304 = vtanh.pop %v3240
        %v3305 = vtanh.pop %v3241
        %v3306 = vtanh.pop %v3242
        %v3307 = vtanh.pop %v3243
        %v3308 = vtanh.pop %v3244
        %v3309 = vtanh.pop %v3245
        %v3310 = vtanh.pop %v3246
        %v3311 = vtanh.pop %v3247
        %v3312 = vtanh.pop %v3248
        %v3313 = vtanh.pop %v3249
        %v3314 = vtanh.pop %v3250
        %v3315 = vtanh.pop %v3251
        %v3316 = vtanh.pop %v3252
        %v3317 = vtanh.pop %v3253
        %v3318 = vtanh.pop %v3254
        %v3319 = vtanh.pop %v3255
        %v3320 = vtanh.pop %v3256
        %v3321 = vtanh.pop %v3257
        %v3322 = vtanh.pop %v3258
        %v3323 = vmul.f32 %v2939, %v3259
        %v3324 = vmul.f32 %v2940, %v3260
        %v3325 = vmul.f32 %v2941, %v3261
        %v3326 = vmul.f32 %v2942, %v3262
        %v3327 = vmul.f32 %v2943, %v3263
        %v3328 = vmul.f32 %v2944, %v3264
        %v3329 = vmul.f32 %v2945, %v3265
        %v3330 = vmul.f32 %v2946, %v3266
        %v3331 = vmul.f32 %v2947, %v3267
        %v3332 = vmul.f32 %v2948, %v3268
        %v3333 = vmul.f32 %v2949, %v3269
        %v3334 = vmul.f32 %v2950, %v3270
        %v3335 = vmul.f32 %v2951, %v3271
        %v3336 = vmul.f32 %v2952, %v3272
        %v3337 = vmul.f32 %v2953, %v3273
        %v3338 = vmul.f32 %v2954, %v3274
        %v3339 = vmul.f32 %v2955, %v3275
        %v3340 = vmul.f32 %v2956, %v3276
        %v3341 = vmul.f32 %v2957, %v3277
        %v3342 = vmul.f32 %v2958, %v3278
        %v3343 = vmul.f32 %v2959, %v3279
        %v3344 = vmul.f32 %v2960, %v3280
        %v3345 = vmul.f32 %v2961, %v3281
        %v3346 = vmul.f32 %v2962, %v3282
        %v3347 = vmul.f32 %v2963, %v3283
        %v3348 = vmul.f32 %v2964, %v3284
        %v3349 = vmul.f32 %v2965, %v3285
        %v3350 = vmul.f32 %v2966, %v3286
        %v3351 = vmul.f32 %v2967, %v3287
        %v3352 = vmul.f32 %v2968, %v3288
        %v3353 = vmul.f32 %v2969, %v3289
        %v3354 = vmul.f32 %v2970, %v3290
        %v3355 = vmul.f32 %v2971, %v3291
        %v3356 = vmul.f32 %v2972, %v3292
        %v3357 = vmul.f32 %v2973, %v3293
        %v3358 = vmul.f32 %v2974, %v3294
        %v3359 = vmul.f32 %v2975, %v3295
        %v3360 = vmul.f32 %v2976, %v3296
        %v3361 = vmul.f32 %v2977, %v3297
        %v3362 = vmul.f32 %v2978, %v3298
        %v3363 = vmul.f32 %v2979, %v3299
        %v3364 = vmul.f32 %v2980, %v3300
        %v3365 = vmul.f32 %v2981, %v3301
        %v3366 = vmul.f32 %v2982, %v3302
        %v3367 = vmul.f32 %v2983, %v3303
        %v3368 = vmul.f32 %v2984, %v3304
        %v3369 = vmul.f32 %v2985, %v3305
        %v3370 = vmul.f32 %v2986, %v3306
        %v3371 = vmul.f32 %v2987, %v3307
        %v3372 = vmul.f32 %v2988, %v3308
        %v3373 = vmul.f32 %v2989, %v3309
        %v3374 = vmul.f32 %v2990, %v3310
        %v3375 = vmul.f32 %v2991, %v3311
        %v3376 = vmul.f32 %v2992, %v3312
        %v3377 = vmul.f32 %v2993, %v3313
        %v3378 = vmul.f32 %v2994, %v3314
        %v3379 = vmul.f32 %v2995, %v3315
        %v3380 = vmul.f32 %v2996, %v3316
        %v3381 = vmul.f32 %v2997, %v3317
        %v3382 = vmul.f32 %v2998, %v3318
        %v3383 = vmul.f32 %v2999, %v3319
        %v3384 = vmul.f32 %v3000, %v3320
        %v3385 = vmul.f32 %v3001, %v3321
        %v3386 = vmul.f32 %v3002, %v3322
        %3387 = vst [vmem:[%s638] sm:$0xff] %v3195
        %3388 = vst [vmem:[%s638 + $0x8] sm:$0xff] %v3196
        %3389 = vst [vmem:[%s638 + $0x10] sm:$0xff] %v3197
        %3390 = vst [vmem:[%s638 + $0x18] sm:$0xff] %v3198
        %3391 = vst [vmem:[%s638 + $0x20] sm:$0xff] %v3199
        %3392 = vst [vmem:[%s638 + $0x28] sm:$0xff] %v3200
        %3393 = vst [vmem:[%s638 + $0x30] sm:$0xff] %v3201
        %3394 = vst [vmem:[%s638 + $0x38] sm:$0xff] %v3202
        %3395 = vst [vmem:[%s638 + $0x40] sm:$0xff] %v3203
        %3396 = vst [vmem:[%s638 + $0x48] sm:$0xff] %v3204
        %3397 = vst [vmem:[%s638 + $0x50] sm:$0xff] %v3205
        %3398 = vst [vmem:[%s638 + $0x58] sm:$0xff] %v3206
        %3399 = vst [vmem:[%s638 + $0x60] sm:$0xff] %v3207
        %3400 = vst [vmem:[%s638 + $0x68] sm:$0xff] %v3208
        %3401 = vst [vmem:[%s638 + $0x70] sm:$0xff] %v3209
        %3402 = vst [vmem:[%s638 + $0x78] sm:$0xff] %v3210
        %3403 = vst [vmem:[%s638 + $0x80] sm:$0xff] %v3211
        %3404 = vst [vmem:[%s638 + $0x88] sm:$0xff] %v3212
        %3405 = vst [vmem:[%s638 + $0x90] sm:$0xff] %v3213
        %3406 = vst [vmem:[%s638 + $0x98] sm:$0xff] %v3214
        %3407 = vst [vmem:[%s638 + $0xa0] sm:$0xff] %v3215
        %3408 = vst [vmem:[%s638 + $0xa8] sm:$0xff] %v3216
        %3409 = vst [vmem:[%s638 + $0xb0] sm:$0xff] %v3217
        %3410 = vst [vmem:[%s638 + $0xb8] sm:$0xff] %v3218
        %3411 = vst [vmem:[%s638 + $0xc0] sm:$0xff] %v3219
        %3412 = vst [vmem:[%s638 + $0xc8] sm:$0xff] %v3220
        %3413 = vst [vmem:[%s638 + $0xd0] sm:$0xff] %v3221
        %3414 = vst [vmem:[%s638 + $0xd8] sm:$0xff] %v3222
        %3415 = vst [vmem:[%s638 + $0xe0] sm:$0xff] %v3223
        %3416 = vst [vmem:[%s638 + $0xe8] sm:$0xff] %v3224
        %3417 = vst [vmem:[%s638 + $0xf0] sm:$0xff] %v3225
        %3418 = vst [vmem:[%s638 + $0xf8] sm:$0xff] %v3226
        %3419 = vst [vmem:[%s638 + $0x100] sm:$0xff] %v3227
        %3420 = vst [vmem:[%s638 + $0x108] sm:$0xff] %v3228
        %3421 = vst [vmem:[%s638 + $0x110] sm:$0xff] %v3229
        %3422 = vst [vmem:[%s638 + $0x118] sm:$0xff] %v3230
        %3423 = vst [vmem:[%s638 + $0x120] sm:$0xff] %v3231
        %3424 = vst [vmem:[%s638 + $0x128] sm:$0xff] %v3232
        %3425 = vst [vmem:[%s638 + $0x130] sm:$0xff] %v3233
        %3426 = vst [vmem:[%s638 + $0x138] sm:$0xff] %v3234
        %3427 = vst [vmem:[%s638 + $0x140] sm:$0xff] %v3235
        %3428 = vst [vmem:[%s638 + $0x148] sm:$0xff] %v3236
        %3429 = vst [vmem:[%s638 + $0x150] sm:$0xff] %v3237
        %3430 = vst [vmem:[%s638 + $0x158] sm:$0xff] %v3238
        %3431 = vst [vmem:[%s638 + $0x160] sm:$0xff] %v3239
        %3432 = vst [vmem:[%s638 + $0x168] sm:$0xff] %v3240
        %3433 = vst [vmem:[%s638 + $0x170] sm:$0xff] %v3241
        %3434 = vst [vmem:[%s638 + $0x178] sm:$0xff] %v3242
        %3435 = vst [vmem:[%s638 + $0x180] sm:$0xff] %v3243
        %3436 = vst [vmem:[%s638 + $0x188] sm:$0xff] %v3244
        %3437 = vst [vmem:[%s638 + $0x190] sm:$0xff] %v3245
        %3438 = vst [vmem:[%s638 + $0x198] sm:$0xff] %v3246
        %3439 = vst [vmem:[%s638 + $0x1a0] sm:$0xff] %v3247
        %3440 = vst [vmem:[%s638 + $0x1a8] sm:$0xff] %v3248
        %3441 = vst [vmem:[%s638 + $0x1b0] sm:$0xff] %v3249
        %3442 = vst [vmem:[%s638 + $0x1b8] sm:$0xff] %v3250
        %3443 = vst [vmem:[%s638 + $0x1c0] sm:$0xff] %v3251
        %3444 = vst [vmem:[%s638 + $0x1c8] sm:$0xff] %v3252
        %3445 = vst [vmem:[%s638 + $0x1d0] sm:$0xff] %v3253
        %3446 = vst [vmem:[%s638 + $0x1d8] sm:$0xff] %v3254
        %3447 = vst [vmem:[%s638 + $0x1e0] sm:$0xff] %v3255
        %3448 = vst [vmem:[%s638 + $0x1e8] sm:$0xff] %v3256
        %3449 = vst [vmem:[%s638 + $0x1f0] sm:$0xff] %v3257
        %3450 = vst [vmem:[%s638 + $0x1f8] sm:$0xff] %v3258
        %3451 = vst [vmem:[%s632] sm:$0xff] %v3323
        %3452 = vst [vmem:[%s632 + $0x8] sm:$0xff] %v3324
        %3453 = vst [vmem:[%s632 + $0x10] sm:$0xff] %v3325
        %3454 = vst [vmem:[%s632 + $0x18] sm:$0xff] %v3326
        %3455 = vst [vmem:[%s632 + $0x20] sm:$0xff] %v3327
        %3456 = vst [vmem:[%s632 + $0x28] sm:$0xff] %v3328
        %3457 = vst [vmem:[%s632 + $0x30] sm:$0xff] %v3329
        %3458 = vst [vmem:[%s632 + $0x38] sm:$0xff] %v3330
        %3459 = vst [vmem:[%s632 + $0x40] sm:$0xff] %v3331
        %3460 = vst [vmem:[%s632 + $0x48] sm:$0xff] %v3332
        %3461 = vst [vmem:[%s632 + $0x50] sm:$0xff] %v3333
        %3462 = vst [vmem:[%s632 + $0x58] sm:$0xff] %v3334
        %3463 = vst [vmem:[%s632 + $0x60] sm:$0xff] %v3335
        %3464 = vst [vmem:[%s632 + $0x68] sm:$0xff] %v3336
        %3465 = vst [vmem:[%s632 + $0x70] sm:$0xff] %v3337
        %3466 = vst [vmem:[%s632 + $0x78] sm:$0xff] %v3338
        %3467 = vst [vmem:[%s632 + $0x80] sm:$0xff] %v3339
        %3468 = vst [vmem:[%s632 + $0x88] sm:$0xff] %v3340
        %3469 = vst [vmem:[%s632 + $0x90] sm:$0xff] %v3341
        %3470 = vst [vmem:[%s632 + $0x98] sm:$0xff] %v3342
        %3471 = vst [vmem:[%s632 + $0xa0] sm:$0xff] %v3343
        %3472 = vst [vmem:[%s632 + $0xa8] sm:$0xff] %v3344
        %3473 = vst [vmem:[%s632 + $0xb0] sm:$0xff] %v3345
        %3474 = vst [vmem:[%s632 + $0xb8] sm:$0xff] %v3346
        %3475 = vst [vmem:[%s632 + $0xc0] sm:$0xff] %v3347
        %3476 = vst [vmem:[%s632 + $0xc8] sm:$0xff] %v3348
        %3477 = vst [vmem:[%s632 + $0xd0] sm:$0xff] %v3349
        %3478 = vst [vmem:[%s632 + $0xd8] sm:$0xff] %v3350
        %3479 = vst [vmem:[%s632 + $0xe0] sm:$0xff] %v3351
        %3480 = vst [vmem:[%s632 + $0xe8] sm:$0xff] %v3352
        %3481 = vst [vmem:[%s632 + $0xf0] sm:$0xff] %v3353
        %3482 = vst [vmem:[%s632 + $0xf8] sm:$0xff] %v3354
        %3483 = vst [vmem:[%s632 + $0x100] sm:$0xff] %v3355
        %3484 = vst [vmem:[%s632 + $0x108] sm:$0xff] %v3356
        %3485 = vst [vmem:[%s632 + $0x110] sm:$0xff] %v3357
        %3486 = vst [vmem:[%s632 + $0x118] sm:$0xff] %v3358
        %3487 = vst [vmem:[%s632 + $0x120] sm:$0xff] %v3359
        %3488 = vst [vmem:[%s632 + $0x128] sm:$0xff] %v3360
        %3489 = vst [vmem:[%s632 + $0x130] sm:$0xff] %v3361
        %3490 = vst [vmem:[%s632 + $0x138] sm:$0xff] %v3362
        %3491 = vst [vmem:[%s632 + $0x140] sm:$0xff] %v3363
        %3492 = vst [vmem:[%s632 + $0x148] sm:$0xff] %v3364
        %3493 = vst [vmem:[%s632 + $0x150] sm:$0xff] %v3365
        %3494 = vst [vmem:[%s632 + $0x158] sm:$0xff] %v3366
        %3495 = vst [vmem:[%s632 + $0x160] sm:$0xff] %v3367
        %3496 = vst [vmem:[%s632 + $0x168] sm:$0xff] %v3368
        %3497 = vst [vmem:[%s632 + $0x170] sm:$0xff] %v3369
        %3498 = vst [vmem:[%s632 + $0x178] sm:$0xff] %v3370
        %3499 = vst [vmem:[%s632 + $0x180] sm:$0xff] %v3371
        %3500 = vst [vmem:[%s632 + $0x188] sm:$0xff] %v3372
        %3501 = vst [vmem:[%s632 + $0x190] sm:$0xff] %v3373
        %3502 = vst [vmem:[%s632 + $0x198] sm:$0xff] %v3374
        %3503 = vst [vmem:[%s632 + $0x1a0] sm:$0xff] %v3375
        %3504 = vst [vmem:[%s632 + $0x1a8] sm:$0xff] %v3376
        %3505 = vst [vmem:[%s632 + $0x1b0] sm:$0xff] %v3377
        %3506 = vst [vmem:[%s632 + $0x1b8] sm:$0xff] %v3378
        %3507 = vst [vmem:[%s632 + $0x1c0] sm:$0xff] %v3379
        %3508 = vst [vmem:[%s632 + $0x1c8] sm:$0xff] %v3380
        %3509 = vst [vmem:[%s632 + $0x1d0] sm:$0xff] %v3381
        %3510 = vst [vmem:[%s632 + $0x1d8] sm:$0xff] %v3382
        %3511 = vst [vmem:[%s632 + $0x1e0] sm:$0xff] %v3383
        %3512 = vst [vmem:[%s632 + $0x1e8] sm:$0xff] %v3384
        %3513 = vst [vmem:[%s632 + $0x1f0] sm:$0xff] %v3385
        %3514 = vst [vmem:[%s632 + $0x1f8] sm:$0xff] %v3386
        %v3515 = vld [vmem:[%s5] sm:$0xff]
        %v3516 = vld [vmem:[%s5 + $0x8] sm:$0xff]
        %v3517 = vld [vmem:[%s5 + $0x10] sm:$0xff]
        %v3518 = vld [vmem:[%s5 + $0x18] sm:$0xff]
        %3520 = vset.pattern.permute.xlu0 0
        %3521 = vperm.xlu0 %3520, %v3515
        %v3522 = vpop.permute.xlu0 %3521
        %3525 = vset.pattern.permute.xlu0 0
        %3526 = vperm.xlu0 %3525, %v3516
        %v3527 = vpop.permute.xlu0 %3526
        %3530 = vset.pattern.permute.xlu0 0
        %3531 = vperm.xlu0 %3530, %v3517
        %v3532 = vpop.permute.xlu0 %3531
        %3535 = vset.pattern.permute.xlu0 0
        %3536 = vperm.xlu0 %3535, %v3518
        %v3537 = vpop.permute.xlu0 %3536
        %v3539 = vmul.f32 %v3323, %v3522
        %v3540 = vmul.f32 %v3324, %v3522
        %v3541 = vmul.f32 %v3325, %v3522
        %v3542 = vmul.f32 %v3326, %v3522
        %v3543 = vmul.f32 %v3327, %v3522
        %v3544 = vmul.f32 %v3328, %v3522
        %v3545 = vmul.f32 %v3329, %v3522
        %v3546 = vmul.f32 %v3330, %v3522
        %v3547 = vmul.f32 %v3331, %v3522
        %v3548 = vmul.f32 %v3332, %v3522
        %v3549 = vmul.f32 %v3333, %v3522
        %v3550 = vmul.f32 %v3334, %v3522
        %v3551 = vmul.f32 %v3335, %v3522
        %v3552 = vmul.f32 %v3336, %v3522
        %v3553 = vmul.f32 %v3337, %v3522
        %v3554 = vmul.f32 %v3338, %v3522
        %v3555 = vmul.f32 %v3339, %v3527
        %v3556 = vmul.f32 %v3340, %v3527
        %v3557 = vmul.f32 %v3341, %v3527
        %v3558 = vmul.f32 %v3342, %v3527
        %v3559 = vmul.f32 %v3343, %v3527
        %v3560 = vmul.f32 %v3344, %v3527
        %v3561 = vmul.f32 %v3345, %v3527
        %v3562 = vmul.f32 %v3346, %v3527
        %v3563 = vmul.f32 %v3347, %v3527
        %v3564 = vmul.f32 %v3348, %v3527
        %v3565 = vmul.f32 %v3349, %v3527
        %v3566 = vmul.f32 %v3350, %v3527
        %v3567 = vmul.f32 %v3351, %v3527
        %v3568 = vmul.f32 %v3352, %v3527
        %v3569 = vmul.f32 %v3353, %v3527
        %v3570 = vmul.f32 %v3354, %v3527
        %v3571 = vmul.f32 %v3355, %v3532
        %v3572 = vmul.f32 %v3356, %v3532
        %v3573 = vmul.f32 %v3357, %v3532
        %v3574 = vmul.f32 %v3358, %v3532
        %v3575 = vmul.f32 %v3359, %v3532
        %v3576 = vmul.f32 %v3360, %v3532
        %v3577 = vmul.f32 %v3361, %v3532
        %v3578 = vmul.f32 %v3362, %v3532
        %v3579 = vmul.f32 %v3363, %v3532
        %v3580 = vmul.f32 %v3364, %v3532
        %v3581 = vmul.f32 %v3365, %v3532
        %v3582 = vmul.f32 %v3366, %v3532
        %v3583 = vmul.f32 %v3367, %v3532
        %v3584 = vmul.f32 %v3368, %v3532
        %v3585 = vmul.f32 %v3369, %v3532
        %v3586 = vmul.f32 %v3370, %v3532
        %v3587 = vmul.f32 %v3371, %v3537
        %v3588 = vmul.f32 %v3372, %v3537
        %v3589 = vmul.f32 %v3373, %v3537
        %v3590 = vmul.f32 %v3374, %v3537
        %v3591 = vmul.f32 %v3375, %v3537
        %v3592 = vmul.f32 %v3376, %v3537
        %v3593 = vmul.f32 %v3377, %v3537
        %v3594 = vmul.f32 %v3378, %v3537
        %v3595 = vmul.f32 %v3379, %v3537
        %v3596 = vmul.f32 %v3380, %v3537
        %v3597 = vmul.f32 %v3381, %v3537
        %v3598 = vmul.f32 %v3382, %v3537
        %v3599 = vmul.f32 %v3383, %v3537
        %v3600 = vmul.f32 %v3384, %v3537
        %v3601 = vmul.f32 %v3385, %v3537
        %v3602 = vmul.f32 %v3386, %v3537
        %v3603 = vadd.f32 %v3539, %v3555
        %v3604 = vadd.f32 %v3603, %v3571
        %v3605 = vadd.f32 %v3604, %v3587
        %v3606 = vrot.slane %v3605, 4
        %v3607 = vadd.f32 %v3605, %v3606
        %v3608 = vrot.slane %v3607, 2
        %v3609 = vadd.f32 %v3607, %v3608
        %v3610 = vrot.slane %v3609, 1
        %v3611 = vadd.f32 %v3609, %v3610
        %v3612 = vadd.f32 %v3540, %v3556
        %v3613 = vadd.f32 %v3612, %v3572
        %v3614 = vadd.f32 %v3613, %v3588
        %v3615 = vrot.slane %v3614, 4
        %v3616 = vadd.f32 %v3614, %v3615
        %v3617 = vrot.slane %v3616, 2
        %v3618 = vadd.f32 %v3616, %v3617
        %v3619 = vrot.slane %v3618, 1
        %v3620 = vadd.f32 %v3618, %v3619
        %v3621 = vadd.f32 %v3541, %v3557
        %v3622 = vadd.f32 %v3621, %v3573
        %v3623 = vadd.f32 %v3622, %v3589
        %v3624 = vrot.slane %v3623, 4
        %v3625 = vadd.f32 %v3623, %v3624
        %v3626 = vrot.slane %v3625, 2
        %v3627 = vadd.f32 %v3625, %v3626
        %v3628 = vrot.slane %v3627, 1
        %v3629 = vadd.f32 %v3627, %v3628
        %v3630 = vadd.f32 %v3542, %v3558
        %v3631 = vadd.f32 %v3630, %v3574
        %v3632 = vadd.f32 %v3631, %v3590
        %v3633 = vrot.slane %v3632, 4
        %v3634 = vadd.f32 %v3632, %v3633
        %v3635 = vrot.slane %v3634, 2
        %v3636 = vadd.f32 %v3634, %v3635
        %v3637 = vrot.slane %v3636, 1
        %v3638 = vadd.f32 %v3636, %v3637
        %v3639 = vadd.f32 %v3543, %v3559
        %v3640 = vadd.f32 %v3639, %v3575
        %v3641 = vadd.f32 %v3640, %v3591
        %v3642 = vrot.slane %v3641, 4
        %v3643 = vadd.f32 %v3641, %v3642
        %v3644 = vrot.slane %v3643, 2
        %v3645 = vadd.f32 %v3643, %v3644
        %v3646 = vrot.slane %v3645, 1
        %v3647 = vadd.f32 %v3645, %v3646
        %v3648 = vadd.f32 %v3544, %v3560
        %v3649 = vadd.f32 %v3648, %v3576
        %v3650 = vadd.f32 %v3649, %v3592
        %v3651 = vrot.slane %v3650, 4
        %v3652 = vadd.f32 %v3650, %v3651
        %v3653 = vrot.slane %v3652, 2
        %v3654 = vadd.f32 %v3652, %v3653
        %v3655 = vrot.slane %v3654, 1
        %v3656 = vadd.f32 %v3654, %v3655
        %v3657 = vadd.f32 %v3545, %v3561
        %v3658 = vadd.f32 %v3657, %v3577
        %v3659 = vadd.f32 %v3658, %v3593
        %v3660 = vrot.slane %v3659, 4
        %v3661 = vadd.f32 %v3659, %v3660
        %v3662 = vrot.slane %v3661, 2
        %v3663 = vadd.f32 %v3661, %v3662
        %v3664 = vrot.slane %v3663, 1
        %v3665 = vadd.f32 %v3663, %v3664
        %v3666 = vadd.f32 %v3546, %v3562
        %v3667 = vadd.f32 %v3666, %v3578
        %v3668 = vadd.f32 %v3667, %v3594
        %v3669 = vrot.slane %v3668, 4
        %v3670 = vadd.f32 %v3668, %v3669
        %v3671 = vrot.slane %v3670, 2
        %v3672 = vadd.f32 %v3670, %v3671
        %v3673 = vrot.slane %v3672, 1
        %v3674 = vadd.f32 %v3672, %v3673
        %v3675 = vadd.f32 %v3547, %v3563
        %v3676 = vadd.f32 %v3675, %v3579
        %v3677 = vadd.f32 %v3676, %v3595
        %v3678 = vrot.slane %v3677, 4
        %v3679 = vadd.f32 %v3677, %v3678
        %v3680 = vrot.slane %v3679, 2
        %v3681 = vadd.f32 %v3679, %v3680
        %v3682 = vrot.slane %v3681, 1
        %v3683 = vadd.f32 %v3681, %v3682
        %v3684 = vadd.f32 %v3548, %v3564
        %v3685 = vadd.f32 %v3684, %v3580
        %v3686 = vadd.f32 %v3685, %v3596
        %v3687 = vrot.slane %v3686, 4
        %v3688 = vadd.f32 %v3686, %v3687
        %v3689 = vrot.slane %v3688, 2
        %v3690 = vadd.f32 %v3688, %v3689
        %v3691 = vrot.slane %v3690, 1
        %v3692 = vadd.f32 %v3690, %v3691
        %v3693 = vadd.f32 %v3549, %v3565
        %v3694 = vadd.f32 %v3693, %v3581
        %v3695 = vadd.f32 %v3694, %v3597
        %v3696 = vrot.slane %v3695, 4
        %v3697 = vadd.f32 %v3695, %v3696
        %v3698 = vrot.slane %v3697, 2
        %v3699 = vadd.f32 %v3697, %v3698
        %v3700 = vrot.slane %v3699, 1
        %v3701 = vadd.f32 %v3699, %v3700
        %v3702 = vadd.f32 %v3550, %v3566
        %v3703 = vadd.f32 %v3702, %v3582
        %v3704 = vadd.f32 %v3703, %v3598
        %v3705 = vrot.slane %v3704, 4
        %v3706 = vadd.f32 %v3704, %v3705
        %v3707 = vrot.slane %v3706, 2
        %v3708 = vadd.f32 %v3706, %v3707
        %v3709 = vrot.slane %v3708, 1
        %v3710 = vadd.f32 %v3708, %v3709
        %v3711 = vadd.f32 %v3551, %v3567
        %v3712 = vadd.f32 %v3711, %v3583
        %v3713 = vadd.f32 %v3712, %v3599
        %v3714 = vrot.slane %v3713, 4
        %v3715 = vadd.f32 %v3713, %v3714
        %v3716 = vrot.slane %v3715, 2
        %v3717 = vadd.f32 %v3715, %v3716
        %v3718 = vrot.slane %v3717, 1
        %v3719 = vadd.f32 %v3717, %v3718
        %v3720 = vadd.f32 %v3552, %v3568
        %v3721 = vadd.f32 %v3720, %v3584
        %v3722 = vadd.f32 %v3721, %v3600
        %v3723 = vrot.slane %v3722, 4
        %v3724 = vadd.f32 %v3722, %v3723
        %v3725 = vrot.slane %v3724, 2
        %v3726 = vadd.f32 %v3724, %v3725
        %v3727 = vrot.slane %v3726, 1
        %v3728 = vadd.f32 %v3726, %v3727
        %v3729 = vadd.f32 %v3553, %v3569
        %v3730 = vadd.f32 %v3729, %v3585
        %v3731 = vadd.f32 %v3730, %v3601
        %v3732 = vrot.slane %v3731, 4
        %v3733 = vadd.f32 %v3731, %v3732
        %v3734 = vrot.slane %v3733, 2
        %v3735 = vadd.f32 %v3733, %v3734
        %v3736 = vrot.slane %v3735, 1
        %v3737 = vadd.f32 %v3735, %v3736
        %v3738 = vadd.f32 %v3554, %v3570
        %v3739 = vadd.f32 %v3738, %v3586
        %v3740 = vadd.f32 %v3739, %v3602
        %v3741 = vrot.slane %v3740, 4
        %v3742 = vadd.f32 %v3740, %v3741
        %v3743 = vrot.slane %v3742, 2
        %v3744 = vadd.f32 %v3742, %v3743
        %v3745 = vrot.slane %v3744, 1
        %v3746 = vadd.f32 %v3744, %v3745
        %v3763 = vcombine.low %v3611, %v3620
        %v3764 = vcombine.low %v3629, %v3638
        %v3765 = vcombine.low %v3647, %v3656
        %v3766 = vcombine.low %v3665, %v3674
        %v3768 = vunpack.c.l.s4 1966171168
        %v3769 = vunpack.c.0.s8 %v3768
        %v3770 = vlaneseq
        %v3771 = vshrl.u32 %v3770, 7
        %v3772 = vsub.s32 %v3769, %v3771
        %v3773 = vrot.slane %v3763, %v3772
        %v3775 = vunpack.c.l.s4 1966171168
        %v3776 = vunpack.c.0.s8 %v3775
        %v3777 = vlaneseq
        %v3778 = vshrl.u32 %v3777, 7
        %v3779 = vsub.s32 %v3776, %v3778
        %v3780 = vrot.slane %v3764, %v3779
        %v3782 = vunpack.c.l.s4 1966171168
        %v3783 = vunpack.c.0.s8 %v3782
        %v3784 = vlaneseq
        %v3785 = vshrl.u32 %v3784, 7
        %v3786 = vsub.s32 %v3783, %v3785
        %v3787 = vrot.slane %v3765, %v3786
        %v3789 = vunpack.c.l.s4 1966171168
        %v3790 = vunpack.c.0.s8 %v3789
        %v3791 = vlaneseq
        %v3792 = vshrl.u32 %v3791, 7
        %v3793 = vsub.s32 %v3790, %v3792
        %v3794 = vrot.slane %v3766, %v3793
        %v3795 = vcombine.low %v3773, %v3780
        %v3796 = vcombine.low %v3787, %v3794
        %v3798 = vunpack.c.l.s4 1966171168
        %v3799 = vunpack.c.0.s8 %v3798
        %v3800 = vlaneseq
        %v3801 = vshrl.u32 %v3800, 7
        %v3802 = vsub.s32 %v3799, %v3801
        %v3803 = vrot.slane %v3795, %v3802
        %v3805 = vunpack.c.l.s4 1966171168
        %v3806 = vunpack.c.0.s8 %v3805
        %v3807 = vlaneseq
        %v3808 = vshrl.u32 %v3807, 7
        %v3809 = vsub.s32 %v3806, %v3808
        %v3810 = vrot.slane %v3796, %v3809
        %v3811 = vcombine.low %v3803, %v3810
        %v3812 = vcombine.low %v3683, %v3692
        %v3813 = vcombine.low %v3701, %v3710
        %v3814 = vcombine.low %v3719, %v3728
        %v3815 = vcombine.low %v3737, %v3746
        %v3817 = vunpack.c.l.s4 1966171168
        %v3818 = vunpack.c.0.s8 %v3817
        %v3819 = vlaneseq
        %v3820 = vshrl.u32 %v3819, 7
        %v3821 = vsub.s32 %v3818, %v3820
        %v3822 = vrot.slane %v3812, %v3821
        %v3824 = vunpack.c.l.s4 1966171168
        %v3825 = vunpack.c.0.s8 %v3824
        %v3826 = vlaneseq
        %v3827 = vshrl.u32 %v3826, 7
        %v3828 = vsub.s32 %v3825, %v3827
        %v3829 = vrot.slane %v3813, %v3828
        %v3831 = vunpack.c.l.s4 1966171168
        %v3832 = vunpack.c.0.s8 %v3831
        %v3833 = vlaneseq
        %v3834 = vshrl.u32 %v3833, 7
        %v3835 = vsub.s32 %v3832, %v3834
        %v3836 = vrot.slane %v3814, %v3835
        %v3838 = vunpack.c.l.s4 1966171168
        %v3839 = vunpack.c.0.s8 %v3838
        %v3840 = vlaneseq
        %v3841 = vshrl.u32 %v3840, 7
        %v3842 = vsub.s32 %v3839, %v3841
        %v3843 = vrot.slane %v3815, %v3842
        %v3844 = vcombine.low %v3822, %v3829
        %v3845 = vcombine.low %v3836, %v3843
        %v3847 = vunpack.c.l.s4 1966171168
        %v3848 = vunpack.c.0.s8 %v3847
        %v3849 = vlaneseq
        %v3850 = vshrl.u32 %v3849, 7
        %v3851 = vsub.s32 %v3848, %v3850
        %v3852 = vrot.slane %v3844, %v3851
        %v3854 = vunpack.c.l.s4 1966171168
        %v3855 = vunpack.c.0.s8 %v3854
        %v3856 = vlaneseq
        %v3857 = vshrl.u32 %v3856, 7
        %v3858 = vsub.s32 %v3855, %v3857
        %v3859 = vrot.slane %v3845, %v3858
        %v3860 = vcombine.low %v3852, %v3859
        %3863 = vst [vmem:[%s649] sm:$0xff] %v3811
        %3864 = vst [vmem:[%s649 + $0x8] sm:$0xff] %v3860
        %s3865 = smul.u32 16, %s20
        %p3866 = scmp.lt.s32.totalorder %s3865, 31
        %s3867 = scalar_select %p3866, %s3865, 31
        %s3868 = scalar_lea.vmem %s6, %s3867
        %s3869 = sand.u32 %s195, 1
        %s3870 = sand.u32 %s195, 1
        %s3871 = smul.addr %s3870, 512
        %s3872 = scalar_lea.vmem [#allocation4], %s3871
        %s3873 = sand.u32 %s221, 1
        %s3874 = sand.u32 %s221, 1
        %s3875 = smul.addr %s3874, 512
        %s3876 = scalar_lea.vmem [#allocation5], %s3875
        // Predicated region
        $region91: #{meta_zo_forward.1} parent=81 // pred_check
          %p3877 = pneg %p179
        $region92: #{meta_zo_forward.1} parent=81 // pred_check_branch
          %3879 = sbr.rel (%p3877) target = $region94
        $region93: #{meta_zo_forward.1} parent=81 // pred_region
          %s3880 = smul.u32 16, %s20
        $region94: #{meta_zo_forward.1} parent=81 // pred_fallthru
          _
        // Predicated region
        $region95: #{meta_zo_forward.1} parent=81 // pred_check
          %p3881 = pneg %p205
        $region96: #{meta_zo_forward.1} parent=81 // pred_check_branch
          %3883 = sbr.rel (%p3881) target = $region98
        $region97: #{meta_zo_forward.1} parent=81 // pred_region
          %s3884 = smul.u32 16, %s20
          %s3885 = smul.addr %s3884, 8
          %s3886 = scalar_lea.vmem %s7, %s3885
          // Predicated region
          $region99: #{meta_zo_forward.1} parent=97 // pred_check
            _
          $region100: #{meta_zo_forward.1} parent=97 // pred_check_branch
            %3888 = sbr.rel (0) target = $region102
          $region101: #{meta_zo_forward.1} parent=97 // pred_region
            // Predicated region
            $region103: #{meta_zo_forward.1} parent=101 // pred_check
              _
            $region104: #{meta_zo_forward.1} parent=101 // pred_check_branch
              %3890 = sbr.rel (0) target = $region106
            $region105: #{meta_zo_forward.1} parent=101 // pred_region
              loop: start=0, step=1, limit=1
              $region107: #{meta_zo_forward.1} parent=105 // loop_pre_header
                _
              $region108: #{meta_zo_forward.1} parent=105 // loop_header
                %s3892 = sphi 0, %s3896
                %p3893 = scmp.ge.s32.totalorder %s3892, 1
                %s3897 = sphi %s3872, %s3872
                %s3898 = sphi %s3886, %s3886
              $region109: #{meta_zo_forward.1} parent=105 // loop_header_branch
                %3895 = sbr.rel (%p3893) target = $region113
              $region110: #{meta_zo_forward.1} parent=105 // loop_body
                %v3899 = vld [vmem:[%s3897] sm:$0xff]
                %3900 = vst [vmem:[%s3898] sm:$0xff] %v3899
                %v3901 = vld [vmem:[%s3897 + $0x8] sm:$0xff]
                %3902 = vst [vmem:[%s3898 + $0x8] sm:$0xff] %v3901
                %v3903 = vld [vmem:[%s3897 + $0x10] sm:$0xff]
                %3904 = vst [vmem:[%s3898 + $0x10] sm:$0xff] %v3903
                %v3905 = vld [vmem:[%s3897 + $0x18] sm:$0xff]
                %3906 = vst [vmem:[%s3898 + $0x18] sm:$0xff] %v3905
                %v3907 = vld [vmem:[%s3897 + $0x20] sm:$0xff]
                %3908 = vst [vmem:[%s3898 + $0x20] sm:$0xff] %v3907
                %v3909 = vld [vmem:[%s3897 + $0x28] sm:$0xff]
                %3910 = vst [vmem:[%s3898 + $0x28] sm:$0xff] %v3909
                %v3911 = vld [vmem:[%s3897 + $0x30] sm:$0xff]
                %3912 = vst [vmem:[%s3898 + $0x30] sm:$0xff] %v3911
                %v3913 = vld [vmem:[%s3897 + $0x38] sm:$0xff]
                %3914 = vst [vmem:[%s3898 + $0x38] sm:$0xff] %v3913
                %v3915 = vld [vmem:[%s3897 + $0x40] sm:$0xff]
                %3916 = vst [vmem:[%s3898 + $0x40] sm:$0xff] %v3915
                %v3917 = vld [vmem:[%s3897 + $0x48] sm:$0xff]
                %3918 = vst [vmem:[%s3898 + $0x48] sm:$0xff] %v3917
                %v3919 = vld [vmem:[%s3897 + $0x50] sm:$0xff]
                %3920 = vst [vmem:[%s3898 + $0x50] sm:$0xff] %v3919
                %v3921 = vld [vmem:[%s3897 + $0x58] sm:$0xff]
                %3922 = vst [vmem:[%s3898 + $0x58] sm:$0xff] %v3921
                %v3923 = vld [vmem:[%s3897 + $0x60] sm:$0xff]
                %3924 = vst [vmem:[%s3898 + $0x60] sm:$0xff] %v3923
                %v3925 = vld [vmem:[%s3897 + $0x68] sm:$0xff]
                %3926 = vst [vmem:[%s3898 + $0x68] sm:$0xff] %v3925
                %v3927 = vld [vmem:[%s3897 + $0x70] sm:$0xff]
                %3928 = vst [vmem:[%s3898 + $0x70] sm:$0xff] %v3927
                %v3929 = vld [vmem:[%s3897 + $0x78] sm:$0xff]
                %3930 = vst [vmem:[%s3898 + $0x78] sm:$0xff] %v3929
                %v3931 = vld [vmem:[%s3897 + $0x80] sm:$0xff]
                %3932 = vst [vmem:[%s3898 + $0x100] sm:$0xff] %v3931
                %v3933 = vld [vmem:[%s3897 + $0x88] sm:$0xff]
                %3934 = vst [vmem:[%s3898 + $0x108] sm:$0xff] %v3933
                %v3935 = vld [vmem:[%s3897 + $0x90] sm:$0xff]
                %3936 = vst [vmem:[%s3898 + $0x110] sm:$0xff] %v3935
                %v3937 = vld [vmem:[%s3897 + $0x98] sm:$0xff]
                %3938 = vst [vmem:[%s3898 + $0x118] sm:$0xff] %v3937
                %v3939 = vld [vmem:[%s3897 + $0xa0] sm:$0xff]
                %3940 = vst [vmem:[%s3898 + $0x120] sm:$0xff] %v3939
                %v3941 = vld [vmem:[%s3897 + $0xa8] sm:$0xff]
                %3942 = vst [vmem:[%s3898 + $0x128] sm:$0xff] %v3941
                %v3943 = vld [vmem:[%s3897 + $0xb0] sm:$0xff]
                %3944 = vst [vmem:[%s3898 + $0x130] sm:$0xff] %v3943
                %v3945 = vld [vmem:[%s3897 + $0xb8] sm:$0xff]
                %3946 = vst [vmem:[%s3898 + $0x138] sm:$0xff] %v3945
                %v3947 = vld [vmem:[%s3897 + $0xc0] sm:$0xff]
                %3948 = vst [vmem:[%s3898 + $0x140] sm:$0xff] %v3947
                %v3949 = vld [vmem:[%s3897 + $0xc8] sm:$0xff]
                %3950 = vst [vmem:[%s3898 + $0x148] sm:$0xff] %v3949
                %v3951 = vld [vmem:[%s3897 + $0xd0] sm:$0xff]
                %3952 = vst [vmem:[%s3898 + $0x150] sm:$0xff] %v3951
                %v3953 = vld [vmem:[%s3897 + $0xd8] sm:$0xff]
                %3954 = vst [vmem:[%s3898 + $0x158] sm:$0xff] %v3953
                %v3955 = vld [vmem:[%s3897 + $0xe0] sm:$0xff]
                %3956 = vst [vmem:[%s3898 + $0x160] sm:$0xff] %v3955
                %v3957 = vld [vmem:[%s3897 + $0xe8] sm:$0xff]
                %3958 = vst [vmem:[%s3898 + $0x168] sm:$0xff] %v3957
                %v3959 = vld [vmem:[%s3897 + $0xf0] sm:$0xff]
                %3960 = vst [vmem:[%s3898 + $0x170] sm:$0xff] %v3959
                %v3961 = vld [vmem:[%s3897 + $0xf8] sm:$0xff]
                %3962 = vst [vmem:[%s3898 + $0x178] sm:$0xff] %v3961
                %v3963 = vld [vmem:[%s3897 + $0x100] sm:$0xff]
                %3964 = vst [vmem:[%s3898 + $0x200] sm:$0xff] %v3963
                %v3965 = vld [vmem:[%s3897 + $0x108] sm:$0xff]
                %3966 = vst [vmem:[%s3898 + $0x208] sm:$0xff] %v3965
                %v3967 = vld [vmem:[%s3897 + $0x110] sm:$0xff]
                %3968 = vst [vmem:[%s3898 + $0x210] sm:$0xff] %v3967
                %v3969 = vld [vmem:[%s3897 + $0x118] sm:$0xff]
                %3970 = vst [vmem:[%s3898 + $0x218] sm:$0xff] %v3969
                %v3971 = vld [vmem:[%s3897 + $0x120] sm:$0xff]
                %3972 = vst [vmem:[%s3898 + $0x220] sm:$0xff] %v3971
                %v3973 = vld [vmem:[%s3897 + $0x128] sm:$0xff]
                %3974 = vst [vmem:[%s3898 + $0x228] sm:$0xff] %v3973
                %v3975 = vld [vmem:[%s3897 + $0x130] sm:$0xff]
                %3976 = vst [vmem:[%s3898 + $0x230] sm:$0xff] %v3975
                %v3977 = vld [vmem:[%s3897 + $0x138] sm:$0xff]
                %3978 = vst [vmem:[%s3898 + $0x238] sm:$0xff] %v3977
                %v3979 = vld [vmem:[%s3897 + $0x140] sm:$0xff]
                %3980 = vst [vmem:[%s3898 + $0x240] sm:$0xff] %v3979
                %v3981 = vld [vmem:[%s3897 + $0x148] sm:$0xff]
                %3982 = vst [vmem:[%s3898 + $0x248] sm:$0xff] %v3981
                %v3983 = vld [vmem:[%s3897 + $0x150] sm:$0xff]
                %3984 = vst [vmem:[%s3898 + $0x250] sm:$0xff] %v3983
                %v3985 = vld [vmem:[%s3897 + $0x158] sm:$0xff]
                %3986 = vst [vmem:[%s3898 + $0x258] sm:$0xff] %v3985
                %v3987 = vld [vmem:[%s3897 + $0x160] sm:$0xff]
                %3988 = vst [vmem:[%s3898 + $0x260] sm:$0xff] %v3987
                %v3989 = vld [vmem:[%s3897 + $0x168] sm:$0xff]
                %3990 = vst [vmem:[%s3898 + $0x268] sm:$0xff] %v3989
                %v3991 = vld [vmem:[%s3897 + $0x170] sm:$0xff]
                %3992 = vst [vmem:[%s3898 + $0x270] sm:$0xff] %v3991
                %v3993 = vld [vmem:[%s3897 + $0x178] sm:$0xff]
                %3994 = vst [vmem:[%s3898 + $0x278] sm:$0xff] %v3993
                %v3995 = vld [vmem:[%s3897 + $0x180] sm:$0xff]
                %3996 = vst [vmem:[%s3898 + $0x300] sm:$0xff] %v3995
                %v3997 = vld [vmem:[%s3897 + $0x188] sm:$0xff]
                %3998 = vst [vmem:[%s3898 + $0x308] sm:$0xff] %v3997
                %v3999 = vld [vmem:[%s3897 + $0x190] sm:$0xff]
                %4000 = vst [vmem:[%s3898 + $0x310] sm:$0xff] %v3999
                %v4001 = vld [vmem:[%s3897 + $0x198] sm:$0xff]
                %4002 = vst [vmem:[%s3898 + $0x318] sm:$0xff] %v4001
                %v4003 = vld [vmem:[%s3897 + $0x1a0] sm:$0xff]
                %4004 = vst [vmem:[%s3898 + $0x320] sm:$0xff] %v4003
                %v4005 = vld [vmem:[%s3897 + $0x1a8] sm:$0xff]
                %4006 = vst [vmem:[%s3898 + $0x328] sm:$0xff] %v4005
                %v4007 = vld [vmem:[%s3897 + $0x1b0] sm:$0xff]
                %4008 = vst [vmem:[%s3898 + $0x330] sm:$0xff] %v4007
                %v4009 = vld [vmem:[%s3897 + $0x1b8] sm:$0xff]
                %4010 = vst [vmem:[%s3898 + $0x338] sm:$0xff] %v4009
                %v4011 = vld [vmem:[%s3897 + $0x1c0] sm:$0xff]
                %4012 = vst [vmem:[%s3898 + $0x340] sm:$0xff] %v4011
                %v4013 = vld [vmem:[%s3897 + $0x1c8] sm:$0xff]
                %4014 = vst [vmem:[%s3898 + $0x348] sm:$0xff] %v4013
                %v4015 = vld [vmem:[%s3897 + $0x1d0] sm:$0xff]
                %4016 = vst [vmem:[%s3898 + $0x350] sm:$0xff] %v4015
                %v4017 = vld [vmem:[%s3897 + $0x1d8] sm:$0xff]
                %4018 = vst [vmem:[%s3898 + $0x358] sm:$0xff] %v4017
                %v4019 = vld [vmem:[%s3897 + $0x1e0] sm:$0xff]
                %4020 = vst [vmem:[%s3898 + $0x360] sm:$0xff] %v4019
                %v4021 = vld [vmem:[%s3897 + $0x1e8] sm:$0xff]
                %4022 = vst [vmem:[%s3898 + $0x368] sm:$0xff] %v4021
                %v4023 = vld [vmem:[%s3897 + $0x1f0] sm:$0xff]
                %4024 = vst [vmem:[%s3898 + $0x370] sm:$0xff] %v4023
                %v4025 = vld [vmem:[%s3897 + $0x1f8] sm:$0xff]
                %4026 = vst [vmem:[%s3898 + $0x378] sm:$0xff] %v4025
              $region111: #{meta_zo_forward.1} parent=105 // loop_footer
                %s3896 = sadd.s32 1, %s3892
              $region112: #{meta_zo_forward.1} parent=105 // loop_footer_branch
                %3891 = sbr.rel target = $region108
              $region113: #{meta_zo_forward.1} parent=105 // loop_exit
                _
            $region106: #{meta_zo_forward.1} parent=101 // pred_fallthru
              _
            // Predicated region
            $region114: #{meta_zo_forward.1} parent=101 // pred_check
              _
            $region115: #{meta_zo_forward.1} parent=101 // pred_check_branch
              %4028 = sbr.rel target = $region117
            $region116: #{meta_zo_forward.1} parent=101 // pred_region
              _
            $region117: #{meta_zo_forward.1} parent=101 // pred_fallthru
              _
          $region102: #{meta_zo_forward.1} parent=97 // pred_fallthru
            _
          %4029 = vnop
        $region98: #{meta_zo_forward.1} parent=81 // pred_fallthru
          _
        // Predicated region
        $region118: #{meta_zo_forward.1} parent=81 // pred_check
          %p4030 = pneg %p231
        $region119: #{meta_zo_forward.1} parent=81 // pred_check_branch
          %4032 = sbr.rel (%p4030) target = $region121
        $region120: #{meta_zo_forward.1} parent=81 // pred_region
          %s4033 = smul.u32 16, %s20
          %s4034 = smul.addr %s4033, 8
          %s4035 = scalar_lea.vmem %s8, %s4034
          // Predicated region
          $region122: #{meta_zo_forward.1} parent=120 // pred_check
            _
          $region123: #{meta_zo_forward.1} parent=120 // pred_check_branch
            %4037 = sbr.rel (0) target = $region125
          $region124: #{meta_zo_forward.1} parent=120 // pred_region
            // Predicated region
            $region126: #{meta_zo_forward.1} parent=124 // pred_check
              _
            $region127: #{meta_zo_forward.1} parent=124 // pred_check_branch
              %4039 = sbr.rel (0) target = $region129
            $region128: #{meta_zo_forward.1} parent=124 // pred_region
              loop: start=0, step=1, limit=1
              $region130: #{meta_zo_forward.1} parent=128 // loop_pre_header
                _
              $region131: #{meta_zo_forward.1} parent=128 // loop_header
                %s4041 = sphi 0, %s4045
                %p4042 = scmp.ge.s32.totalorder %s4041, 1
                %s4046 = sphi %s3876, %s3876
                %s4047 = sphi %s4035, %s4035
              $region132: #{meta_zo_forward.1} parent=128 // loop_header_branch
                %4044 = sbr.rel (%p4042) target = $region136
              $region133: #{meta_zo_forward.1} parent=128 // loop_body
                %v4048 = vld [vmem:[%s4046] sm:$0xff]
                %4049 = vst [vmem:[%s4047] sm:$0xff] %v4048
                %v4050 = vld [vmem:[%s4046 + $0x8] sm:$0xff]
                %4051 = vst [vmem:[%s4047 + $0x8] sm:$0xff] %v4050
                %v4052 = vld [vmem:[%s4046 + $0x10] sm:$0xff]
                %4053 = vst [vmem:[%s4047 + $0x10] sm:$0xff] %v4052
                %v4054 = vld [vmem:[%s4046 + $0x18] sm:$0xff]
                %4055 = vst [vmem:[%s4047 + $0x18] sm:$0xff] %v4054
                %v4056 = vld [vmem:[%s4046 + $0x20] sm:$0xff]
                %4057 = vst [vmem:[%s4047 + $0x20] sm:$0xff] %v4056
                %v4058 = vld [vmem:[%s4046 + $0x28] sm:$0xff]
                %4059 = vst [vmem:[%s4047 + $0x28] sm:$0xff] %v4058
                %v4060 = vld [vmem:[%s4046 + $0x30] sm:$0xff]
                %4061 = vst [vmem:[%s4047 + $0x30] sm:$0xff] %v4060
                %v4062 = vld [vmem:[%s4046 + $0x38] sm:$0xff]
                %4063 = vst [vmem:[%s4047 + $0x38] sm:$0xff] %v4062
                %v4064 = vld [vmem:[%s4046 + $0x40] sm:$0xff]
                %4065 = vst [vmem:[%s4047 + $0x40] sm:$0xff] %v4064
                %v4066 = vld [vmem:[%s4046 + $0x48] sm:$0xff]
                %4067 = vst [vmem:[%s4047 + $0x48] sm:$0xff] %v4066
                %v4068 = vld [vmem:[%s4046 + $0x50] sm:$0xff]
                %4069 = vst [vmem:[%s4047 + $0x50] sm:$0xff] %v4068
                %v4070 = vld [vmem:[%s4046 + $0x58] sm:$0xff]
                %4071 = vst [vmem:[%s4047 + $0x58] sm:$0xff] %v4070
                %v4072 = vld [vmem:[%s4046 + $0x60] sm:$0xff]
                %4073 = vst [vmem:[%s4047 + $0x60] sm:$0xff] %v4072
                %v4074 = vld [vmem:[%s4046 + $0x68] sm:$0xff]
                %4075 = vst [vmem:[%s4047 + $0x68] sm:$0xff] %v4074
                %v4076 = vld [vmem:[%s4046 + $0x70] sm:$0xff]
                %4077 = vst [vmem:[%s4047 + $0x70] sm:$0xff] %v4076
                %v4078 = vld [vmem:[%s4046 + $0x78] sm:$0xff]
                %4079 = vst [vmem:[%s4047 + $0x78] sm:$0xff] %v4078
                %v4080 = vld [vmem:[%s4046 + $0x80] sm:$0xff]
                %4081 = vst [vmem:[%s4047 + $0x100] sm:$0xff] %v4080
                %v4082 = vld [vmem:[%s4046 + $0x88] sm:$0xff]
                %4083 = vst [vmem:[%s4047 + $0x108] sm:$0xff] %v4082
                %v4084 = vld [vmem:[%s4046 + $0x90] sm:$0xff]
                %4085 = vst [vmem:[%s4047 + $0x110] sm:$0xff] %v4084
                %v4086 = vld [vmem:[%s4046 + $0x98] sm:$0xff]
                %4087 = vst [vmem:[%s4047 + $0x118] sm:$0xff] %v4086
                %v4088 = vld [vmem:[%s4046 + $0xa0] sm:$0xff]
                %4089 = vst [vmem:[%s4047 + $0x120] sm:$0xff] %v4088
                %v4090 = vld [vmem:[%s4046 + $0xa8] sm:$0xff]
                %4091 = vst [vmem:[%s4047 + $0x128] sm:$0xff] %v4090
                %v4092 = vld [vmem:[%s4046 + $0xb0] sm:$0xff]
                %4093 = vst [vmem:[%s4047 + $0x130] sm:$0xff] %v4092
                %v4094 = vld [vmem:[%s4046 + $0xb8] sm:$0xff]
                %4095 = vst [vmem:[%s4047 + $0x138] sm:$0xff] %v4094
                %v4096 = vld [vmem:[%s4046 + $0xc0] sm:$0xff]
                %4097 = vst [vmem:[%s4047 + $0x140] sm:$0xff] %v4096
                %v4098 = vld [vmem:[%s4046 + $0xc8] sm:$0xff]
                %4099 = vst [vmem:[%s4047 + $0x148] sm:$0xff] %v4098
                %v4100 = vld [vmem:[%s4046 + $0xd0] sm:$0xff]
                %4101 = vst [vmem:[%s4047 + $0x150] sm:$0xff] %v4100
                %v4102 = vld [vmem:[%s4046 + $0xd8] sm:$0xff]
                %4103 = vst [vmem:[%s4047 + $0x158] sm:$0xff] %v4102
                %v4104 = vld [vmem:[%s4046 + $0xe0] sm:$0xff]
                %4105 = vst [vmem:[%s4047 + $0x160] sm:$0xff] %v4104
                %v4106 = vld [vmem:[%s4046 + $0xe8] sm:$0xff]
                %4107 = vst [vmem:[%s4047 + $0x168] sm:$0xff] %v4106
                %v4108 = vld [vmem:[%s4046 + $0xf0] sm:$0xff]
                %4109 = vst [vmem:[%s4047 + $0x170] sm:$0xff] %v4108
                %v4110 = vld [vmem:[%s4046 + $0xf8] sm:$0xff]
                %4111 = vst [vmem:[%s4047 + $0x178] sm:$0xff] %v4110
                %v4112 = vld [vmem:[%s4046 + $0x100] sm:$0xff]
                %4113 = vst [vmem:[%s4047 + $0x200] sm:$0xff] %v4112
                %v4114 = vld [vmem:[%s4046 + $0x108] sm:$0xff]
                %4115 = vst [vmem:[%s4047 + $0x208] sm:$0xff] %v4114
                %v4116 = vld [vmem:[%s4046 + $0x110] sm:$0xff]
                %4117 = vst [vmem:[%s4047 + $0x210] sm:$0xff] %v4116
                %v4118 = vld [vmem:[%s4046 + $0x118] sm:$0xff]
                %4119 = vst [vmem:[%s4047 + $0x218] sm:$0xff] %v4118
                %v4120 = vld [vmem:[%s4046 + $0x120] sm:$0xff]
                %4121 = vst [vmem:[%s4047 + $0x220] sm:$0xff] %v4120
                %v4122 = vld [vmem:[%s4046 + $0x128] sm:$0xff]
                %4123 = vst [vmem:[%s4047 + $0x228] sm:$0xff] %v4122
                %v4124 = vld [vmem:[%s4046 + $0x130] sm:$0xff]
                %4125 = vst [vmem:[%s4047 + $0x230] sm:$0xff] %v4124
                %v4126 = vld [vmem:[%s4046 + $0x138] sm:$0xff]
                %4127 = vst [vmem:[%s4047 + $0x238] sm:$0xff] %v4126
                %v4128 = vld [vmem:[%s4046 + $0x140] sm:$0xff]
                %4129 = vst [vmem:[%s4047 + $0x240] sm:$0xff] %v4128
                %v4130 = vld [vmem:[%s4046 + $0x148] sm:$0xff]
                %4131 = vst [vmem:[%s4047 + $0x248] sm:$0xff] %v4130
                %v4132 = vld [vmem:[%s4046 + $0x150] sm:$0xff]
                %4133 = vst [vmem:[%s4047 + $0x250] sm:$0xff] %v4132
                %v4134 = vld [vmem:[%s4046 + $0x158] sm:$0xff]
                %4135 = vst [vmem:[%s4047 + $0x258] sm:$0xff] %v4134
                %v4136 = vld [vmem:[%s4046 + $0x160] sm:$0xff]
                %4137 = vst [vmem:[%s4047 + $0x260] sm:$0xff] %v4136
                %v4138 = vld [vmem:[%s4046 + $0x168] sm:$0xff]
                %4139 = vst [vmem:[%s4047 + $0x268] sm:$0xff] %v4138
                %v4140 = vld [vmem:[%s4046 + $0x170] sm:$0xff]
                %4141 = vst [vmem:[%s4047 + $0x270] sm:$0xff] %v4140
                %v4142 = vld [vmem:[%s4046 + $0x178] sm:$0xff]
                %4143 = vst [vmem:[%s4047 + $0x278] sm:$0xff] %v4142
                %v4144 = vld [vmem:[%s4046 + $0x180] sm:$0xff]
                %4145 = vst [vmem:[%s4047 + $0x300] sm:$0xff] %v4144
                %v4146 = vld [vmem:[%s4046 + $0x188] sm:$0xff]
                %4147 = vst [vmem:[%s4047 + $0x308] sm:$0xff] %v4146
                %v4148 = vld [vmem:[%s4046 + $0x190] sm:$0xff]
                %4149 = vst [vmem:[%s4047 + $0x310] sm:$0xff] %v4148
                %v4150 = vld [vmem:[%s4046 + $0x198] sm:$0xff]
                %4151 = vst [vmem:[%s4047 + $0x318] sm:$0xff] %v4150
                %v4152 = vld [vmem:[%s4046 + $0x1a0] sm:$0xff]
                %4153 = vst [vmem:[%s4047 + $0x320] sm:$0xff] %v4152
                %v4154 = vld [vmem:[%s4046 + $0x1a8] sm:$0xff]
                %4155 = vst [vmem:[%s4047 + $0x328] sm:$0xff] %v4154
                %v4156 = vld [vmem:[%s4046 + $0x1b0] sm:$0xff]
                %4157 = vst [vmem:[%s4047 + $0x330] sm:$0xff] %v4156
                %v4158 = vld [vmem:[%s4046 + $0x1b8] sm:$0xff]
                %4159 = vst [vmem:[%s4047 + $0x338] sm:$0xff] %v4158
                %v4160 = vld [vmem:[%s4046 + $0x1c0] sm:$0xff]
                %4161 = vst [vmem:[%s4047 + $0x340] sm:$0xff] %v4160
                %v4162 = vld [vmem:[%s4046 + $0x1c8] sm:$0xff]
                %4163 = vst [vmem:[%s4047 + $0x348] sm:$0xff] %v4162
                %v4164 = vld [vmem:[%s4046 + $0x1d0] sm:$0xff]
                %4165 = vst [vmem:[%s4047 + $0x350] sm:$0xff] %v4164
                %v4166 = vld [vmem:[%s4046 + $0x1d8] sm:$0xff]
                %4167 = vst [vmem:[%s4047 + $0x358] sm:$0xff] %v4166
                %v4168 = vld [vmem:[%s4046 + $0x1e0] sm:$0xff]
                %4169 = vst [vmem:[%s4047 + $0x360] sm:$0xff] %v4168
                %v4170 = vld [vmem:[%s4046 + $0x1e8] sm:$0xff]
                %4171 = vst [vmem:[%s4047 + $0x368] sm:$0xff] %v4170
                %v4172 = vld [vmem:[%s4046 + $0x1f0] sm:$0xff]
                %4173 = vst [vmem:[%s4047 + $0x370] sm:$0xff] %v4172
                %v4174 = vld [vmem:[%s4046 + $0x1f8] sm:$0xff]
                %4175 = vst [vmem:[%s4047 + $0x378] sm:$0xff] %v4174
              $region134: #{meta_zo_forward.1} parent=128 // loop_footer
                %s4045 = sadd.s32 1, %s4041
              $region135: #{meta_zo_forward.1} parent=128 // loop_footer_branch
                %4040 = sbr.rel target = $region131
              $region136: #{meta_zo_forward.1} parent=128 // loop_exit
                _
            $region129: #{meta_zo_forward.1} parent=124 // pred_fallthru
              _
            // Predicated region
            $region137: #{meta_zo_forward.1} parent=124 // pred_check
              _
            $region138: #{meta_zo_forward.1} parent=124 // pred_check_branch
              %4177 = sbr.rel target = $region140
            $region139: #{meta_zo_forward.1} parent=124 // pred_region
              _
            $region140: #{meta_zo_forward.1} parent=124 // pred_fallthru
              _
          $region125: #{meta_zo_forward.1} parent=120 // pred_fallthru
            _
          %4178 = vnop
        $region121: #{meta_zo_forward.1} parent=81 // pred_fallthru
          _
      $region82: #{meta_zo_forward.1} parent=5 // pred_fallthru
        _
      %p4179 = scmp.le.s32.totalorder 2, %s15
      // Predicated region
      $region141: #{meta_zo_forward.1} parent=5 // pred_check
        %p4180 = pneg %p4179
      $region142: #{meta_zo_forward.1} parent=5 // pred_check_branch
        %4182 = sbr.rel (%p4180) target = $region144
      $region143: #{meta_zo_forward.1} parent=5 // pred_region
        %s4183 = ssub.s32 %s15, 2
        // Predicated region
        $region145: #{meta_zo_forward.1} parent=143 // pred_check
          %p4184 = pneg %p185
        $region146: #{meta_zo_forward.1} parent=143 // pred_check_branch
          %4186 = sbr.rel (%p4184) target = $region148
        $region147: #{meta_zo_forward.1} parent=143 // pred_region
          %s4187 = smul.u32 16, %s21
          %p4188 = scmp.lt.s32.totalorder %s4187, 31
          %s4189 = scalar_select %p4188, %s4187, 31
          %s4190 = scalar_lea.vmem %s6, %s4189
        $region148: #{meta_zo_forward.1} parent=143 // pred_fallthru
          _
        // Predicated region
        $region149: #{meta_zo_forward.1} parent=143 // pred_check
          %p4191 = pneg %p211
        $region150: #{meta_zo_forward.1} parent=143 // pred_check_branch
          %4193 = sbr.rel (%p4191) target = $region152
        $region151: #{meta_zo_forward.1} parent=143 // pred_region
          %s4194 = sand.u32 %s196, 1
          %s4195 = sand.u32 %s196, 1
          %s4196 = smul.addr %s4195, 512
          %s4197 = scalar_lea.vmem [#allocation4], %s4196
        $region152: #{meta_zo_forward.1} parent=143 // pred_fallthru
          _
        // Predicated region
        $region153: #{meta_zo_forward.1} parent=143 // pred_check
          %p4198 = pneg %p237
        $region154: #{meta_zo_forward.1} parent=143 // pred_check_branch
          %4200 = sbr.rel (%p4198) target = $region156
        $region155: #{meta_zo_forward.1} parent=143 // pred_region
          %s4201 = sand.u32 %s222, 1
          %s4202 = sand.u32 %s222, 1
          %s4203 = smul.addr %s4202, 512
          %s4204 = scalar_lea.vmem [#allocation5], %s4203
        $region156: #{meta_zo_forward.1} parent=143 // pred_fallthru
          _
      $region144: #{meta_zo_forward.1} parent=5 // pred_fallthru
        _
    $region6: #{meta_zo_forward.1} parent=1 // loop_footer
      %s19 = sadd.s32 1, %s15
    $region7: #{meta_zo_forward.1} parent=1 // loop_footer_branch
      %14 = sbr.rel target = $region3
    $region8: #{meta_zo_forward.1} parent=1 // loop_exit
      _

</llo_original>
